<compile_context>
chip_gen: v7x
topology: tpu7x:2x2x1
jax: 0.10.0
libtpu: 0.0.40
codegen_flags: <defaults>
</compile_context>

<pallas_src>
import functools

import jax
import jax.numpy as jnp
from jax import lax
from jax.experimental import pallas as pl
from jax.experimental.pallas import tpu as pltpu


def _sigmoid(v):
    # single EUP op (tanh) instead of exp + divide; mathematically identical.
    return 0.5 * jnp.tanh(0.5 * v) + 0.5


def _silu(v):
    return v * _sigmoid(v)


# --------------------------- pass 1: reduction kernel -------------------------
def _c3_psa_reduce_kernel(x_ref, w1_ref, wr_ref, wq_ref,
                          m_ref, l_ref, ev_ref, g_ref, theta_ref,
                          m_sc, l_sc, ev_sc, gsum_sc,
                          *, ci: int):
    t = pl.program_id(2)
    nt = pl.num_programs(2)

    @pl.when(t == 0)
    def _():
        m_sc[...] = jnp.full(m_sc.shape, -jnp.inf, jnp.float32)
        l_sc[...] = jnp.zeros(l_sc.shape, jnp.float32)
        ev_sc[...] = jnp.zeros(ev_sc.shape, jnp.float32)
        gsum_sc[...] = jnp.zeros(gsum_sc.shape, jnp.float32)

    x = x_ref[0]                                                      # [T, C1] bf16
    y1 = _silu(jnp.dot(x, w1_ref[...],
                       preferred_element_type=jnp.float32))           # [T, c_] f32

    # q (softmax logits) via a tiny separate N=1 matmul in f32: avoids a misaligned
    # lane extract from the wide matmul and keeps the logits at full precision.
    q = jnp.dot(y1, wq_ref[...], preferred_element_type=jnp.float32)  # [T, 1] f32

    # One wide-N MXU pass over y1; columns = [theta | v | g]; theta first so the
    # only large slice starts at lane 0.
    p = jnp.dot(y1.astype(jnp.bfloat16), wr_ref[...],
                preferred_element_type=jnp.float32)                   # [T, 3*ci] f32
    theta_ref[0] = p[:, :ci].astype(theta_ref.dtype)                  # bf16 writeback

    # spatial_pool: online softmax over HW of q.  BOTH reductions (e^T.v and
    # colsum(g)) are folded into one small MXU contraction: [e | 1]^T @ p -> [2, 3ci]
    # (row 0 = e^T.p -> take the v columns, row 1 = colsum(p) -> take the g columns).
    m_prev = m_sc[...]                                                # [1, 1]
    m_new = jnp.maximum(m_prev, jnp.max(q, axis=0, keepdims=True))
    alpha = jnp.exp(m_prev - m_new)
    e = jnp.exp(q - m_new)                                            # [T, 1] f32

    lane = lax.broadcasted_iota(jnp.int32, (e.shape[0], 2), 1)
    lhs2 = jnp.where(lane == 0, e, 1.0)                               # [T, 2] = [e | 1]
    red = lax.dot_general(lhs2, p, (((0,), (0,)), ((), ())),
                          preferred_element_type=jnp.float32)         # [2, 3*ci]

    l_sc[...] = alpha * l_sc[...] + jnp.sum(e, axis=0, keepdims=True)
    ev_sc[...] = alpha * ev_sc[...] + red[0:1, ci:2 * ci]             # e^T . v
    gsum_sc[...] = gsum_sc[...] + red[1:2, 2 * ci:3 * ci]             # colsum(g)
    m_sc[...] = m_new

    @pl.when(t == nt - 1)
    def _():
        m_ref[0, 0] = m_sc[...]
        l_ref[0, 0] = l_sc[...]
        ev_ref[0, 0] = ev_sc[...]
        g_ref[0, 0] = gsum_sc[...]


# --------------------------- pass 2: apply kernel ------------------------------
def _c3_psa_apply_kernel(x_ref, msp_ref, mch_ref,
                         w12_ref, w3a_ref, w3b_ref, o_ref, *, c_: int):
    x = x_ref[0]                                                      # [T, C1] bf16
    # fused cv1 + cv2 (shared LHS -> one wide-N matmul)
    y12 = _silu(jnp.dot(x, w12_ref[...],
                        preferred_element_type=jnp.float32))          # [T, 2*c_] f32
    y1 = y12[:, :c_]
    y2 = y12[:, c_:]

    mask = mch_ref[0] + msp_ref[0]       # [1,c_] + [T,1] -> [T,c_]  (y1*mch + y1*msp)
    psa = (y1 * mask).astype(jnp.bfloat16)
    y2b = y2.astype(jnp.bfloat16)

    # cv3 over cat([psa, y2], channel): split weight avoids an in-kernel concat.
    out = _silu(jnp.dot(psa, w3a_ref[...], preferred_element_type=jnp.float32)
                + jnp.dot(y2b, w3b_ref[...], preferred_element_type=jnp.float32))
    o_ref[0] = out.astype(o_ref.dtype)


# ----------------------------- wrapper / glue ----------------------------------
def c3_psa_p_forward(x_nchw, params, tile_hw=None, hw_splits=None):
    """x_nchw: [B, C1, H, W] float32.  Returns [B, C2, H, W] float32.

    tile_hw: HW tile size.  Sweep upward (1024-2048) on v5e/v6e; keep <= 512-1024
    on v7x (64 MiB VMEM).  Must divide HW, be a multiple of 16, and be a multiple
    of 128 (or equal to HW) so all blocks stay lane-aligned.
    hw_splits: number of HW partitions of the pass-1 reduction (2 keeps both v7x
    TensorCores busy at batch=1); partials are merged in the XLA glue.
    """
    B, C1, H, W = x_nchw.shape
    HW = H * W
    c_ = params["w_cv1"].shape[1]
    ci = c_ // 2
    C2 = params["w_cv3a"].shape[1]

    if tile_hw is None:
        tile_hw = min(HW, 512)
    assert HW % tile_hw == 0, "tile_hw must divide HW"
    assert tile_hw % 16 == 0, "tile_hw must be a multiple of 16 (bf16 sublane packing)"
    assert tile_hw % 128 == 0 or tile_hw == HW, \
        "tile_hw must be a multiple of 128 or equal to HW"
    nt = HW // tile_hw

    if hw_splits is None:
        hw_splits = 2 if nt % 2 == 0 and nt >= 2 else 1
    assert hw_splits >= 1 and nt % hw_splits == 0, "hw_splits must divide the tile count"
    S = hw_splits
    nt_s = nt // S

    # NCHW -> [B, HW, C1] channels-last, bf16 for the MXU operands.
    x = jnp.transpose(x_nchw, (0, 2, 3, 1)).reshape(B, HW, C1).astype(jnp.bfloat16)

    w1 = params["w_cv1"].astype(jnp.bfloat16)                              # [C1, c_]
    # fused [theta | v | g] = [w_vl | w_vr | w_ql]; theta first (offset-0 slice).
    wr = jnp.concatenate([params["w_vl"], params["w_vr"],
                          params["w_ql"]], axis=1).astype(jnp.bfloat16)    # [c_, 3*ci]
    wq = params["w_qr"].astype(jnp.float32)                                # [c_, 1]
    w12 = jnp.concatenate([params["w_cv1"], params["w_cv2"]], axis=1).astype(jnp.bfloat16)
    w3a = params["w_cv3a"].astype(jnp.bfloat16)
    w3b = params["w_cv3b"].astype(jnp.bfloat16)

    const3 = lambda b, s, t: (0, 0)   # weights: constant index_map -> resident in VMEM
    vmem_limit = 48 * 1024 * 1024     # above every scoped default, below every physical VMEM

    # ---- pass 1: per-tile y1 + fused attention matmul + global reductions ----
    flops1 = int(2 * B * HW * (C1 * c_ + c_ * (3 * ci + 1) + 2 * 3 * ci))
    bytes1 = int(x.size * 2 + B * HW * ci * 2
                 + (w1.size + wr.size) * 2 + wq.size * 4 + B * S * (2 + 2 * ci) * 4)
    trans1 = int(B * HW * (c_ + 2))

    m_part, l_part, ev_part, g_part, theta = pl.pallas_call(
        functools.partial(_c3_psa_reduce_kernel, ci=ci),
        out_shape=(
            jax.ShapeDtypeStruct((B, S, 1, 1), jnp.float32),    # running max of q
            jax.ShapeDtypeStruct((B, S, 1, 1), jnp.float32),    # sum exp(q - m)
            jax.ShapeDtypeStruct((B, S, 1, ci), jnp.float32),   # sum exp(q - m) * v
            jax.ShapeDtypeStruct((B, S, 1, ci), jnp.float32),   # sum g
            jax.ShapeDtypeStruct((B, HW, ci), jnp.bfloat16),    # theta = conv_v_left(y1)
        ),
        grid_spec=pltpu.PrefetchScalarGridSpec(
            num_scalar_prefetch=0,
            grid=(B, S, nt_s),
            in_specs=[
                pl.BlockSpec((1, tile_hw, C1), lambda b, s, t: (b, s * nt_s + t, 0)),
                pl.BlockSpec(w1.shape, const3),
                pl.BlockSpec(wr.shape, const3),
                pl.BlockSpec(wq.shape, const3),
            ],
            out_specs=[
                pl.BlockSpec((1, 1, 1, 1), lambda b, s, t: (b, s, 0, 0)),
                pl.BlockSpec((1, 1, 1, 1), lambda b, s, t: (b, s, 0, 0)),
                pl.BlockSpec((1, 1, 1, ci), lambda b, s, t: (b, s, 0, 0)),
                pl.BlockSpec((1, 1, 1, ci), lambda b, s, t: (b, s, 0, 0)),
                pl.BlockSpec((1, tile_hw, ci), lambda b, s, t: (b, s * nt_s + t, 0)),
            ],
            scratch_shapes=[
                pltpu.VMEM((1, 1), jnp.float32),
                pltpu.VMEM((1, 1), jnp.float32),
                pltpu.VMEM((1, ci), jnp.float32),
                pltpu.VMEM((1, ci), jnp.float32),
            ],
        ),
        compiler_params=pltpu.CompilerParams(
            dimension_semantics=("parallel", "parallel", "arbitrary"),
            vmem_limit_bytes=vmem_limit),
        cost_estimate=pl.CostEstimate(flops=flops1, transcendentals=trans1,
                                      bytes_accessed=bytes1),
    )(x, w1, wr, wq)

    # ---- tiny glue (XLA): combine split partials, build both masks ----
    m_p = m_part[:, :, 0, 0]                                           # [B, S]
    l_p = l_part[:, :, 0, 0]                                           # [B, S]
    ev_p = ev_part[:, :, 0, :]                                         # [B, S, ci]
    g_p = g_part[:, :, 0, :]                                           # [B, S, ci]

    m = jnp.max(m_p, axis=1, keepdims=True)                            # [B, 1]
    wgt = jnp.exp(m_p - m)                                             # [B, S]
    l = jnp.sum(l_p * wgt, axis=1, keepdims=True)                      # [B, 1]
    context = jnp.sum(ev_p * wgt[..., None], axis=1) / l               # [B, ci]
    mask_ch = jax.nn.sigmoid(context @ params["w_up"].astype(jnp.float32))  # [B, c_]
    avg_g = jnp.sum(g_p, axis=1) / HW                                  # [B, ci]

    ctx_sp = jnp.einsum("bti,bi->bt", theta, avg_g)                    # [B, HW] (bf16 theta read)
    mask_sp = jax.nn.sigmoid(jax.nn.softmax(ctx_sp, axis=-1))          # [B, HW]

    mask_sp = mask_sp[..., None].astype(jnp.float32)                   # [B, HW, 1]
    mask_ch = mask_ch[:, None, :].astype(jnp.float32)                  # [B, 1, c_]

    # ---- pass 2: apply masks + cv3, fully parallel over (B, HW tiles) ----
    flops2 = int(2 * B * HW * (C1 * 2 * c_ + 2 * c_ * C2))
    bytes2 = int(x.size * 2 + B * HW * (C2 * 4 + 4)
                 + (w12.size + w3a.size + w3b.size) * 2 + B * c_ * 4)
    trans2 = int(B * HW * (2 * c_ + C2))

    out = pl.pallas_call(
        functools.partial(_c3_psa_apply_kernel, c_=c_),
        out_shape=jax.ShapeDtypeStruct((B, HW, C2), jnp.float32),
        grid_spec=pltpu.PrefetchScalarGridSpec(
            num_scalar_prefetch=0,
            grid=(B, nt),
            in_specs=[
                pl.BlockSpec((1, tile_hw, C1), lambda b, t: (b, t, 0)),
                pl.BlockSpec((1, tile_hw, 1), lambda b, t: (b, t, 0)),
                pl.BlockSpec((1, 1, c_), lambda b, t: (b, 0, 0)),
                pl.BlockSpec(w12.shape, lambda b, t: (0, 0)),
                pl.BlockSpec(w3a.shape, lambda b, t: (0, 0)),
                pl.BlockSpec(w3b.shape, lambda b, t: (0, 0)),
            ],
            out_specs=pl.BlockSpec((1, tile_hw, C2), lambda b, t: (b, t, 0)),
        ),
        compiler_params=pltpu.CompilerParams(
            dimension_semantics=("parallel", "parallel"),
            vmem_limit_bytes=vmem_limit),
        cost_estimate=pl.CostEstimate(flops=flops2, transcendentals=trans2,
                                      bytes_accessed=bytes2),
    )(x, mask_sp, mask_ch, w12, w3a, w3b)

    # [B, HW, C2] -> NCHW
    return jnp.transpose(out.reshape(B, H, W, C2), (0, 3, 1, 2))


# ----------------------------- parameter setup --------------------------------
def make_params(key, c1, c2, e=0.5):
    """Synthetic weights matching the module's shapes.  Conv2d weights [out,in,1,1]
    stored transposed as [in,out]; eval-mode BN (default stats, eps=1e-3) folded in."""
    c_ = int(c2 * e)
    ci = c_ // 2
    bn_scale = 1.0 / jnp.sqrt(1.0 + 1e-3)   # gamma=1, beta=0, mean=0, var=1

    def kaiming(key, fan_in, shape):
        std = (2.0 / fan_in) ** 0.5
        return std * jax.random.normal(key, shape, dtype=jnp.float32)

    ks = jax.random.split(key, 9)
    p = {}
    p["w_cv1"] = kaiming(ks[0], c1, (c1, c_)) * bn_scale
    p["w_cv2"] = kaiming(ks[1], c1, (c1, c_)) * bn_scale
    w_cv3 = kaiming(ks[2], 2 * c_, (2 * c_, c2)) * bn_scale
    p["w_cv3a"] = w_cv3[:c_]      # multiplies the PSA branch
    p["w_cv3b"] = w_cv3[c_:]      # multiplies the cv2 branch
    p["w_vr"] = kaiming(ks[3], c_, (c_, ci))   # conv_v_right: c_ -> ci
    p["w_qr"] = kaiming(ks[4], c_, (c_, 1))    # conv_q_right: c_ -> 1
    p["w_up"] = kaiming(ks[5], ci, (ci, c_))   # conv_up:      ci -> c_
    p["w_ql"] = kaiming(ks[6], c_, (c_, ci))   # conv_q_left:  c_ -> ci
    p["w_vl"] = kaiming(ks[7], c_, (c_, ci))   # conv_v_left:  c_ -> ci
    return p


# ----------------------------- pure-JAX reference -----------------------------
def reference_forward(x_nchw, params):
    B, C1, H, W = x_nchw.shape
    HW = H * W
    x = jnp.transpose(x_nchw, (0, 2, 3, 1)).reshape(B, HW, C1).astype(jnp.float32)

    def silu(v):
        return v * jax.nn.sigmoid(v)

    def one(xb):
        y1 = silu(xb @ params["w_cv1"])
        y2 = silu(xb @ params["w_cv2"])
        # spatial_pool
        v = y1 @ params["w_vr"]
        q = jax.nn.softmax(y1 @ params["w_qr"], axis=0)
        ctx = jnp.sum(v * q, axis=0, keepdims=True)
        out_ch = y1 * jax.nn.sigmoid(ctx @ params["w_up"])
        # channel_pool
        avg = jnp.mean(y1 @ params["w_ql"], axis=0, keepdims=True)
        theta = y1 @ params["w_vl"]
        sp = jax.nn.sigmoid(jax.nn.softmax(
            jnp.sum(theta * avg, axis=1, keepdims=True), axis=0))
        out_sp = y1 * sp
        psa = out_ch + out_sp
        return silu(psa @ params["w_cv3a"] + y2 @ params["w_cv3b"])

    out = jax.vmap(one)(x)
    C2 = params["w_cv3a"].shape[1]
    return jnp.transpose(out.reshape(B, H, W, C2), (0, 3, 1, 2))


if __name__ == "__main__":
    key = jax.random.PRNGKey(0)
    kx, kp = jax.random.split(key)

    B, C1, C2, H, W = 2, 8, 8, 16, 16           # c_ = 4, inter_planes = 2, HW = 256
    x = jax.random.normal(kx, (B, C1, H, W), dtype=jnp.float32)
    params = make_params(kp, C1, C2)

    fwd = jax.jit(c3_psa_p_forward, static_argnames=("tile_hw", "hw_splits"))
    out = jax.block_until_ready(fwd(x, params, tile_hw=128))   # 2 HW tiles -> 2 splits

    ref = jax.block_until_ready(reference_forward(x, params))
    assert out.shape == (B, C2, H, W)
    # bf16 MXU operands (f32 accumulation) vs. a pure-f32 reference.
    assert jnp.allclose(out, ref, atol=5e-2, rtol=5e-2), "mismatch vs reference"

    print("KERNEL_OK")
</pallas_src>

<mosaic_0001>
module attributes {stable_mosaic.version = 11 : i64} {
  func.func @_c3_psa_reduce_kernel(%arg0: i32, %arg1: i32, %arg2: i32, %arg3: memref<1x128x8xbf16, #tpu.memory_space<vmem>>, %arg4: memref<8x4xbf16, #tpu.memory_space<vmem>>, %arg5: memref<4x6xbf16, #tpu.memory_space<vmem>>, %arg6: memref<4x1xf32, #tpu.memory_space<vmem>>, %arg7: memref<1x1x1x1xf32, #tpu.memory_space<vmem>>, %arg8: memref<1x1x1x1xf32, #tpu.memory_space<vmem>>, %arg9: memref<1x1x1x2xf32, #tpu.memory_space<vmem>>, %arg10: memref<1x1x1x2xf32, #tpu.memory_space<vmem>>, %arg11: memref<1x128x2xbf16, #tpu.memory_space<vmem>>, %arg12: memref<1x1xf32, #tpu.memory_space<vmem>>, %arg13: memref<1x1xf32, #tpu.memory_space<vmem>>, %arg14: memref<1x2xf32, #tpu.memory_space<vmem>>, %arg15: memref<1x2xf32, #tpu.memory_space<vmem>>) attributes {dimension_semantics = [#tpu.dimension_semantics<parallel>, #tpu.dimension_semantics<parallel>, #tpu.dimension_semantics<arbitrary>], iteration_bounds = array<i64: 2, 2, 1>, scalar_prefetch = 0 : i64, scratch_operands = 4 : i64, tpu.core_type = #tpu.core_type<tc>, window_params = [{transform_indices = @transform_0, window_bounds = array<i64: 1, 128, 8>}, {pipeline_mode = #tpu.pipeline_mode<synchronous>, transform_indices = @transform_1, window_bounds = array<i64: 8, 4>}, {pipeline_mode = #tpu.pipeline_mode<synchronous>, transform_indices = @transform_2, window_bounds = array<i64: 4, 6>}, {pipeline_mode = #tpu.pipeline_mode<synchronous>, transform_indices = @transform_3, window_bounds = array<i64: 4, 1>}, {transform_indices = @transform_4, window_bounds = array<i64: 1, 1, 1, 1>}, {transform_indices = @transform_5, window_bounds = array<i64: 1, 1, 1, 1>}, {transform_indices = @transform_6, window_bounds = array<i64: 1, 1, 1, 2>}, {transform_indices = @transform_7, window_bounds = array<i64: 1, 1, 1, 2>}, {transform_indices = @transform_8, window_bounds = array<i64: 1, 128, 2>}]} {
    %c0_i32 = arith.constant 0 : i32
    %0 = arith.cmpi eq, %arg2, %c0_i32 : i32
    %1 = arith.extui %0 : i1 to i32
    %c0_i32_0 = arith.constant 0 : i32
    %2 = arith.cmpi ne, %1, %c0_i32_0 : i32
    scf.if %2 {
      %cst_40 = arith.constant 0xFF800000 : f32
      %62 = vector.broadcast %cst_40 : f32 to vector<1x1xf32>
      %c0_41 = arith.constant 0 : index
      %c0_42 = arith.constant 0 : index
      %63 = vector.load %arg12[%c0_41, %c0_42] : memref<1x1xf32, #tpu.memory_space<vmem>>, vector<1x1xf32>
      tpu.vector_store %arg12[%c0_41, %c0_42], %62 {strides = array<i32>} : memref<1x1xf32, #tpu.memory_space<vmem>>, vector<1x1xf32>,
      %cst_43 = arith.constant 0.000000e+00 : f32
      %64 = vector.broadcast %cst_43 : f32 to vector<1x1xf32>
      %c0_44 = arith.constant 0 : index
      %c0_45 = arith.constant 0 : index
      %65 = vector.load %arg13[%c0_44, %c0_45] : memref<1x1xf32, #tpu.memory_space<vmem>>, vector<1x1xf32>
      tpu.vector_store %arg13[%c0_44, %c0_45], %64 {strides = array<i32>} : memref<1x1xf32, #tpu.memory_space<vmem>>, vector<1x1xf32>,
      %cst_46 = arith.constant 0.000000e+00 : f32
      %66 = vector.broadcast %cst_46 : f32 to vector<1x2xf32>
      %c0_47 = arith.constant 0 : index
      %c0_48 = arith.constant 0 : index
      %67 = vector.load %arg14[%c0_47, %c0_48] : memref<1x2xf32, #tpu.memory_space<vmem>>, vector<1x2xf32>
      tpu.vector_store %arg14[%c0_47, %c0_48], %66 {strides = array<i32>} : memref<1x2xf32, #tpu.memory_space<vmem>>, vector<1x2xf32>,
      %cst_49 = arith.constant 0.000000e+00 : f32
      %68 = vector.broadcast %cst_49 : f32 to vector<1x2xf32>
      %c0_50 = arith.constant 0 : index
      %c0_51 = arith.constant 0 : index
      %69 = vector.load %arg15[%c0_50, %c0_51] : memref<1x2xf32, #tpu.memory_space<vmem>>, vector<1x2xf32>
      tpu.vector_store %arg15[%c0_50, %c0_51], %68 {strides = array<i32>} : memref<1x2xf32, #tpu.memory_space<vmem>>, vector<1x2xf32>,
    } else {
    }
    %c0 = arith.constant 0 : index
    %c0_1 = arith.constant 0 : index
    %c0_2 = arith.constant 0 : index
    %3 = vector.load %arg3[%c0, %c0_1, %c0_2] : memref<1x128x8xbf16, #tpu.memory_space<vmem>>, vector<1x128x8xbf16>
    %4 = vector.shape_cast %3 : vector<1x128x8xbf16> to vector<128x8xbf16>
    %c0_3 = arith.constant 0 : index
    %c0_4 = arith.constant 0 : index
    %5 = vector.load %arg4[%c0_3, %c0_4] : memref<8x4xbf16, #tpu.memory_space<vmem>>, vector<8x4xbf16>
    %cst = arith.constant dense<0.000000e+00> : vector<128x4xf32>
    %6 = tpu.matmul %4, %5, %cst {dimension_numbers = #tpu.dot_dimension_numbers<[1], [0], [0], [1], [0, 0, 1, 1], [], []>} : vector<128x8xbf16>, vector<8x4xbf16>, vector<128x4xf32> -> vector<128x4xf32>
    %cst_5 = arith.constant 5.000000e-01 : f32
    %7 = vector.broadcast %cst_5 : f32 to vector<128x4xf32>
    %8 = arith.mulf %7, %6 : vector<128x4xf32>
    %9 = math.tanh %8 : vector<128x4xf32>
    %cst_6 = arith.constant 5.000000e-01 : f32
    %10 = vector.broadcast %cst_6 : f32 to vector<128x4xf32>
    %11 = arith.mulf %10, %9 : vector<128x4xf32>
    %cst_7 = arith.constant 5.000000e-01 : f32
    %12 = vector.broadcast %cst_7 : f32 to vector<128x4xf32>
    %13 = arith.addf %11, %12 : vector<128x4xf32>
    %14 = arith.mulf %6, %13 : vector<128x4xf32>
    %c0_8 = arith.constant 0 : index
    %c0_9 = arith.constant 0 : index
    %15 = vector.load %arg6[%c0_8, %c0_9] : memref<4x1xf32, #tpu.memory_space<vmem>>, vector<4x1xf32>
    %cst_10 = arith.constant dense<0.000000e+00> : vector<128x1xf32>
    %16 = tpu.matmul %14, %15, %cst_10 {dimension_numbers = #tpu.dot_dimension_numbers<[1], [0], [0], [1], [0, 0, 1, 1], [], []>} : vector<128x4xf32>, vector<4x1xf32>, vector<128x1xf32> -> vector<128x1xf32>
    %17 = arith.truncf %14 : vector<128x4xf32> to vector<128x4xbf16>
    %c0_11 = arith.constant 0 : index
    %c0_12 = arith.constant 0 : index
    %18 = vector.load %arg5[%c0_11, %c0_12] : memref<4x6xbf16, #tpu.memory_space<vmem>>, vector<4x6xbf16>
    %cst_13 = arith.constant dense<0.000000e+00> : vector<128x6xf32>
    %19 = tpu.matmul %17, %18, %cst_13 {dimension_numbers = #tpu.dot_dimension_numbers<[1], [0], [0], [1], [0, 0, 1, 1], [], []>} : vector<128x4xbf16>, vector<4x6xbf16>, vector<128x6xf32> -> vector<128x6xf32>
    %20 = vector.extract_strided_slice %19 {offsets = [0, 0], sizes = [128, 2], strides = [1, 1]} : vector<128x6xf32> to vector<128x2xf32>
    %21 = arith.truncf %20 : vector<128x2xf32> to vector<128x2xbf16>
    %c0_14 = arith.constant 0 : index
    %c0_15 = arith.constant 0 : index
    %c0_16 = arith.constant 0 : index
    %22 = vector.load %arg11[%c0_14, %c0_15, %c0_16] : memref<1x128x2xbf16, #tpu.memory_space<vmem>>, vector<1x128x2xbf16>
    %23 = vector.shape_cast %22 : vector<1x128x2xbf16> to vector<128x2xbf16>
    %24 = vector.shape_cast %21 : vector<128x2xbf16> to vector<1x128x2xbf16>
    tpu.vector_store %arg11[%c0_14, %c0_15, %c0_16], %24 {strides = array<i32>} : memref<1x128x2xbf16, #tpu.memory_space<vmem>>, vector<1x128x2xbf16>,
    %c0_17 = arith.constant 0 : index
    %c0_18 = arith.constant 0 : index
    %25 = vector.load %arg12[%c0_17, %c0_18] : memref<1x1xf32, #tpu.memory_space<vmem>>, vector<1x1xf32>
    %cst_19 = arith.constant dense<0xFF800000> : vector<1xf32>
    %26 = vector.multi_reduction <maximumf>, %16, %cst_19 [0] : vector<128x1xf32> to vector<1xf32>
    %27 = vector.shape_cast %26 : vector<1xf32> to vector<1x1xf32>
    %28 = arith.maximumf %25, %27 : vector<1x1xf32>
    %29 = arith.subf %25, %28 : vector<1x1xf32>
    %30 = math.exp %29 : vector<1x1xf32>
    %31 = vector.broadcast %28 : vector<1x1xf32> to vector<128x1xf32>
    %32 = arith.subf %16, %31 : vector<128x1xf32>
    %33 = math.exp %32 : vector<128x1xf32>
    %34 = tpu.iota {dimensions = array<i32: 1>} : vector<128x2xi32>
    %c0_i32_20 = arith.constant 0 : i32
    %35 = vector.broadcast %c0_i32_20 : i32 to vector<128x2xi32>
    %36 = arith.cmpi eq, %34, %35 : vector<128x2xi32>
    %cst_21 = arith.constant 1.000000e+00 : f32
    %37 = vector.shape_cast %33 : vector<128x1xf32> to vector<128x1xf32>
    %38 = vector.broadcast %37 : vector<128x1xf32> to vector<128x2xf32>
    %39 = vector.broadcast %cst_21 : f32 to vector<128x2xf32>
    %40 = arith.select %36, %38, %39 : vector<128x2xi1>, vector<128x2xf32>
    %cst_22 = arith.constant dense<0.000000e+00> : vector<2x6xf32>
    %41 = tpu.matmul %40, %19, %cst_22 {dimension_numbers = #tpu.dot_dimension_numbers<[0], [0], [1], [1], [0, 1, 1, 1], [], []>} : vector<128x2xf32>, vector<128x6xf32>, vector<2x6xf32> -> vector<2x6xf32>
    %c0_23 = arith.constant 0 : index
    %c0_24 = arith.constant 0 : index
    %42 = vector.load %arg13[%c0_23, %c0_24] : memref<1x1xf32, #tpu.memory_space<vmem>>, vector<1x1xf32>
    %43 = arith.mulf %30, %42 : vector<1x1xf32>
    %cst_25 = arith.constant dense<0.000000e+00> : vector<1xf32>
    %44 = vector.multi_reduction <add>, %33, %cst_25 [0] : vector<128x1xf32> to vector<1xf32>
    %45 = vector.shape_cast %44 : vector<1xf32> to vector<1x1xf32>
    %46 = arith.addf %43, %45 : vector<1x1xf32>
    %c0_26 = arith.constant 0 : index
    %c0_27 = arith.constant 0 : index
    %47 = vector.load %arg13[%c0_26, %c0_27] : memref<1x1xf32, #tpu.memory_space<vmem>>, vector<1x1xf32>
    tpu.vector_store %arg13[%c0_26, %c0_27], %46 {strides = array<i32>} : memref<1x1xf32, #tpu.memory_space<vmem>>, vector<1x1xf32>,
    %c0_28 = arith.constant 0 : index
    %c0_29 = arith.constant 0 : index
    %48 = vector.load %arg14[%c0_28, %c0_29] : memref<1x2xf32, #tpu.memory_space<vmem>>, vector<1x2xf32>
    %49 = vector.broadcast %30 : vector<1x1xf32> to vector<1x2xf32>
    %50 = arith.mulf %49, %48 : vector<1x2xf32>
    %51 = vector.extract_strided_slice %41 {offsets = [0, 2], sizes = [1, 2], strides = [1, 1]} : vector<2x6xf32> to vector<1x2xf32>
    %52 = arith.addf %50, %51 : vector<1x2xf32>
    %c0_30 = arith.constant 0 : index
    %c0_31 = arith.constant 0 : index
    %53 = vector.load %arg14[%c0_30, %c0_31] : memref<1x2xf32, #tpu.memory_space<vmem>>, vector<1x2xf32>
    tpu.vector_store %arg14[%c0_30, %c0_31], %52 {strides = array<i32>} : memref<1x2xf32, #tpu.memory_space<vmem>>, vector<1x2xf32>,
    %c0_32 = arith.constant 0 : index
    %c0_33 = arith.constant 0 : index
    %54 = vector.load %arg15[%c0_32, %c0_33] : memref<1x2xf32, #tpu.memory_space<vmem>>, vector<1x2xf32>
    %55 = vector.extract_strided_slice %41 {offsets = [1, 4], sizes = [1, 2], strides = [1, 1]} : vector<2x6xf32> to vector<1x2xf32>
    %56 = arith.addf %54, %55 : vector<1x2xf32>
    %c0_34 = arith.constant 0 : index
    %c0_35 = arith.constant 0 : index
    %57 = vector.load %arg15[%c0_34, %c0_35] : memref<1x2xf32, #tpu.memory_space<vmem>>, vector<1x2xf32>
    tpu.vector_store %arg15[%c0_34, %c0_35], %56 {strides = array<i32>} : memref<1x2xf32, #tpu.memory_space<vmem>>, vector<1x2xf32>,
    %c0_36 = arith.constant 0 : index
    %c0_37 = arith.constant 0 : index
    %58 = vector.load %arg12[%c0_36, %c0_37] : memref<1x1xf32, #tpu.memory_space<vmem>>, vector<1x1xf32>
    tpu.vector_store %arg12[%c0_36, %c0_37], %28 {strides = array<i32>} : memref<1x1xf32, #tpu.memory_space<vmem>>, vector<1x1xf32>,
    %c0_i32_38 = arith.constant 0 : i32
    %59 = arith.cmpi eq, %arg2, %c0_i32_38 : i32
    %60 = arith.extui %59 : i1 to i32
    %c0_i32_39 = arith.constant 0 : i32
    %61 = arith.cmpi ne, %60, %c0_i32_39 : i32
    scf.if %61 {
      %c0_40 = arith.constant 0 : index
      %c0_41 = arith.constant 0 : index
      %62 = vector.load %arg12[%c0_40, %c0_41] : memref<1x1xf32, #tpu.memory_space<vmem>>, vector<1x1xf32>
      %c0_42 = arith.constant 0 : index
      %c0_43 = arith.constant 0 : index
      %c0_44 = arith.constant 0 : index
      %c0_45 = arith.constant 0 : index
      %63 = vector.load %arg7[%c0_42, %c0_43, %c0_44, %c0_45] : memref<1x1x1x1xf32, #tpu.memory_space<vmem>>, vector<1x1x1x1xf32>
      %64 = vector.shape_cast %63 : vector<1x1x1x1xf32> to vector<1x1xf32>
      %65 = vector.shape_cast %62 : vector<1x1xf32> to vector<1x1x1x1xf32>
      tpu.vector_store %arg7[%c0_42, %c0_43, %c0_44, %c0_45], %65 {strides = array<i32>} : memref<1x1x1x1xf32, #tpu.memory_space<vmem>>, vector<1x1x1x1xf32>,
      %c0_46 = arith.constant 0 : index
      %c0_47 = arith.constant 0 : index
      %66 = vector.load %arg13[%c0_46, %c0_47] : memref<1x1xf32, #tpu.memory_space<vmem>>, vector<1x1xf32>
      %c0_48 = arith.constant 0 : index
      %c0_49 = arith.constant 0 : index
      %c0_50 = arith.constant 0 : index
      %c0_51 = arith.constant 0 : index
      %67 = vector.load %arg8[%c0_48, %c0_49, %c0_50, %c0_51] : memref<1x1x1x1xf32, #tpu.memory_space<vmem>>, vector<1x1x1x1xf32>
      %68 = vector.shape_cast %67 : vector<1x1x1x1xf32> to vector<1x1xf32>
      %69 = vector.shape_cast %66 : vector<1x1xf32> to vector<1x1x1x1xf32>
      tpu.vector_store %arg8[%c0_48, %c0_49, %c0_50, %c0_51], %69 {strides = array<i32>} : memref<1x1x1x1xf32, #tpu.memory_space<vmem>>, vector<1x1x1x1xf32>,
      %c0_52 = arith.constant 0 : index
      %c0_53 = arith.constant 0 : index
      %70 = vector.load %arg14[%c0_52, %c0_53] : memref<1x2xf32, #tpu.memory_space<vmem>>, vector<1x2xf32>
      %c0_54 = arith.constant 0 : index
      %c0_55 = arith.constant 0 : index
      %c0_56 = arith.constant 0 : index
      %c0_57 = arith.constant 0 : index
      %71 = vector.load %arg9[%c0_54, %c0_55, %c0_56, %c0_57] : memref<1x1x1x2xf32, #tpu.memory_space<vmem>>, vector<1x1x1x2xf32>
      %72 = vector.shape_cast %71 : vector<1x1x1x2xf32> to vector<1x2xf32>
      %73 = vector.shape_cast %70 : vector<1x2xf32> to vector<1x1x1x2xf32>
      tpu.vector_store %arg9[%c0_54, %c0_55, %c0_56, %c0_57], %73 {strides = array<i32>} : memref<1x1x1x2xf32, #tpu.memory_space<vmem>>, vector<1x1x1x2xf32>,
      %c0_58 = arith.constant 0 : index
      %c0_59 = arith.constant 0 : index
      %74 = vector.load %arg15[%c0_58, %c0_59] : memref<1x2xf32, #tpu.memory_space<vmem>>, vector<1x2xf32>
      %c0_60 = arith.constant 0 : index
      %c0_61 = arith.constant 0 : index
      %c0_62 = arith.constant 0 : index
      %c0_63 = arith.constant 0 : index
      %75 = vector.load %arg10[%c0_60, %c0_61, %c0_62, %c0_63] : memref<1x1x1x2xf32, #tpu.memory_space<vmem>>, vector<1x1x1x2xf32>
      %76 = vector.shape_cast %75 : vector<1x1x1x2xf32> to vector<1x2xf32>
      %77 = vector.shape_cast %74 : vector<1x2xf32> to vector<1x1x1x2xf32>
      tpu.vector_store %arg10[%c0_60, %c0_61, %c0_62, %c0_63], %77 {strides = array<i32>} : memref<1x1x1x2xf32, #tpu.memory_space<vmem>>, vector<1x1x1x2xf32>,
    } else {
    }
    return
  }
  func.func @transform_0(%arg0: i32, %arg1: i32, %arg2: i32) -> (i32, i32, i32) {
    %c1_i32 = arith.constant 1 : i32
    %0 = arith.muli %arg1, %c1_i32 : i32
    %1 = arith.addi %0, %arg2 : i32
    %c0_i32 = arith.constant 0 : i32
    %c0_i32_0 = arith.constant 0 : i32
    return %arg0, %1, %c0_i32 : i32, i32, i32
  }
  func.func @transform_1(%arg0: i32, %arg1: i32, %arg2: i32) -> (i32, i32) {
    %c0_i32 = arith.constant 0 : i32
    %c0_i32_0 = arith.constant 0 : i32
    %c0_i32_1 = arith.constant 0 : i32
    return %c0_i32, %c0_i32_0 : i32, i32
  }
  func.func @transform_2(%arg0: i32, %arg1: i32, %arg2: i32) -> (i32, i32) {
    %c0_i32 = arith.constant 0 : i32
    %c0_i32_0 = arith.constant 0 : i32
    %c0_i32_1 = arith.constant 0 : i32
    return %c0_i32, %c0_i32_0 : i32, i32
  }
  func.func @transform_3(%arg0: i32, %arg1: i32, %arg2: i32) -> (i32, i32) {
    %c0_i32 = arith.constant 0 : i32
    %c0_i32_0 = arith.constant 0 : i32
    %c0_i32_1 = arith.constant 0 : i32
    return %c0_i32, %c0_i32_0 : i32, i32
  }
  func.func @transform_4(%arg0: i32, %arg1: i32, %arg2: i32) -> (i32, i32, i32, i32) {
    %c0_i32 = arith.constant 0 : i32
    %c0_i32_0 = arith.constant 0 : i32
    %c0_i32_1 = arith.constant 0 : i32
    return %arg0, %arg1, %c0_i32, %c0_i32_0 : i32, i32, i32, i32
  }
  func.func @transform_5(%arg0: i32, %arg1: i32, %arg2: i32) -> (i32, i32, i32, i32) {
    %c0_i32 = arith.constant 0 : i32
    %c0_i32_0 = arith.constant 0 : i32
    %c0_i32_1 = arith.constant 0 : i32
    return %arg0, %arg1, %c0_i32, %c0_i32_0 : i32, i32, i32, i32
  }
  func.func @transform_6(%arg0: i32, %arg1: i32, %arg2: i32) -> (i32, i32, i32, i32) {
    %c0_i32 = arith.constant 0 : i32
    %c0_i32_0 = arith.constant 0 : i32
    %c0_i32_1 = arith.constant 0 : i32
    return %arg0, %arg1, %c0_i32, %c0_i32_0 : i32, i32, i32, i32
  }
  func.func @transform_7(%arg0: i32, %arg1: i32, %arg2: i32) -> (i32, i32, i32, i32) {
    %c0_i32 = arith.constant 0 : i32
    %c0_i32_0 = arith.constant 0 : i32
    %c0_i32_1 = arith.constant 0 : i32
    return %arg0, %arg1, %c0_i32, %c0_i32_0 : i32, i32, i32, i32
  }
  func.func @transform_8(%arg0: i32, %arg1: i32, %arg2: i32) -> (i32, i32, i32) {
    %c1_i32 = arith.constant 1 : i32
    %0 = arith.muli %arg1, %c1_i32 : i32
    %1 = arith.addi %0, %arg2 : i32
    %c0_i32 = arith.constant 0 : i32
    %c0_i32_0 = arith.constant 0 : i32
    return %arg0, %1, %c0_i32 : i32, i32, i32
  }
}

module attributes {stable_mosaic.version = 11 : i64} {
  func.func @_c3_psa_apply_kernel(%arg0: i32, %arg1: i32, %arg2: memref<1x128x8xbf16, #tpu.memory_space<vmem>>, %arg3: memref<1x128x1xf32, #tpu.memory_space<vmem>>, %arg4: memref<1x1x4xf32, #tpu.memory_space<vmem>>, %arg5: memref<8x8xbf16, #tpu.memory_space<vmem>>, %arg6: memref<4x8xbf16, #tpu.memory_space<vmem>>, %arg7: memref<4x8xbf16, #tpu.memory_space<vmem>>, %arg8: memref<1x128x8xf32, #tpu.memory_space<vmem>>) attributes {dimension_semantics = [#tpu.dimension_semantics<parallel>, #tpu.dimension_semantics<parallel>], iteration_bounds = array<i64: 2, 2>, scalar_prefetch = 0 : i64, scratch_operands = 0 : i64, tpu.core_type = #tpu.core_type<tc>, window_params = [{transform_indices = @transform_0, window_bounds = array<i64: 1, 128, 8>}, {transform_indices = @transform_1, window_bounds = array<i64: 1, 128, 1>}, {transform_indices = @transform_2, window_bounds = array<i64: 1, 1, 4>}, {pipeline_mode = #tpu.pipeline_mode<synchronous>, transform_indices = @transform_3, window_bounds = array<i64: 8, 8>}, {pipeline_mode = #tpu.pipeline_mode<synchronous>, transform_indices = @transform_4, window_bounds = array<i64: 4, 8>}, {pipeline_mode = #tpu.pipeline_mode<synchronous>, transform_indices = @transform_5, window_bounds = array<i64: 4, 8>}, {transform_indices = @transform_6, window_bounds = array<i64: 1, 128, 8>}]} {
    %c0 = arith.constant 0 : index
    %c0_0 = arith.constant 0 : index
    %c0_1 = arith.constant 0 : index
    %0 = vector.load %arg2[%c0, %c0_0, %c0_1] : memref<1x128x8xbf16, #tpu.memory_space<vmem>>, vector<1x128x8xbf16>
    %1 = vector.shape_cast %0 : vector<1x128x8xbf16> to vector<128x8xbf16>
    %c0_2 = arith.constant 0 : index
    %c0_3 = arith.constant 0 : index
    %2 = vector.load %arg5[%c0_2, %c0_3] : memref<8x8xbf16, #tpu.memory_space<vmem>>, vector<8x8xbf16>
    %cst = arith.constant dense<0.000000e+00> : vector<128x8xf32>
    %3 = tpu.matmul %1, %2, %cst {dimension_numbers = #tpu.dot_dimension_numbers<[1], [0], [0], [1], [0, 0, 1, 1], [], []>} : vector<128x8xbf16>, vector<8x8xbf16>, vector<128x8xf32> -> vector<128x8xf32>
    %cst_4 = arith.constant 5.000000e-01 : f32
    %4 = vector.broadcast %cst_4 : f32 to vector<128x8xf32>
    %5 = arith.mulf %4, %3 : vector<128x8xf32>
    %6 = math.tanh %5 : vector<128x8xf32>
    %cst_5 = arith.constant 5.000000e-01 : f32
    %7 = vector.broadcast %cst_5 : f32 to vector<128x8xf32>
    %8 = arith.mulf %7, %6 : vector<128x8xf32>
    %cst_6 = arith.constant 5.000000e-01 : f32
    %9 = vector.broadcast %cst_6 : f32 to vector<128x8xf32>
    %10 = arith.addf %8, %9 : vector<128x8xf32>
    %11 = arith.mulf %3, %10 : vector<128x8xf32>
    %12 = vector.extract_strided_slice %11 {offsets = [0, 0], sizes = [128, 4], strides = [1, 1]} : vector<128x8xf32> to vector<128x4xf32>
    %13 = vector.extract_strided_slice %11 {offsets = [0, 4], sizes = [128, 4], strides = [1, 1]} : vector<128x8xf32> to vector<128x4xf32>
    %c0_7 = arith.constant 0 : index
    %c0_8 = arith.constant 0 : index
    %c0_9 = arith.constant 0 : index
    %14 = vector.load %arg4[%c0_7, %c0_8, %c0_9] : memref<1x1x4xf32, #tpu.memory_space<vmem>>, vector<1x1x4xf32>
    %15 = vector.shape_cast %14 : vector<1x1x4xf32> to vector<1x4xf32>
    %c0_10 = arith.constant 0 : index
    %c0_11 = arith.constant 0 : index
    %c0_12 = arith.constant 0 : index
    %16 = vector.load %arg3[%c0_10, %c0_11, %c0_12] : memref<1x128x1xf32, #tpu.memory_space<vmem>>, vector<1x128x1xf32>
    %17 = vector.shape_cast %16 : vector<1x128x1xf32> to vector<128x1xf32>
    %18 = vector.broadcast %15 : vector<1x4xf32> to vector<128x4xf32>
    %19 = vector.broadcast %17 : vector<128x1xf32> to vector<128x4xf32>
    %20 = arith.addf %18, %19 : vector<128x4xf32>
    %21 = arith.mulf %12, %20 : vector<128x4xf32>
    %22 = arith.truncf %21 : vector<128x4xf32> to vector<128x4xbf16>
    %23 = arith.truncf %13 : vector<128x4xf32> to vector<128x4xbf16>
    %c0_13 = arith.constant 0 : index
    %c0_14 = arith.constant 0 : index
    %24 = vector.load %arg6[%c0_13, %c0_14] : memref<4x8xbf16, #tpu.memory_space<vmem>>, vector<4x8xbf16>
    %cst_15 = arith.constant dense<0.000000e+00> : vector<128x8xf32>
    %25 = tpu.matmul %22, %24, %cst_15 {dimension_numbers = #tpu.dot_dimension_numbers<[1], [0], [0], [1], [0, 0, 1, 1], [], []>} : vector<128x4xbf16>, vector<4x8xbf16>, vector<128x8xf32> -> vector<128x8xf32>
    %c0_16 = arith.constant 0 : index
    %c0_17 = arith.constant 0 : index
    %26 = vector.load %arg7[%c0_16, %c0_17] : memref<4x8xbf16, #tpu.memory_space<vmem>>, vector<4x8xbf16>
    %cst_18 = arith.constant dense<0.000000e+00> : vector<128x8xf32>
    %27 = tpu.matmul %23, %26, %cst_18 {dimension_numbers = #tpu.dot_dimension_numbers<[1], [0], [0], [1], [0, 0, 1, 1], [], []>} : vector<128x4xbf16>, vector<4x8xbf16>, vector<128x8xf32> -> vector<128x8xf32>
    %28 = arith.addf %25, %27 : vector<128x8xf32>
    %cst_19 = arith.constant 5.000000e-01 : f32
    %29 = vector.broadcast %cst_19 : f32 to vector<128x8xf32>
    %30 = arith.mulf %29, %28 : vector<128x8xf32>
    %31 = math.tanh %30 : vector<128x8xf32>
    %cst_20 = arith.constant 5.000000e-01 : f32
    %32 = vector.broadcast %cst_20 : f32 to vector<128x8xf32>
    %33 = arith.mulf %32, %31 : vector<128x8xf32>
    %cst_21 = arith.constant 5.000000e-01 : f32
    %34 = vector.broadcast %cst_21 : f32 to vector<128x8xf32>
    %35 = arith.addf %33, %34 : vector<128x8xf32>
    %36 = arith.mulf %28, %35 : vector<128x8xf32>
    %c0_22 = arith.constant 0 : index
    %c0_23 = arith.constant 0 : index
    %c0_24 = arith.constant 0 : index
    %37 = vector.load %arg8[%c0_22, %c0_23, %c0_24] : memref<1x128x8xf32, #tpu.memory_space<vmem>>, vector<1x128x8xf32>
    %38 = vector.shape_cast %37 : vector<1x128x8xf32> to vector<128x8xf32>
    %39 = vector.shape_cast %36 : vector<128x8xf32> to vector<1x128x8xf32>
    tpu.vector_store %arg8[%c0_22, %c0_23, %c0_24], %39 {strides = array<i32>} : memref<1x128x8xf32, #tpu.memory_space<vmem>>, vector<1x128x8xf32>,
    return
  }
  func.func @transform_0(%arg0: i32, %arg1: i32) -> (i32, i32, i32) {
    %c0_i32 = arith.constant 0 : i32
    %c0_i32_0 = arith.constant 0 : i32
    return %arg0, %arg1, %c0_i32 : i32, i32, i32
  }
  func.func @transform_1(%arg0: i32, %arg1: i32) -> (i32, i32, i32) {
    %c0_i32 = arith.constant 0 : i32
    %c0_i32_0 = arith.constant 0 : i32
    return %arg0, %arg1, %c0_i32 : i32, i32, i32
  }
  func.func @transform_2(%arg0: i32, %arg1: i32) -> (i32, i32, i32) {
    %c0_i32 = arith.constant 0 : i32
    %c0_i32_0 = arith.constant 0 : i32
    %c0_i32_1 = arith.constant 0 : i32
    return %arg0, %c0_i32, %c0_i32_0 : i32, i32, i32
  }
  func.func @transform_3(%arg0: i32, %arg1: i32) -> (i32, i32) {
    %c0_i32 = arith.constant 0 : i32
    %c0_i32_0 = arith.constant 0 : i32
    %c0_i32_1 = arith.constant 0 : i32
    return %c0_i32, %c0_i32_0 : i32, i32
  }
  func.func @transform_4(%arg0: i32, %arg1: i32) -> (i32, i32) {
    %c0_i32 = arith.constant 0 : i32
    %c0_i32_0 = arith.constant 0 : i32
    %c0_i32_1 = arith.constant 0 : i32
    return %c0_i32, %c0_i32_0 : i32, i32
  }
  func.func @transform_5(%arg0: i32, %arg1: i32) -> (i32, i32) {
    %c0_i32 = arith.constant 0 : i32
    %c0_i32_0 = arith.constant 0 : i32
    %c0_i32_1 = arith.constant 0 : i32
    return %c0_i32, %c0_i32_0 : i32, i32
  }
  func.func @transform_6(%arg0: i32, %arg1: i32) -> (i32, i32, i32) {
    %c0_i32 = arith.constant 0 : i32
    %c0_i32_0 = arith.constant 0 : i32
    return %arg0, %arg1, %c0_i32 : i32, i32, i32
  }
}

</mosaic_0001>

<llo_original>
// kernel: c3_psa_p_forward.3
$region0: #{c3_psa_p_forward.3}
  #allocation0 [shape = 'u32[]', space=smem, size = 0x4, offset = 0x4, fixed_abs, tag = 'smem constant byte address 0x4 - core index']
  #allocation1 [shape = 'u32[144,128]{1,0:T(1,128)}', space=vmem, size = 0x12000, scoped, tag = 'internal scratch']
  %s0 = inlined_call_operand.vmem [shape: bf16[2,256,8], index: 0, kind: input, shape index: {}]
  %s1 = inlined_call_operand.vmem [shape: f32[2,256,1], index: 1, kind: input, shape index: {}]
  %s2 = inlined_call_operand.vmem [shape: f32[2,1,4], index: 2, kind: input, shape index: {}]
  %s3 = inlined_call_operand.vmem [shape: bf16[8,8], index: 3, kind: input, shape index: {}]
  %s4 = inlined_call_operand.vmem [shape: bf16[4,8], index: 4, kind: input, shape index: {}]
  %s5 = inlined_call_operand.vmem [shape: bf16[4,8], index: 5, kind: input, shape index: {}]
  %s6 = inlined_call_operand.vmem [shape: f32[2,256,8], index: 6, kind: output, shape index: {}]
  %s7 = sld [smem:[#allocation0]]
  $region57: #{c3_psa_p_forward.3} parent=0
    _
  %s9 = ssub.s32 1, %s7
  %s10 = scalar_select 0, %s9, %s7
  loop: start=0, step=1, limit=6
  $region2: #{c3_psa_p_forward.3} parent=0 // loop_pre_header
    _
  $region3: #{c3_psa_p_forward.3} parent=0 // loop_header
    %s12 = sphi 0, %s16
    %p13 = scmp.ge.s32.totalorder %s12, 6
    %s19 = sphi 0, %s31
    %s20 = sphi 0, %s27
    %s21 = sphi 0, %s19
    %s22 = sphi 0, %s20
    %s23 = sphi 0, %s21
    %s24 = sphi 0, %s22
    %s36 = sphi 0, %s38
    %s39 = sphi 0, %s36
    %s40 = sphi 0, %s39
    %s56 = sphi 0, %s40
    %s64 = sphi 0, %s66
    %s67 = sphi 0, %s64
    %s68 = sphi 0, %s67
    %s84 = sphi 0, %s68
    %s90 = sphi 0, %s92
    %s93 = sphi 0, %s90
    %s94 = sphi 0, %s93
    %s110 = sphi 0, %s94
    %s114 = sphi 0, %s114
    %s116 = sphi 0, %s114
    %s117 = sphi 0, %s116
    %s131 = sphi 0, %s117
    %s135 = sphi 0, %s135
    %s137 = sphi 0, %s135
    %s138 = sphi 0, %s137
    %s152 = sphi 0, %s138
    %s156 = sphi 0, %s156
    %s158 = sphi 0, %s156
    %s159 = sphi 0, %s158
    %s173 = sphi 0, %s159
    %s181 = sphi 0, %s183
    %s184 = sphi 0, %s181
    %s185 = sphi 0, %s184
    %s201 = sphi 0, %s185
  $region4: #{c3_psa_p_forward.3} parent=0 // loop_header_branch
    %15 = sbr.rel (%p13) target = $region8
  $region5: #{c3_psa_p_forward.3} parent=0 // loop_body
    %s17 = ssub.s32 %s12, 1
    %s18 = ssub.s32 %s12, 2
    %s25 = sadd.s32 1, %s20
    %p26 = scmp.ge.s32.totalorder %s25, 2
    %s27 = scalar_select %p26, 0, %s25
    %s28 = sadd.s32 1, %s19
    %s29 = scalar_select %p26, %s28, %s19
    %p30 = scmp.ge.s32.totalorder %s29, 2
    %s31 = scalar_select %p30, 0, %s29
    %s32 = ssub.s32 %s19, %s31
    %s33 = ssub.s32 %s20, %s27
    %s34 = sor.u32 %s32, %s33
    %p35 = scmp.eq.s32.totalorder %s34, 0
    %s37 = sadd.s32 %s36, 1
    %s38 = scalar_select %p35, %s36, %s37
    %p41 = pneg %p35
    %p42 = scmp.eq.s32.totalorder %s12, 3
    %p43 = por %p41, %p42
    %p44 = scmp.ne.s32.totalorder %s36, %s39
    %p45 = scmp.eq.s32.totalorder %s12, 0
    %p46 = por %p44, %p45
    %p47 = scmp.ne.s32.totalorder %s36, %s39
    %p48 = scmp.eq.s32.totalorder %s17, 3
    %p49 = por %p47, %p48
    %p50 = scmp.ne.s32.totalorder %s39, %s40
    %p51 = scmp.eq.s32.totalorder %s17, 0
    %p52 = por %p50, %p51
    %p53 = scmp.ne.s32.totalorder %s39, %s40
    %p54 = scmp.eq.s32.totalorder %s18, 3
    %p55 = por %p53, %p54
    %p57 = scmp.ne.s32.totalorder %s40, %s56
    %p58 = scmp.eq.s32.totalorder %s18, 0
    %p59 = por %p57, %p58
    %s60 = ssub.s32 %s19, %s31
    %s61 = ssub.s32 %s20, %s27
    %s62 = sor.u32 %s60, %s61
    %p63 = scmp.eq.s32.totalorder %s62, 0
    %s65 = sadd.s32 %s64, 1
    %s66 = scalar_select %p63, %s64, %s65
    %p69 = pneg %p63
    %p70 = scmp.eq.s32.totalorder %s12, 3
    %p71 = por %p69, %p70
    %p72 = scmp.ne.s32.totalorder %s64, %s67
    %p73 = scmp.eq.s32.totalorder %s12, 0
    %p74 = por %p72, %p73
    %p75 = scmp.ne.s32.totalorder %s64, %s67
    %p76 = scmp.eq.s32.totalorder %s17, 3
    %p77 = por %p75, %p76
    %p78 = scmp.ne.s32.totalorder %s67, %s68
    %p79 = scmp.eq.s32.totalorder %s17, 0
    %p80 = por %p78, %p79
    %p81 = scmp.ne.s32.totalorder %s67, %s68
    %p82 = scmp.eq.s32.totalorder %s18, 3
    %p83 = por %p81, %p82
    %p85 = scmp.ne.s32.totalorder %s68, %s84
    %p86 = scmp.eq.s32.totalorder %s18, 0
    %p87 = por %p85, %p86
    %s88 = ssub.s32 %s19, %s31
    %p89 = scmp.eq.s32.totalorder %s88, 0
    %s91 = sadd.s32 %s90, 1
    %s92 = scalar_select %p89, %s90, %s91
    %p95 = pneg %p89
    %p96 = scmp.eq.s32.totalorder %s12, 3
    %p97 = por %p95, %p96
    %p98 = scmp.ne.s32.totalorder %s90, %s93
    %p99 = scmp.eq.s32.totalorder %s12, 0
    %p100 = por %p98, %p99
    %p101 = scmp.ne.s32.totalorder %s90, %s93
    %p102 = scmp.eq.s32.totalorder %s17, 3
    %p103 = por %p101, %p102
    %p104 = scmp.ne.s32.totalorder %s93, %s94
    %p105 = scmp.eq.s32.totalorder %s17, 0
    %p106 = por %p104, %p105
    %p107 = scmp.ne.s32.totalorder %s93, %s94
    %p108 = scmp.eq.s32.totalorder %s18, 3
    %p109 = por %p107, %p108
    %p111 = scmp.ne.s32.totalorder %s94, %s110
    %p112 = scmp.eq.s32.totalorder %s18, 0
    %p113 = por %p111, %p112
    %s115 = sadd.s32 %s114, 1
    %p118 = scmp.eq.s32.totalorder %s12, 3
    %p119 = scmp.ne.s32.totalorder %s114, %s116
    %p120 = scmp.eq.s32.totalorder %s12, 0
    %p121 = por %p119, %p120
    %p122 = scmp.ne.s32.totalorder %s114, %s116
    %p123 = scmp.eq.s32.totalorder %s17, 3
    %p124 = por %p122, %p123
    %p125 = scmp.ne.s32.totalorder %s116, %s117
    %p126 = scmp.eq.s32.totalorder %s17, 0
    %p127 = por %p125, %p126
    %p128 = scmp.ne.s32.totalorder %s116, %s117
    %p129 = scmp.eq.s32.totalorder %s18, 3
    %p130 = por %p128, %p129
    %p132 = scmp.ne.s32.totalorder %s117, %s131
    %p133 = scmp.eq.s32.totalorder %s18, 0
    %p134 = por %p132, %p133
    %s136 = sadd.s32 %s135, 1
    %p139 = scmp.eq.s32.totalorder %s12, 3
    %p140 = scmp.ne.s32.totalorder %s135, %s137
    %p141 = scmp.eq.s32.totalorder %s12, 0
    %p142 = por %p140, %p141
    %p143 = scmp.ne.s32.totalorder %s135, %s137
    %p144 = scmp.eq.s32.totalorder %s17, 3
    %p145 = por %p143, %p144
    %p146 = scmp.ne.s32.totalorder %s137, %s138
    %p147 = scmp.eq.s32.totalorder %s17, 0
    %p148 = por %p146, %p147
    %p149 = scmp.ne.s32.totalorder %s137, %s138
    %p150 = scmp.eq.s32.totalorder %s18, 3
    %p151 = por %p149, %p150
    %p153 = scmp.ne.s32.totalorder %s138, %s152
    %p154 = scmp.eq.s32.totalorder %s18, 0
    %p155 = por %p153, %p154
    %s157 = sadd.s32 %s156, 1
    %p160 = scmp.eq.s32.totalorder %s12, 3
    %p161 = scmp.ne.s32.totalorder %s156, %s158
    %p162 = scmp.eq.s32.totalorder %s12, 0
    %p163 = por %p161, %p162
    %p164 = scmp.ne.s32.totalorder %s156, %s158
    %p165 = scmp.eq.s32.totalorder %s17, 3
    %p166 = por %p164, %p165
    %p167 = scmp.ne.s32.totalorder %s158, %s159
    %p168 = scmp.eq.s32.totalorder %s17, 0
    %p169 = por %p167, %p168
    %p170 = scmp.ne.s32.totalorder %s158, %s159
    %p171 = scmp.eq.s32.totalorder %s18, 3
    %p172 = por %p170, %p171
    %p174 = scmp.ne.s32.totalorder %s159, %s173
    %p175 = scmp.eq.s32.totalorder %s18, 0
    %p176 = por %p174, %p175
    %s177 = ssub.s32 %s19, %s31
    %s178 = ssub.s32 %s20, %s27
    %s179 = sor.u32 %s177, %s178
    %p180 = scmp.eq.s32.totalorder %s179, 0
    %s182 = sadd.s32 %s181, 1
    %s183 = scalar_select %p180, %s181, %s182
    %p186 = pneg %p180
    %p187 = scmp.eq.s32.totalorder %s12, 3
    %p188 = por %p186, %p187
    %p189 = scmp.ne.s32.totalorder %s181, %s184
    %p190 = scmp.eq.s32.totalorder %s12, 0
    %p191 = por %p189, %p190
    %p192 = scmp.ne.s32.totalorder %s181, %s184
    %p193 = scmp.eq.s32.totalorder %s17, 3
    %p194 = por %p192, %p193
    %p195 = scmp.ne.s32.totalorder %s184, %s185
    %p196 = scmp.eq.s32.totalorder %s17, 0
    %p197 = por %p195, %p196
    %p198 = scmp.ne.s32.totalorder %s184, %s185
    %p199 = scmp.eq.s32.totalorder %s18, 3
    %p200 = por %p198, %p199
    %p202 = scmp.ne.s32.totalorder %s185, %s201
    %p203 = scmp.eq.s32.totalorder %s18, 0
    %p204 = por %p202, %p203
    %p205 = scmp.le.s32.totalorder 1, %s12
    %p206 = scmp.lt.s32.totalorder %s12, 5
    %p207 = pnand %p205, %p206
    %p208 = pneg %p207
    // Predicated region
    $region9: #{c3_psa_p_forward.3} parent=5 // pred_check
      _
    $region10: #{c3_psa_p_forward.3} parent=5 // pred_check_branch
      %210 = sbr.rel (%p207) target = $region12
    $region11: #{c3_psa_p_forward.3} parent=5 // pred_region
      %s211 = ssub.s32 %s12, 1
      // Predicated region
      $region13: #{c3_psa_p_forward.3} parent=11 // pred_check
        %p212 = pneg %p127
      $region14: #{c3_psa_p_forward.3} parent=11 // pred_check_branch
        %214 = sbr.rel (%p212) target = $region16
      $region15: #{c3_psa_p_forward.3} parent=11 // pred_region
        _
      $region16: #{c3_psa_p_forward.3} parent=11 // pred_fallthru
        _
      // Predicated region
      $region17: #{c3_psa_p_forward.3} parent=11 // pred_check
        %p215 = pneg %p148
      $region18: #{c3_psa_p_forward.3} parent=11 // pred_check_branch
        %217 = sbr.rel (%p215) target = $region20
      $region19: #{c3_psa_p_forward.3} parent=11 // pred_region
        _
      $region20: #{c3_psa_p_forward.3} parent=11 // pred_fallthru
        _
      // Predicated region
      $region21: #{c3_psa_p_forward.3} parent=11 // pred_check
        %p218 = pneg %p169
      $region22: #{c3_psa_p_forward.3} parent=11 // pred_check_branch
        %220 = sbr.rel (%p218) target = $region24
      $region23: #{c3_psa_p_forward.3} parent=11 // pred_region
        _
      $region24: #{c3_psa_p_forward.3} parent=11 // pred_fallthru
        _
    $region12: #{c3_psa_p_forward.3} parent=5 // pred_fallthru
      _
    %p221 = scmp.lt.s32.totalorder %s12, 4
    // Predicated region
    $region25: #{c3_psa_p_forward.3} parent=5 // pred_check
      %p222 = pneg %p221
    $region26: #{c3_psa_p_forward.3} parent=5 // pred_check_branch
      %224 = sbr.rel (%p222) target = $region28
    $region27: #{c3_psa_p_forward.3} parent=5 // pred_region
      // Predicated region
      $region29: #{c3_psa_p_forward.3} parent=27 // pred_check
        %p225 = pneg %p46
      $region30: #{c3_psa_p_forward.3} parent=27 // pred_check_branch
        %227 = sbr.rel (%p225) target = $region32
      $region31: #{c3_psa_p_forward.3} parent=27 // pred_region
        %s228 = smul.u32 16, %s20
        %p229 = scmp.lt.s32.totalorder %s19, 1
        %s230 = scalar_select %p229, %s19, 1
        %p231 = scmp.lt.s32.totalorder %s228, 31
        %s232 = scalar_select %p231, %s228, 31
        %s233 = smul.addr %s230, 32
        %s234 = sadd.s32 %s232, %s233
        %s235 = smul.addr %s234, 4
        %s236 = scalar_lea.vmem %s0, %s235
        %s237 = smul.u32 16, %s20
      $region32: #{c3_psa_p_forward.3} parent=27 // pred_fallthru
        _
      // Predicated region
      $region33: #{c3_psa_p_forward.3} parent=27 // pred_check
        %p238 = pneg %p74
      $region34: #{c3_psa_p_forward.3} parent=27 // pred_check_branch
        %240 = sbr.rel (%p238) target = $region36
      $region35: #{c3_psa_p_forward.3} parent=27 // pred_region
        %s241 = smul.u32 16, %s20
        %p242 = scmp.lt.s32.totalorder %s19, 1
        %s243 = scalar_select %p242, %s19, 1
        %p244 = scmp.lt.s32.totalorder %s241, 31
        %s245 = scalar_select %p244, %s241, 31
        %s246 = smul.addr %s243, 32
        %s247 = sadd.s32 %s245, %s246
        %s248 = smul.addr %s247, 8
        %s249 = scalar_lea.vmem %s1, %s248
        %s250 = smul.u32 16, %s20
      $region36: #{c3_psa_p_forward.3} parent=27 // pred_fallthru
        _
      // Predicated region
      $region37: #{c3_psa_p_forward.3} parent=27 // pred_check
        %p251 = pneg %p100
      $region38: #{c3_psa_p_forward.3} parent=27 // pred_check_branch
        %253 = sbr.rel (%p251) target = $region40
      $region39: #{c3_psa_p_forward.3} parent=27 // pred_region
        %p254 = scmp.lt.s32.totalorder %s19, 1
        %s255 = scalar_select %p254, %s19, 1
        %s256 = scalar_lea.vmem %s2, %s255
      $region40: #{c3_psa_p_forward.3} parent=27 // pred_fallthru
        _
    $region28: #{c3_psa_p_forward.3} parent=5 // pred_fallthru
      _
    %p257 = scmp.le.s32.totalorder 1, %s12
    %p258 = scmp.lt.s32.totalorder %s12, 5
    %p259 = pnand %p257, %p258
    %p260 = pneg %p259
    // Predicated region
    $region41: #{c3_psa_p_forward.3} parent=5 // pred_check
      _
    $region42: #{c3_psa_p_forward.3} parent=5 // pred_check_branch
      %262 = sbr.rel (%p259) target = $region44
    $region43: #{c3_psa_p_forward.3} parent=5 // pred_region
      %s263 = ssub.s32 %s12, 1
      %s264 = smul.u32 16, %s22
      %p265 = scmp.lt.s32.totalorder %s21, 1
      %s266 = scalar_select %p265, %s21, 1
      %p267 = scmp.lt.s32.totalorder %s264, 31
      %s268 = scalar_select %p267, %s264, 31
      %s269 = smul.addr %s266, 32
      %s270 = sadd.s32 %s268, %s269
      %s271 = smul.addr %s270, 4
      %s272 = scalar_lea.vmem %s0, %s271
      %p273 = pneg %p52
      %p274 = pneg %p49
      %s275 = smul.u32 16, %s22
      %p276 = scmp.lt.s32.totalorder %s21, 1
      %s277 = scalar_select %p276, %s21, 1
      %p278 = scmp.lt.s32.totalorder %s275, 31
      %s279 = scalar_select %p278, %s275, 31
      %s280 = smul.addr %s277, 32
      %s281 = sadd.s32 %s279, %s280
      %s282 = smul.addr %s281, 8
      %s283 = scalar_lea.vmem %s1, %s282
      %p284 = pneg %p80
      %p285 = pneg %p77
      %p286 = scmp.lt.s32.totalorder %s21, 1
      %s287 = scalar_select %p286, %s21, 1
      %s288 = scalar_lea.vmem %s2, %s287
      %p289 = pneg %p106
      %p290 = pneg %p103
      %p291 = pneg %p127
      %p292 = pneg %p124
      %p293 = pneg %p148
      %p294 = pneg %p145
      %p295 = pneg %p169
      %p296 = pneg %p166
      %p297 = pneg %p197
      %p298 = pneg %p194
      %s299 = smul.u32 16, %s22
      %p300 = scmp.lt.s32.totalorder %s21, 1
      %s301 = scalar_select %p300, %s21, 1
      %p302 = scmp.lt.s32.totalorder %s299, 31
      %s303 = scalar_select %p302, %s299, 31
      %s304 = smul.addr %s301, 32
      %s305 = sadd.s32 %s303, %s304
      %s306 = smul.addr %s305, 8
      %s307 = scalar_lea.vmem %s6, %s306
      %s308 = smul.u32 16, %s22
      %p309 = scmp.lt.s32.totalorder %s21, 1
      %s310 = scalar_select %p309, %s21, 1
      %p311 = scmp.lt.s32.totalorder %s308, 31
      %s312 = scalar_select %p311, %s308, 31
      %s313 = smul.addr %s310, 32
      %s314 = sadd.s32 %s312, %s313
      %s315 = smul.addr %s314, 4
      %s316 = scalar_lea.vmem %s0, %s315
      %s317 = smul.u32 16, %s22
      %s318 = smul.u32 16, %s22
      %p319 = scmp.lt.s32.totalorder %s21, 1
      %s320 = scalar_select %p319, %s21, 1
      %p321 = scmp.lt.s32.totalorder %s318, 31
      %s322 = scalar_select %p321, %s318, 31
      %s323 = smul.addr %s320, 32
      %s324 = sadd.s32 %s322, %s323
      %s325 = smul.addr %s324, 8
      %s326 = scalar_lea.vmem %s1, %s325
      %s327 = smul.u32 16, %s22
      %p328 = scmp.lt.s32.totalorder %s21, 1
      %s329 = scalar_select %p328, %s21, 1
      %s330 = scalar_lea.vmem %s2, %s329
      %s331 = smul.u32 16, %s22
      %p332 = scmp.lt.s32.totalorder %s21, 1
      %s333 = scalar_select %p332, %s21, 1
      %p334 = scmp.lt.s32.totalorder %s331, 31
      %s335 = scalar_select %p334, %s331, 31
      %s336 = smul.addr %s333, 32
      %s337 = sadd.s32 %s335, %s336
      %s338 = smul.addr %s337, 8
      %s339 = scalar_lea.vmem %s6, %s338
      %s340 = smul.u32 16, %s22
      %v342 = vld [vmem:[%s316] sm:$0xf]
      %v343 = vld [vmem:[%s316 + $0x4] sm:$0xf]
      %v344 = vld [vmem:[%s316 + $0x8] sm:$0xf]
      %v345 = vld [vmem:[%s316 + $0xc] sm:$0xf]
      %v346 = vld [vmem:[%s316 + $0x10] sm:$0xf]
      %v347 = vld [vmem:[%s316 + $0x14] sm:$0xf]
      %v348 = vld [vmem:[%s316 + $0x18] sm:$0xf]
      %v349 = vld [vmem:[%s316 + $0x1c] sm:$0xf]
      %v350 = vld [vmem:[%s316 + $0x20] sm:$0xf]
      %v351 = vld [vmem:[%s316 + $0x24] sm:$0xf]
      %v352 = vld [vmem:[%s316 + $0x28] sm:$0xf]
      %v353 = vld [vmem:[%s316 + $0x2c] sm:$0xf]
      %v354 = vld [vmem:[%s316 + $0x30] sm:$0xf]
      %v355 = vld [vmem:[%s316 + $0x34] sm:$0xf]
      %v356 = vld [vmem:[%s316 + $0x38] sm:$0xf]
      %v357 = vld [vmem:[%s316 + $0x3c] sm:$0xf]
      %v358 = vld [vmem:[%s3] sm:$0xf]
      %v375 = vunpack.c.l.b16 %v342
      %v376 = vunpack.c.l.b16 %v343
      %v377 = vunpack.c.l.b16 %v344
      %v378 = vunpack.c.l.b16 %v345
      %v379 = vunpack.c.l.b16 %v346
      %v380 = vunpack.c.l.b16 %v347
      %v381 = vunpack.c.l.b16 %v348
      %v382 = vunpack.c.l.b16 %v349
      %v383 = vunpack.c.l.b16 %v350
      %v384 = vunpack.c.l.b16 %v351
      %v385 = vunpack.c.l.b16 %v352
      %v386 = vunpack.c.l.b16 %v353
      %v387 = vunpack.c.l.b16 %v354
      %v388 = vunpack.c.l.b16 %v355
      %v389 = vunpack.c.l.b16 %v356
      %v390 = vunpack.c.l.b16 %v357
      %v391 = vpack.c.b16 %v376, %v375
      %v392 = vpack.c.b16 %v378, %v377
      %v393 = vpack.c.b16 %v380, %v379
      %v394 = vpack.c.b16 %v382, %v381
      %v395 = vpack.c.b16 %v384, %v383
      %v396 = vpack.c.b16 %v386, %v385
      %v397 = vpack.c.b16 %v388, %v387
      %v398 = vpack.c.b16 %v390, %v389
      %vm399 = vcmask 64512
      %v401 = vsel %vm399, %v391, 0
      %v404 = vsel %vm399, %v392, 0
      %v407 = vsel %vm399, %v393, 0
      %v410 = vsel %vm399, %v394, 0
      %v413 = vsel %vm399, %v395, 0
      %v416 = vsel %vm399, %v396, 0
      %v419 = vsel %vm399, %v397, 0
      %v422 = vsel %vm399, %v398, 0
      %vm424 = vcmask 1043456
      %v426 = vsel %vm424, %v358, 0
      %428 = vmatprep.subr.bf16.mxu0 0
      %429 = vmatpush1.bf16.msra.mxu0 %v426
      %430 = vmatprep.subr.bf16.mxu0 0
      %431 = vmatpush1.bf16.msra.mxu0 0
      %432 = vmatprep.subr.bf16.mxu0 0
      %433 = vmatpush1.bf16.msra.mxu0 0
      %434 = vmatprep.subr.bf16.mxu0 0
      %435 = vmatpush1.bf16.msra.mxu0 0
      %436 = vmatprep.subr.bf16.mxu0 0
      %437 = vmatpush1.bf16.msra.mxu0 0
      %438 = vmatprep.subr.bf16.mxu0 0
      %439 = vmatpush1.bf16.msra.mxu0 0
      %440 = vmatprep.subr.bf16.mxu0 0
      %441 = vmatpush1.bf16.msra.mxu0 0
      %442 = vmatprep.subr.bf16.mxu0 0
      %443 = vmatpush1.bf16.msra.mxu0 0
      %444 = vmatprep.subr.bf16.mxu0 0
      %445 = vmatpush1.bf16.msra.mxu0 0
      %446 = vmatprep.subr.bf16.mxu0 0
      %447 = vmatpush1.bf16.msra.mxu0 0
      %448 = vmatprep.subr.bf16.mxu0 0
      %449 = vmatpush1.bf16.msra.mxu0 0
      %450 = vmatprep.subr.bf16.mxu0 0
      %451 = vmatpush1.bf16.msra.mxu0 0
      %452 = vmatprep.subr.bf16.mxu0 0
      %453 = vmatpush1.bf16.msra.mxu0 0
      %454 = vmatprep.subr.bf16.mxu0 0
      %455 = vmatpush1.bf16.msra.mxu0 0
      %456 = vmatprep.subr.bf16.mxu0 0
      %457 = vmatpush1.bf16.msra.mxu0 0
      %458 = vmatprep.subr.bf16.mxu0 0
      %459 = vmatpush1.bf16.msra.mxu0 0
      %460 = vmatprep.mubr.bf16.mxu0 0
      %461 = vmatmul.mubr.bf16.gmra.mrb[0].mxu0 %v401
      %v462 = vpop.f32.mrb[0].mxu0
      %v463 = vadd.f32 0.0, %v462
      %v464 = vpop.f32.mrb[0].mxu0
      %v465 = vpop.f32.mrb[0].mxu0
      %v466 = vadd.f32 0.0, %v465
      %v467 = vpop.f32.mrb[0].mxu0
      %468 = vmatprep.mubr.bf16.mxu0 0
      %469 = vmatmul.mubr.bf16.gmra.mrb[0].mxu0 %v404
      %v470 = vpop.f32.mrb[0].mxu0
      %v471 = vadd.f32 0.0, %v470
      %v472 = vpop.f32.mrb[0].mxu0
      %v473 = vpop.f32.mrb[0].mxu0
      %v474 = vadd.f32 0.0, %v473
      %v475 = vpop.f32.mrb[0].mxu0
      %476 = vmatprep.mubr.bf16.mxu0 0
      %477 = vmatmul.mubr.bf16.gmra.mrb[0].mxu0 %v407
      %v478 = vpop.f32.mrb[0].mxu0
      %v479 = vadd.f32 0.0, %v478
      %v480 = vpop.f32.mrb[0].mxu0
      %v481 = vpop.f32.mrb[0].mxu0
      %v482 = vadd.f32 0.0, %v481
      %v483 = vpop.f32.mrb[0].mxu0
      %484 = vmatprep.mubr.bf16.mxu0 0
      %485 = vmatmul.mubr.bf16.gmra.mrb[0].mxu0 %v410
      %v486 = vpop.f32.mrb[0].mxu0
      %v487 = vadd.f32 0.0, %v486
      %v488 = vpop.f32.mrb[0].mxu0
      %v489 = vpop.f32.mrb[0].mxu0
      %v490 = vadd.f32 0.0, %v489
      %v491 = vpop.f32.mrb[0].mxu0
      %492 = vmatprep.mubr.bf16.mxu0 0
      %493 = vmatmul.mubr.bf16.gmra.mrb[0].mxu0 %v413
      %v494 = vpop.f32.mrb[0].mxu0
      %v495 = vadd.f32 0.0, %v494
      %v496 = vpop.f32.mrb[0].mxu0
      %v497 = vpop.f32.mrb[0].mxu0
      %v498 = vadd.f32 0.0, %v497
      %v499 = vpop.f32.mrb[0].mxu0
      %500 = vmatprep.mubr.bf16.mxu0 0
      %501 = vmatmul.mubr.bf16.gmra.mrb[0].mxu0 %v416
      %v502 = vpop.f32.mrb[0].mxu0
      %v503 = vadd.f32 0.0, %v502
      %v504 = vpop.f32.mrb[0].mxu0
      %v505 = vpop.f32.mrb[0].mxu0
      %v506 = vadd.f32 0.0, %v505
      %v507 = vpop.f32.mrb[0].mxu0
      %508 = vmatprep.mubr.bf16.mxu0 0
      %509 = vmatmul.mubr.bf16.gmra.mrb[0].mxu0 %v419
      %v510 = vpop.f32.mrb[0].mxu0
      %v511 = vadd.f32 0.0, %v510
      %v512 = vpop.f32.mrb[0].mxu0
      %v513 = vpop.f32.mrb[0].mxu0
      %v514 = vadd.f32 0.0, %v513
      %v515 = vpop.f32.mrb[0].mxu0
      %516 = vmatprep.mubr.bf16.mxu0 0
      %517 = vmatmul.mubr.bf16.gmra.mrb[0].mxu0 %v422
      %v518 = vpop.f32.mrb[0].mxu0
      %v519 = vadd.f32 0.0, %v518
      %v520 = vpop.f32.mrb[0].mxu0
      %v521 = vpop.f32.mrb[0].mxu0
      %v522 = vadd.f32 0.0, %v521
      %v523 = vpop.f32.mrb[0].mxu0
      %524 = vdwg.mxu0
      %v525 = vmul.f32 %v463, 0.5
      %v526 = vmul.f32 %v466, 0.5
      %v527 = vmul.f32 %v471, 0.5
      %v528 = vmul.f32 %v474, 0.5
      %v529 = vmul.f32 %v479, 0.5
      %v530 = vmul.f32 %v482, 0.5
      %v531 = vmul.f32 %v487, 0.5
      %v532 = vmul.f32 %v490, 0.5
      %v533 = vmul.f32 %v495, 0.5
      %v534 = vmul.f32 %v498, 0.5
      %v535 = vmul.f32 %v503, 0.5
      %v536 = vmul.f32 %v506, 0.5
      %v537 = vmul.f32 %v511, 0.5
      %v538 = vmul.f32 %v514, 0.5
      %v539 = vmul.f32 %v519, 0.5
      %v540 = vmul.f32 %v522, 0.5
      %v541 = vtanh.pop %v525
      %v542 = vtanh.pop %v526
      %v543 = vtanh.pop %v527
      %v544 = vtanh.pop %v528
      %v545 = vtanh.pop %v529
      %v546 = vtanh.pop %v530
      %v547 = vtanh.pop %v531
      %v548 = vtanh.pop %v532
      %v549 = vtanh.pop %v533
      %v550 = vtanh.pop %v534
      %v551 = vtanh.pop %v535
      %v552 = vtanh.pop %v536
      %v553 = vtanh.pop %v537
      %v554 = vtanh.pop %v538
      %v555 = vtanh.pop %v539
      %v556 = vtanh.pop %v540
      %v557 = vmul.f32 %v541, 0.5
      %v558 = vmul.f32 %v542, 0.5
      %v559 = vmul.f32 %v543, 0.5
      %v560 = vmul.f32 %v544, 0.5
      %v561 = vmul.f32 %v545, 0.5
      %v562 = vmul.f32 %v546, 0.5
      %v563 = vmul.f32 %v547, 0.5
      %v564 = vmul.f32 %v548, 0.5
      %v565 = vmul.f32 %v549, 0.5
      %v566 = vmul.f32 %v550, 0.5
      %v567 = vmul.f32 %v551, 0.5
      %v568 = vmul.f32 %v552, 0.5
      %v569 = vmul.f32 %v553, 0.5
      %v570 = vmul.f32 %v554, 0.5
      %v571 = vmul.f32 %v555, 0.5
      %v572 = vmul.f32 %v556, 0.5
      %v573 = vadd.f32 %v557, 0.5
      %v574 = vadd.f32 %v558, 0.5
      %v575 = vadd.f32 %v559, 0.5
      %v576 = vadd.f32 %v560, 0.5
      %v577 = vadd.f32 %v561, 0.5
      %v578 = vadd.f32 %v562, 0.5
      %v579 = vadd.f32 %v563, 0.5
      %v580 = vadd.f32 %v564, 0.5
      %v581 = vadd.f32 %v565, 0.5
      %v582 = vadd.f32 %v566, 0.5
      %v583 = vadd.f32 %v567, 0.5
      %v584 = vadd.f32 %v568, 0.5
      %v585 = vadd.f32 %v569, 0.5
      %v586 = vadd.f32 %v570, 0.5
      %v587 = vadd.f32 %v571, 0.5
      %v588 = vadd.f32 %v572, 0.5
      %v589 = vmul.f32 %v463, %v573
      %v590 = vmul.f32 %v466, %v574
      %v591 = vmul.f32 %v471, %v575
      %v592 = vmul.f32 %v474, %v576
      %v593 = vmul.f32 %v479, %v577
      %v594 = vmul.f32 %v482, %v578
      %v595 = vmul.f32 %v487, %v579
      %v596 = vmul.f32 %v490, %v580
      %v597 = vmul.f32 %v495, %v581
      %v598 = vmul.f32 %v498, %v582
      %v599 = vmul.f32 %v503, %v583
      %v600 = vmul.f32 %v506, %v584
      %v601 = vmul.f32 %v511, %v585
      %v602 = vmul.f32 %v514, %v586
      %v603 = vmul.f32 %v519, %v587
      %v604 = vmul.f32 %v522, %v588
      %v605 = vld [vmem:[%s330] sm:$0x1]
      %v606 = vld [vmem:[%s326] sm:$0xff]
      %v607 = vld [vmem:[%s326 + $0x8] sm:$0xff]
      %v608 = vld [vmem:[%s326 + $0x10] sm:$0xff]
      %v609 = vld [vmem:[%s326 + $0x18] sm:$0xff]
      %v610 = vld [vmem:[%s326 + $0x20] sm:$0xff]
      %v611 = vld [vmem:[%s326 + $0x28] sm:$0xff]
      %v612 = vld [vmem:[%s326 + $0x30] sm:$0xff]
      %v613 = vld [vmem:[%s326 + $0x38] sm:$0xff]
      %v614 = vld [vmem:[%s326 + $0x40] sm:$0xff]
      %v615 = vld [vmem:[%s326 + $0x48] sm:$0xff]
      %v616 = vld [vmem:[%s326 + $0x50] sm:$0xff]
      %v617 = vld [vmem:[%s326 + $0x58] sm:$0xff]
      %v618 = vld [vmem:[%s326 + $0x60] sm:$0xff]
      %v619 = vld [vmem:[%s326 + $0x68] sm:$0xff]
      %v620 = vld [vmem:[%s326 + $0x70] sm:$0xff]
      %v621 = vld [vmem:[%s326 + $0x78] sm:$0xff]
      %v623 = vlaneseq
      %v624 = vshrl.u32 %v623, 7
      %v625 = vsub.s32 0, %v624
      %v626 = vrot.slane %v605, %v625
      %629 = vset.pattern.permute.xlu0 0
      %630 = vperm.xlu0 %629, %v606
      %v631 = vpop.permute.xlu0 %630
      %634 = vset.pattern.permute.xlu0 0
      %635 = vperm.xlu0 %634, %v607
      %v636 = vpop.permute.xlu0 %635
      %639 = vset.pattern.permute.xlu0 0
      %640 = vperm.xlu0 %639, %v608
      %v641 = vpop.permute.xlu0 %640
      %644 = vset.pattern.permute.xlu0 0
      %645 = vperm.xlu0 %644, %v609
      %v646 = vpop.permute.xlu0 %645
      %649 = vset.pattern.permute.xlu0 0
      %650 = vperm.xlu0 %649, %v610
      %v651 = vpop.permute.xlu0 %650
      %654 = vset.pattern.permute.xlu0 0
      %655 = vperm.xlu0 %654, %v611
      %v656 = vpop.permute.xlu0 %655
      %659 = vset.pattern.permute.xlu0 0
      %660 = vperm.xlu0 %659, %v612
      %v661 = vpop.permute.xlu0 %660
      %664 = vset.pattern.permute.xlu0 0
      %665 = vperm.xlu0 %664, %v613
      %v666 = vpop.permute.xlu0 %665
      %669 = vset.pattern.permute.xlu0 0
      %670 = vperm.xlu0 %669, %v614
      %v671 = vpop.permute.xlu0 %670
      %674 = vset.pattern.permute.xlu0 0
      %675 = vperm.xlu0 %674, %v615
      %v676 = vpop.permute.xlu0 %675
      %679 = vset.pattern.permute.xlu0 0
      %680 = vperm.xlu0 %679, %v616
      %v681 = vpop.permute.xlu0 %680
      %684 = vset.pattern.permute.xlu0 0
      %685 = vperm.xlu0 %684, %v617
      %v686 = vpop.permute.xlu0 %685
      %689 = vset.pattern.permute.xlu0 0
      %690 = vperm.xlu0 %689, %v618
      %v691 = vpop.permute.xlu0 %690
      %694 = vset.pattern.permute.xlu0 0
      %695 = vperm.xlu0 %694, %v619
      %v696 = vpop.permute.xlu0 %695
      %699 = vset.pattern.permute.xlu0 0
      %700 = vperm.xlu0 %699, %v620
      %v701 = vpop.permute.xlu0 %700
      %704 = vset.pattern.permute.xlu0 0
      %705 = vperm.xlu0 %704, %v621
      %v706 = vpop.permute.xlu0 %705
      %v708 = vadd.f32 %v626, %v631
      %v709 = vadd.f32 %v626, %v636
      %v710 = vadd.f32 %v626, %v641
      %v711 = vadd.f32 %v626, %v646
      %v712 = vadd.f32 %v626, %v651
      %v713 = vadd.f32 %v626, %v656
      %v714 = vadd.f32 %v626, %v661
      %v715 = vadd.f32 %v626, %v666
      %v716 = vadd.f32 %v626, %v671
      %v717 = vadd.f32 %v626, %v676
      %v718 = vadd.f32 %v626, %v681
      %v719 = vadd.f32 %v626, %v686
      %v720 = vadd.f32 %v626, %v691
      %v721 = vadd.f32 %v626, %v696
      %v722 = vadd.f32 %v626, %v701
      %v723 = vadd.f32 %v626, %v706
      %v724 = vmul.f32 %v589, %v708
      %v725 = vmul.f32 %v590, %v709
      %v726 = vmul.f32 %v591, %v710
      %v727 = vmul.f32 %v592, %v711
      %v728 = vmul.f32 %v593, %v712
      %v729 = vmul.f32 %v594, %v713
      %v730 = vmul.f32 %v595, %v714
      %v731 = vmul.f32 %v596, %v715
      %v732 = vmul.f32 %v597, %v716
      %v733 = vmul.f32 %v598, %v717
      %v734 = vmul.f32 %v599, %v718
      %v735 = vmul.f32 %v600, %v719
      %v736 = vmul.f32 %v601, %v720
      %v737 = vmul.f32 %v602, %v721
      %v738 = vmul.f32 %v603, %v722
      %v739 = vmul.f32 %v604, %v723
      %v740 = vpack.c.bf16 %v725, %v724
      %v741 = vpack.c.bf16 %v727, %v726
      %v742 = vpack.c.bf16 %v729, %v728
      %v743 = vpack.c.bf16 %v731, %v730
      %v744 = vpack.c.bf16 %v733, %v732
      %v745 = vpack.c.bf16 %v735, %v734
      %v746 = vpack.c.bf16 %v737, %v736
      %v747 = vpack.c.bf16 %v739, %v738
      %v748 = vpack.c.bf16 %v590, %v589
      %v749 = vpack.c.bf16 %v592, %v591
      %v750 = vpack.c.bf16 %v594, %v593
      %v751 = vpack.c.bf16 %v596, %v595
      %v752 = vpack.c.bf16 %v598, %v597
      %v753 = vpack.c.bf16 %v600, %v599
      %v754 = vpack.c.bf16 %v602, %v601
      %v755 = vpack.c.bf16 %v604, %v603
      %v756 = vld [vmem:[%s4] sm:$0x3]
      %v757 = vld [vmem:[%s5] sm:$0x3]
      %766 = vrot.lane.b32.xlu0 %v748, 124
      %v767 = vpop.permute.xlu0 %766
      %768 = vrot.lane.b32.xlu0 %v749, 124
      %v769 = vpop.permute.xlu0 %768
      %770 = vrot.lane.b32.xlu0 %v750, 124
      %v771 = vpop.permute.xlu0 %770
      %772 = vrot.lane.b32.xlu0 %v751, 124
      %v773 = vpop.permute.xlu0 %772
      %774 = vrot.lane.b32.xlu0 %v752, 124
      %v775 = vpop.permute.xlu0 %774
      %776 = vrot.lane.b32.xlu0 %v753, 124
      %v777 = vpop.permute.xlu0 %776
      %778 = vrot.lane.b32.xlu0 %v754, 124
      %v779 = vpop.permute.xlu0 %778
      %780 = vrot.lane.b32.xlu0 %v755, 124
      %v781 = vpop.permute.xlu0 %780
      %vm782 = vcmask 31744
      %v784 = vsel %vm782, %v767, 0
      %v787 = vsel %vm782, %v769, 0
      %v790 = vsel %vm782, %v771, 0
      %v793 = vsel %vm782, %v773, 0
      %v796 = vsel %vm782, %v775, 0
      %v799 = vsel %vm782, %v777, 0
      %v802 = vsel %vm782, %v779, 0
      %v805 = vsel %vm782, %v781, 0
      %vm807 = vcmask 1041408
      %v809 = vsel %vm807, %v757, 0
      %811 = vmatprep.subr.bf16.mxu0 0
      %812 = vmatpush1.bf16.msra.mxu0 %v809
      %813 = vmatprep.subr.bf16.mxu0 0
      %814 = vmatpush1.bf16.msra.mxu0 0
      %815 = vmatprep.subr.bf16.mxu0 0
      %816 = vmatpush1.bf16.msra.mxu0 0
      %817 = vmatprep.subr.bf16.mxu0 0
      %818 = vmatpush1.bf16.msra.mxu0 0
      %819 = vmatprep.subr.bf16.mxu0 0
      %820 = vmatpush1.bf16.msra.mxu0 0
      %821 = vmatprep.subr.bf16.mxu0 0
      %822 = vmatpush1.bf16.msra.mxu0 0
      %823 = vmatprep.subr.bf16.mxu0 0
      %824 = vmatpush1.bf16.msra.mxu0 0
      %825 = vmatprep.subr.bf16.mxu0 0
      %826 = vmatpush1.bf16.msra.mxu0 0
      %827 = vmatprep.subr.bf16.mxu0 0
      %828 = vmatpush1.bf16.msra.mxu0 0
      %829 = vmatprep.subr.bf16.mxu0 0
      %830 = vmatpush1.bf16.msra.mxu0 0
      %831 = vmatprep.subr.bf16.mxu0 0
      %832 = vmatpush1.bf16.msra.mxu0 0
      %833 = vmatprep.subr.bf16.mxu0 0
      %834 = vmatpush1.bf16.msra.mxu0 0
      %835 = vmatprep.subr.bf16.mxu0 0
      %836 = vmatpush1.bf16.msra.mxu0 0
      %837 = vmatprep.subr.bf16.mxu0 0
      %838 = vmatpush1.bf16.msra.mxu0 0
      %839 = vmatprep.subr.bf16.mxu0 0
      %840 = vmatpush1.bf16.msra.mxu0 0
      %841 = vmatprep.subr.bf16.mxu0 0
      %842 = vmatpush1.bf16.msra.mxu0 0
      %843 = vmatprep.mubr.bf16.mxu0 0
      %844 = vmatmul.mubr.bf16.gmra.mrb[0].mxu0 %v784
      %v845 = vpop.f32.mrb[0].mxu0
      %v846 = vadd.f32 0.0, %v845
      %v847 = vpop.f32.mrb[0].mxu0
      %v848 = vpop.f32.mrb[0].mxu0
      %v849 = vadd.f32 0.0, %v848
      %v850 = vpop.f32.mrb[0].mxu0
      %851 = vmatprep.mubr.bf16.mxu0 0
      %852 = vmatmul.mubr.bf16.gmra.mrb[0].mxu0 %v787
      %v853 = vpop.f32.mrb[0].mxu0
      %v854 = vadd.f32 0.0, %v853
      %v855 = vpop.f32.mrb[0].mxu0
      %v856 = vpop.f32.mrb[0].mxu0
      %v857 = vadd.f32 0.0, %v856
      %v858 = vpop.f32.mrb[0].mxu0
      %859 = vmatprep.mubr.bf16.mxu0 0
      %860 = vmatmul.mubr.bf16.gmra.mrb[0].mxu0 %v790
      %v861 = vpop.f32.mrb[0].mxu0
      %v862 = vadd.f32 0.0, %v861
      %v863 = vpop.f32.mrb[0].mxu0
      %v864 = vpop.f32.mrb[0].mxu0
      %v865 = vadd.f32 0.0, %v864
      %v866 = vpop.f32.mrb[0].mxu0
      %867 = vmatprep.mubr.bf16.mxu0 0
      %868 = vmatmul.mubr.bf16.gmra.mrb[0].mxu0 %v793
      %v869 = vpop.f32.mrb[0].mxu0
      %v870 = vadd.f32 0.0, %v869
      %v871 = vpop.f32.mrb[0].mxu0
      %v872 = vpop.f32.mrb[0].mxu0
      %v873 = vadd.f32 0.0, %v872
      %v874 = vpop.f32.mrb[0].mxu0
      %875 = vmatprep.mubr.bf16.mxu0 0
      %876 = vmatmul.mubr.bf16.gmra.mrb[0].mxu0 %v796
      %v877 = vpop.f32.mrb[0].mxu0
      %v878 = vadd.f32 0.0, %v877
      %v879 = vpop.f32.mrb[0].mxu0
      %v880 = vpop.f32.mrb[0].mxu0
      %v881 = vadd.f32 0.0, %v880
      %v882 = vpop.f32.mrb[0].mxu0
      %883 = vmatprep.mubr.bf16.mxu0 0
      %884 = vmatmul.mubr.bf16.gmra.mrb[0].mxu0 %v799
      %v885 = vpop.f32.mrb[0].mxu0
      %v886 = vadd.f32 0.0, %v885
      %v887 = vpop.f32.mrb[0].mxu0
      %v888 = vpop.f32.mrb[0].mxu0
      %v889 = vadd.f32 0.0, %v888
      %v890 = vpop.f32.mrb[0].mxu0
      %891 = vmatprep.mubr.bf16.mxu0 0
      %892 = vmatmul.mubr.bf16.gmra.mrb[0].mxu0 %v802
      %v893 = vpop.f32.mrb[0].mxu0
      %v894 = vadd.f32 0.0, %v893
      %v895 = vpop.f32.mrb[0].mxu0
      %v896 = vpop.f32.mrb[0].mxu0
      %v897 = vadd.f32 0.0, %v896
      %v898 = vpop.f32.mrb[0].mxu0
      %899 = vmatprep.mubr.bf16.mxu0 0
      %900 = vmatmul.mubr.bf16.gmra.mrb[0].mxu0 %v805
      %v901 = vpop.f32.mrb[0].mxu0
      %v902 = vadd.f32 0.0, %v901
      %v903 = vpop.f32.mrb[0].mxu0
      %v904 = vpop.f32.mrb[0].mxu0
      %v905 = vadd.f32 0.0, %v904
      %v906 = vpop.f32.mrb[0].mxu0
      %907 = vdwg.mxu0
      %v909 = vsel %vm782, %v740, 0
      %v912 = vsel %vm782, %v741, 0
      %v915 = vsel %vm782, %v742, 0
      %v918 = vsel %vm782, %v743, 0
      %v921 = vsel %vm782, %v744, 0
      %v924 = vsel %vm782, %v745, 0
      %v927 = vsel %vm782, %v746, 0
      %v930 = vsel %vm782, %v747, 0
      %v933 = vsel %vm807, %v756, 0
      %935 = vmatprep.subr.bf16.mxu0 0
      %936 = vmatpush1.bf16.msra.mxu0 %v933
      %937 = vmatprep.subr.bf16.mxu0 0
      %938 = vmatpush1.bf16.msra.mxu0 0
      %939 = vmatprep.subr.bf16.mxu0 0
      %940 = vmatpush1.bf16.msra.mxu0 0
      %941 = vmatprep.subr.bf16.mxu0 0
      %942 = vmatpush1.bf16.msra.mxu0 0
      %943 = vmatprep.subr.bf16.mxu0 0
      %944 = vmatpush1.bf16.msra.mxu0 0
      %945 = vmatprep.subr.bf16.mxu0 0
      %946 = vmatpush1.bf16.msra.mxu0 0
      %947 = vmatprep.subr.bf16.mxu0 0
      %948 = vmatpush1.bf16.msra.mxu0 0
      %949 = vmatprep.subr.bf16.mxu0 0
      %950 = vmatpush1.bf16.msra.mxu0 0
      %951 = vmatprep.subr.bf16.mxu0 0
      %952 = vmatpush1.bf16.msra.mxu0 0
      %953 = vmatprep.subr.bf16.mxu0 0
      %954 = vmatpush1.bf16.msra.mxu0 0
      %955 = vmatprep.subr.bf16.mxu0 0
      %956 = vmatpush1.bf16.msra.mxu0 0
      %957 = vmatprep.subr.bf16.mxu0 0
      %958 = vmatpush1.bf16.msra.mxu0 0
      %959 = vmatprep.subr.bf16.mxu0 0
      %960 = vmatpush1.bf16.msra.mxu0 0
      %961 = vmatprep.subr.bf16.mxu0 0
      %962 = vmatpush1.bf16.msra.mxu0 0
      %963 = vmatprep.subr.bf16.mxu0 0
      %964 = vmatpush1.bf16.msra.mxu0 0
      %965 = vmatprep.subr.bf16.mxu0 0
      %966 = vmatpush1.bf16.msra.mxu0 0
      %967 = vmatprep.mubr.bf16.mxu0 0
      %968 = vmatmul.mubr.bf16.gmra.mrb[0].mxu0 %v909
      %v969 = vpop.f32.mrb[0].mxu0
      %v970 = vadd.f32 %v846, %v969
      %v971 = vpop.f32.mrb[0].mxu0
      %v972 = vpop.f32.mrb[0].mxu0
      %v973 = vadd.f32 %v849, %v972
      %v974 = vpop.f32.mrb[0].mxu0
      %975 = vmatprep.mubr.bf16.mxu0 0
      %976 = vmatmul.mubr.bf16.gmra.mrb[0].mxu0 %v912
      %v977 = vpop.f32.mrb[0].mxu0
      %v978 = vadd.f32 %v854, %v977
      %v979 = vpop.f32.mrb[0].mxu0
      %v980 = vpop.f32.mrb[0].mxu0
      %v981 = vadd.f32 %v857, %v980
      %v982 = vpop.f32.mrb[0].mxu0
      %983 = vmatprep.mubr.bf16.mxu0 0
      %984 = vmatmul.mubr.bf16.gmra.mrb[0].mxu0 %v915
      %v985 = vpop.f32.mrb[0].mxu0
      %v986 = vadd.f32 %v862, %v985
      %v987 = vpop.f32.mrb[0].mxu0
      %v988 = vpop.f32.mrb[0].mxu0
      %v989 = vadd.f32 %v865, %v988
      %v990 = vpop.f32.mrb[0].mxu0
      %991 = vmatprep.mubr.bf16.mxu0 0
      %992 = vmatmul.mubr.bf16.gmra.mrb[0].mxu0 %v918
      %v993 = vpop.f32.mrb[0].mxu0
      %v994 = vadd.f32 %v870, %v993
      %v995 = vpop.f32.mrb[0].mxu0
      %v996 = vpop.f32.mrb[0].mxu0
      %v997 = vadd.f32 %v873, %v996
      %v998 = vpop.f32.mrb[0].mxu0
      %999 = vmatprep.mubr.bf16.mxu0 0
      %1000 = vmatmul.mubr.bf16.gmra.mrb[0].mxu0 %v921
      %v1001 = vpop.f32.mrb[0].mxu0
      %v1002 = vadd.f32 %v878, %v1001
      %v1003 = vpop.f32.mrb[0].mxu0
      %v1004 = vpop.f32.mrb[0].mxu0
      %v1005 = vadd.f32 %v881, %v1004
      %v1006 = vpop.f32.mrb[0].mxu0
      %1007 = vmatprep.mubr.bf16.mxu0 0
      %1008 = vmatmul.mubr.bf16.gmra.mrb[0].mxu0 %v924
      %v1009 = vpop.f32.mrb[0].mxu0
      %v1010 = vadd.f32 %v886, %v1009
      %v1011 = vpop.f32.mrb[0].mxu0
      %v1012 = vpop.f32.mrb[0].mxu0
      %v1013 = vadd.f32 %v889, %v1012
      %v1014 = vpop.f32.mrb[0].mxu0
      %1015 = vmatprep.mubr.bf16.mxu0 0
      %1016 = vmatmul.mubr.bf16.gmra.mrb[0].mxu0 %v927
      %v1017 = vpop.f32.mrb[0].mxu0
      %v1018 = vadd.f32 %v894, %v1017
      %v1019 = vpop.f32.mrb[0].mxu0
      %v1020 = vpop.f32.mrb[0].mxu0
      %v1021 = vadd.f32 %v897, %v1020
      %v1022 = vpop.f32.mrb[0].mxu0
      %1023 = vmatprep.mubr.bf16.mxu0 0
      %1024 = vmatmul.mubr.bf16.gmra.mrb[0].mxu0 %v930
      %v1025 = vpop.f32.mrb[0].mxu0
      %v1026 = vadd.f32 %v902, %v1025
      %v1027 = vpop.f32.mrb[0].mxu0
      %v1028 = vpop.f32.mrb[0].mxu0
      %v1029 = vadd.f32 %v905, %v1028
      %v1030 = vpop.f32.mrb[0].mxu0
      %1031 = vdwg.mxu0
      %v1032 = vmul.f32 %v970, 0.5
      %v1033 = vmul.f32 %v973, 0.5
      %v1034 = vmul.f32 %v978, 0.5
      %v1035 = vmul.f32 %v981, 0.5
      %v1036 = vmul.f32 %v986, 0.5
      %v1037 = vmul.f32 %v989, 0.5
      %v1038 = vmul.f32 %v994, 0.5
      %v1039 = vmul.f32 %v997, 0.5
      %v1040 = vmul.f32 %v1002, 0.5
      %v1041 = vmul.f32 %v1005, 0.5
      %v1042 = vmul.f32 %v1010, 0.5
      %v1043 = vmul.f32 %v1013, 0.5
      %v1044 = vmul.f32 %v1018, 0.5
      %v1045 = vmul.f32 %v1021, 0.5
      %v1046 = vmul.f32 %v1026, 0.5
      %v1047 = vmul.f32 %v1029, 0.5
      %v1048 = vtanh.pop %v1032
      %v1049 = vtanh.pop %v1033
      %v1050 = vtanh.pop %v1034
      %v1051 = vtanh.pop %v1035
      %v1052 = vtanh.pop %v1036
      %v1053 = vtanh.pop %v1037
      %v1054 = vtanh.pop %v1038
      %v1055 = vtanh.pop %v1039
      %v1056 = vtanh.pop %v1040
      %v1057 = vtanh.pop %v1041
      %v1058 = vtanh.pop %v1042
      %v1059 = vtanh.pop %v1043
      %v1060 = vtanh.pop %v1044
      %v1061 = vtanh.pop %v1045
      %v1062 = vtanh.pop %v1046
      %v1063 = vtanh.pop %v1047
      %v1064 = vmul.f32 %v1048, 0.5
      %v1065 = vmul.f32 %v1049, 0.5
      %v1066 = vmul.f32 %v1050, 0.5
      %v1067 = vmul.f32 %v1051, 0.5
      %v1068 = vmul.f32 %v1052, 0.5
      %v1069 = vmul.f32 %v1053, 0.5
      %v1070 = vmul.f32 %v1054, 0.5
      %v1071 = vmul.f32 %v1055, 0.5
      %v1072 = vmul.f32 %v1056, 0.5
      %v1073 = vmul.f32 %v1057, 0.5
      %v1074 = vmul.f32 %v1058, 0.5
      %v1075 = vmul.f32 %v1059, 0.5
      %v1076 = vmul.f32 %v1060, 0.5
      %v1077 = vmul.f32 %v1061, 0.5
      %v1078 = vmul.f32 %v1062, 0.5
      %v1079 = vmul.f32 %v1063, 0.5
      %v1080 = vadd.f32 %v1064, 0.5
      %v1081 = vadd.f32 %v1065, 0.5
      %v1082 = vadd.f32 %v1066, 0.5
      %v1083 = vadd.f32 %v1067, 0.5
      %v1084 = vadd.f32 %v1068, 0.5
      %v1085 = vadd.f32 %v1069, 0.5
      %v1086 = vadd.f32 %v1070, 0.5
      %v1087 = vadd.f32 %v1071, 0.5
      %v1088 = vadd.f32 %v1072, 0.5
      %v1089 = vadd.f32 %v1073, 0.5
      %v1090 = vadd.f32 %v1074, 0.5
      %v1091 = vadd.f32 %v1075, 0.5
      %v1092 = vadd.f32 %v1076, 0.5
      %v1093 = vadd.f32 %v1077, 0.5
      %v1094 = vadd.f32 %v1078, 0.5
      %v1095 = vadd.f32 %v1079, 0.5
      %v1096 = vmul.f32 %v970, %v1080
      %v1097 = vmul.f32 %v973, %v1081
      %v1098 = vmul.f32 %v978, %v1082
      %v1099 = vmul.f32 %v981, %v1083
      %v1100 = vmul.f32 %v986, %v1084
      %v1101 = vmul.f32 %v989, %v1085
      %v1102 = vmul.f32 %v994, %v1086
      %v1103 = vmul.f32 %v997, %v1087
      %v1104 = vmul.f32 %v1002, %v1088
      %v1105 = vmul.f32 %v1005, %v1089
      %v1106 = vmul.f32 %v1010, %v1090
      %v1107 = vmul.f32 %v1013, %v1091
      %v1108 = vmul.f32 %v1018, %v1092
      %v1109 = vmul.f32 %v1021, %v1093
      %v1110 = vmul.f32 %v1026, %v1094
      %v1111 = vmul.f32 %v1029, %v1095
      %1112 = vst.msk [vmem:[%s339] sm:$0xff] %vm399, %v1096
      %1113 = vst.msk [vmem:[%s339 + $0x8] sm:$0xff] %vm399, %v1097
      %1114 = vst.msk [vmem:[%s339 + $0x10] sm:$0xff] %vm399, %v1098
      %1115 = vst.msk [vmem:[%s339 + $0x18] sm:$0xff] %vm399, %v1099
      %1116 = vst.msk [vmem:[%s339 + $0x20] sm:$0xff] %vm399, %v1100
      %1117 = vst.msk [vmem:[%s339 + $0x28] sm:$0xff] %vm399, %v1101
      %1118 = vst.msk [vmem:[%s339 + $0x30] sm:$0xff] %vm399, %v1102
      %1119 = vst.msk [vmem:[%s339 + $0x38] sm:$0xff] %vm399, %v1103
      %1120 = vst.msk [vmem:[%s339 + $0x40] sm:$0xff] %vm399, %v1104
      %1121 = vst.msk [vmem:[%s339 + $0x48] sm:$0xff] %vm399, %v1105
      %1122 = vst.msk [vmem:[%s339 + $0x50] sm:$0xff] %vm399, %v1106
      %1123 = vst.msk [vmem:[%s339 + $0x58] sm:$0xff] %vm399, %v1107
      %1124 = vst.msk [vmem:[%s339 + $0x60] sm:$0xff] %vm399, %v1108
      %1125 = vst.msk [vmem:[%s339 + $0x68] sm:$0xff] %vm399, %v1109
      %1126 = vst.msk [vmem:[%s339 + $0x70] sm:$0xff] %vm399, %v1110
      %1127 = vst.msk [vmem:[%s339 + $0x78] sm:$0xff] %vm399, %v1111
      %s1128 = smul.u32 16, %s22
      %p1129 = scmp.lt.s32.totalorder %s21, 1
      %s1130 = scalar_select %p1129, %s21, 1
      %p1131 = scmp.lt.s32.totalorder %s1128, 31
      %s1132 = scalar_select %p1131, %s1128, 31
      %s1133 = smul.addr %s1130, 32
      %s1134 = sadd.s32 %s1132, %s1133
      %s1135 = smul.addr %s1134, 8
      %s1136 = scalar_lea.vmem %s6, %s1135
      // Predicated region
      $region45: #{c3_psa_p_forward.3} parent=43 // pred_check
        %p1137 = pneg %p194
      $region46: #{c3_psa_p_forward.3} parent=43 // pred_check_branch
        %1139 = sbr.rel (%p1137) target = $region48
      $region47: #{c3_psa_p_forward.3} parent=43 // pred_region
        %s1140 = smul.u32 16, %s22
      $region48: #{c3_psa_p_forward.3} parent=43 // pred_fallthru
        _
    $region44: #{c3_psa_p_forward.3} parent=5 // pred_fallthru
      _
    %p1141 = scmp.le.s32.totalorder 2, %s12
    // Predicated region
    $region49: #{c3_psa_p_forward.3} parent=5 // pred_check
      %p1142 = pneg %p1141
    $region50: #{c3_psa_p_forward.3} parent=5 // pred_check_branch
      %1144 = sbr.rel (%p1142) target = $region52
    $region51: #{c3_psa_p_forward.3} parent=5 // pred_region
      %s1145 = ssub.s32 %s12, 2
      // Predicated region
      $region53: #{c3_psa_p_forward.3} parent=51 // pred_check
        %p1146 = pneg %p200
      $region54: #{c3_psa_p_forward.3} parent=51 // pred_check_branch
        %1148 = sbr.rel (%p1146) target = $region56
      $region55: #{c3_psa_p_forward.3} parent=51 // pred_region
        %s1149 = smul.u32 16, %s24
        %p1150 = scmp.lt.s32.totalorder %s23, 1
        %s1151 = scalar_select %p1150, %s23, 1
        %p1152 = scmp.lt.s32.totalorder %s1149, 31
        %s1153 = scalar_select %p1152, %s1149, 31
        %s1154 = smul.addr %s1151, 32
        %s1155 = sadd.s32 %s1153, %s1154
        %s1156 = smul.addr %s1155, 8
        %s1157 = scalar_lea.vmem %s6, %s1156
      $region56: #{c3_psa_p_forward.3} parent=51 // pred_fallthru
        _
    $region52: #{c3_psa_p_forward.3} parent=5 // pred_fallthru
      _
  $region6: #{c3_psa_p_forward.3} parent=0 // loop_footer
    %s16 = sadd.s32 1, %s12
  $region7: #{c3_psa_p_forward.3} parent=0 // loop_footer_branch
    %11 = sbr.rel target = $region3
  $region8: #{c3_psa_p_forward.3} parent=0 // loop_exit
    _

// kernel: c3_psa_p_forward.2
$region0: #{c3_psa_p_forward.2}
  #allocation0 [shape = 'u32[]', space=smem, size = 0x4, offset = 0x4, fixed_abs, tag = 'smem constant byte address 0x4 - core index']
  #allocation1 [shape = 'u32[144,128]{1,0:T(1,128)}', space=vmem, size = 0x12000, scoped, tag = 'internal scratch']
  #allocation2 [shape = 'f32[1,1]{1,0:T(1,128)}', space=vmem, size = 0x200, scoped, tag = 'scratch operand']
  #allocation3 [shape = 'f32[1,1]{1,0:T(1,128)}', space=vmem, size = 0x200, scoped, tag = 'scratch operand']
  #allocation4 [shape = 'f32[1,2]{1,0:T(1,128)}', space=vmem, size = 0x200, scoped, tag = 'scratch operand']
  #allocation5 [shape = 'f32[1,2]{1,0:T(1,128)}', space=vmem, size = 0x200, scoped, tag = 'scratch operand']
  %s0 = inlined_call_operand.vmem [shape: bf16[2,256,8], index: 0, kind: input, shape index: {}]
  %s1 = inlined_call_operand.vmem [shape: bf16[8,4], index: 1, kind: input, shape index: {}]
  %s2 = inlined_call_operand.vmem [shape: bf16[4,6], index: 2, kind: input, shape index: {}]
  %s3 = inlined_call_operand.vmem [shape: f32[4,1], index: 3, kind: input, shape index: {}]
  %s4 = inlined_call_operand.vmem [shape: f32[2,2,1,1], index: 4, kind: output, shape index: {0}]
  %s5 = inlined_call_operand.vmem [shape: f32[2,2,1,1], index: 5, kind: output, shape index: {1}]
  %s6 = inlined_call_operand.vmem [shape: f32[2,2,1,2], index: 6, kind: output, shape index: {2}]
  %s7 = inlined_call_operand.vmem [shape: f32[2,2,1,2], index: 7, kind: output, shape index: {3}]
  %s8 = inlined_call_operand.vmem [shape: bf16[2,256,2], index: 8, kind: output, shape index: {4}]
  %9 = xla_tuple %s4, %s5, %s6, %s7, %s8
  %s10 = sld [smem:[#allocation0]]
  $region89: #{c3_psa_p_forward.2} parent=0
    _
  %s12 = ssub.s32 1, %s10
  %s13 = scalar_select 0, %s12, %s10
  loop: start=0, step=1, limit=6
  $region2: #{c3_psa_p_forward.2} parent=0 // loop_pre_header
    _
  $region3: #{c3_psa_p_forward.2} parent=0 // loop_header
    %s15 = sphi 0, %s19
    %p16 = scmp.ge.s32.totalorder %s15, 6
    %s22 = sphi 0, %s41
    %s23 = sphi 0, %s37
    %s24 = sphi 0, %s33
    %s25 = sphi 0, %s22
    %s26 = sphi 0, %s23
    %s27 = sphi 0, %s24
    %s28 = sphi 0, %s25
    %s29 = sphi 0, %s26
    %s30 = sphi 0, %s27
    %s48 = sphi 0, %s50
    %s51 = sphi 0, %s48
    %s52 = sphi 0, %s51
    %s68 = sphi 0, %s52
    %s72 = sphi 0, %s72
    %s74 = sphi 0, %s72
    %s75 = sphi 0, %s74
    %s89 = sphi 0, %s75
    %s93 = sphi 0, %s93
    %s95 = sphi 0, %s93
    %s96 = sphi 0, %s95
    %s110 = sphi 0, %s96
    %s114 = sphi 0, %s114
    %s116 = sphi 0, %s114
    %s117 = sphi 0, %s116
    %s131 = sphi 0, %s117
    %s139 = sphi 0, %s141
    %s142 = sphi 0, %s139
    %s143 = sphi 0, %s142
    %s159 = sphi 0, %s143
    %s167 = sphi 0, %s169
    %s170 = sphi 0, %s167
    %s171 = sphi 0, %s170
    %s187 = sphi 0, %s171
    %s195 = sphi 0, %s197
    %s198 = sphi 0, %s195
    %s199 = sphi 0, %s198
    %s215 = sphi 0, %s199
    %s223 = sphi 0, %s225
    %s226 = sphi 0, %s223
    %s227 = sphi 0, %s226
    %s243 = sphi 0, %s227
    %s253 = sphi 0, %s255
    %s256 = sphi 0, %s253
    %s257 = sphi 0, %s256
    %s273 = sphi 0, %s257
  $region4: #{c3_psa_p_forward.2} parent=0 // loop_header_branch
    %18 = sbr.rel (%p16) target = $region8
  $region5: #{c3_psa_p_forward.2} parent=0 // loop_body
    %s20 = ssub.s32 %s15, 1
    %s21 = ssub.s32 %s15, 2
    %s31 = sadd.s32 1, %s24
    %p32 = scmp.ge.s32.totalorder %s31, 1
    %s33 = scalar_select %p32, 0, %s31
    %s34 = sadd.s32 1, %s23
    %s35 = scalar_select %p32, %s34, %s23
    %p36 = scmp.ge.s32.totalorder %s35, 2
    %s37 = scalar_select %p36, 0, %s35
    %s38 = sadd.s32 1, %s22
    %s39 = scalar_select %p36, %s38, %s22
    %p40 = scmp.ge.s32.totalorder %s39, 2
    %s41 = scalar_select %p40, 0, %s39
    %s42 = sadd.s32 %s23, %s24
    %s43 = sadd.s32 %s37, %s33
    %s44 = ssub.s32 %s22, %s41
    %s45 = ssub.s32 %s42, %s43
    %s46 = sor.u32 %s44, %s45
    %p47 = scmp.eq.s32.totalorder %s46, 0
    %s49 = sadd.s32 %s48, 1
    %s50 = scalar_select %p47, %s48, %s49
    %p53 = pneg %p47
    %p54 = scmp.eq.s32.totalorder %s15, 3
    %p55 = por %p53, %p54
    %p56 = scmp.ne.s32.totalorder %s48, %s51
    %p57 = scmp.eq.s32.totalorder %s15, 0
    %p58 = por %p56, %p57
    %p59 = scmp.ne.s32.totalorder %s48, %s51
    %p60 = scmp.eq.s32.totalorder %s20, 3
    %p61 = por %p59, %p60
    %p62 = scmp.ne.s32.totalorder %s51, %s52
    %p63 = scmp.eq.s32.totalorder %s20, 0
    %p64 = por %p62, %p63
    %p65 = scmp.ne.s32.totalorder %s51, %s52
    %p66 = scmp.eq.s32.totalorder %s21, 3
    %p67 = por %p65, %p66
    %p69 = scmp.ne.s32.totalorder %s52, %s68
    %p70 = scmp.eq.s32.totalorder %s21, 0
    %p71 = por %p69, %p70
    %s73 = sadd.s32 %s72, 1
    %p76 = scmp.eq.s32.totalorder %s15, 3
    %p77 = scmp.ne.s32.totalorder %s72, %s74
    %p78 = scmp.eq.s32.totalorder %s15, 0
    %p79 = por %p77, %p78
    %p80 = scmp.ne.s32.totalorder %s72, %s74
    %p81 = scmp.eq.s32.totalorder %s20, 3
    %p82 = por %p80, %p81
    %p83 = scmp.ne.s32.totalorder %s74, %s75
    %p84 = scmp.eq.s32.totalorder %s20, 0
    %p85 = por %p83, %p84
    %p86 = scmp.ne.s32.totalorder %s74, %s75
    %p87 = scmp.eq.s32.totalorder %s21, 3
    %p88 = por %p86, %p87
    %p90 = scmp.ne.s32.totalorder %s75, %s89
    %p91 = scmp.eq.s32.totalorder %s21, 0
    %p92 = por %p90, %p91
    %s94 = sadd.s32 %s93, 1
    %p97 = scmp.eq.s32.totalorder %s15, 3
    %p98 = scmp.ne.s32.totalorder %s93, %s95
    %p99 = scmp.eq.s32.totalorder %s15, 0
    %p100 = por %p98, %p99
    %p101 = scmp.ne.s32.totalorder %s93, %s95
    %p102 = scmp.eq.s32.totalorder %s20, 3
    %p103 = por %p101, %p102
    %p104 = scmp.ne.s32.totalorder %s95, %s96
    %p105 = scmp.eq.s32.totalorder %s20, 0
    %p106 = por %p104, %p105
    %p107 = scmp.ne.s32.totalorder %s95, %s96
    %p108 = scmp.eq.s32.totalorder %s21, 3
    %p109 = por %p107, %p108
    %p111 = scmp.ne.s32.totalorder %s96, %s110
    %p112 = scmp.eq.s32.totalorder %s21, 0
    %p113 = por %p111, %p112
    %s115 = sadd.s32 %s114, 1
    %p118 = scmp.eq.s32.totalorder %s15, 3
    %p119 = scmp.ne.s32.totalorder %s114, %s116
    %p120 = scmp.eq.s32.totalorder %s15, 0
    %p121 = por %p119, %p120
    %p122 = scmp.ne.s32.totalorder %s114, %s116
    %p123 = scmp.eq.s32.totalorder %s20, 3
    %p124 = por %p122, %p123
    %p125 = scmp.ne.s32.totalorder %s116, %s117
    %p126 = scmp.eq.s32.totalorder %s20, 0
    %p127 = por %p125, %p126
    %p128 = scmp.ne.s32.totalorder %s116, %s117
    %p129 = scmp.eq.s32.totalorder %s21, 3
    %p130 = por %p128, %p129
    %p132 = scmp.ne.s32.totalorder %s117, %s131
    %p133 = scmp.eq.s32.totalorder %s21, 0
    %p134 = por %p132, %p133
    %s135 = ssub.s32 %s22, %s41
    %s136 = ssub.s32 %s23, %s37
    %s137 = sor.u32 %s135, %s136
    %p138 = scmp.eq.s32.totalorder %s137, 0
    %s140 = sadd.s32 %s139, 1
    %s141 = scalar_select %p138, %s139, %s140
    %p144 = pneg %p138
    %p145 = scmp.eq.s32.totalorder %s15, 3
    %p146 = por %p144, %p145
    %p147 = scmp.ne.s32.totalorder %s139, %s142
    %p148 = scmp.eq.s32.totalorder %s15, 0
    %p149 = por %p147, %p148
    %p150 = scmp.ne.s32.totalorder %s139, %s142
    %p151 = scmp.eq.s32.totalorder %s20, 3
    %p152 = por %p150, %p151
    %p153 = scmp.ne.s32.totalorder %s142, %s143
    %p154 = scmp.eq.s32.totalorder %s20, 0
    %p155 = por %p153, %p154
    %p156 = scmp.ne.s32.totalorder %s142, %s143
    %p157 = scmp.eq.s32.totalorder %s21, 3
    %p158 = por %p156, %p157
    %p160 = scmp.ne.s32.totalorder %s143, %s159
    %p161 = scmp.eq.s32.totalorder %s21, 0
    %p162 = por %p160, %p161
    %s163 = ssub.s32 %s22, %s41
    %s164 = ssub.s32 %s23, %s37
    %s165 = sor.u32 %s163, %s164
    %p166 = scmp.eq.s32.totalorder %s165, 0
    %s168 = sadd.s32 %s167, 1
    %s169 = scalar_select %p166, %s167, %s168
    %p172 = pneg %p166
    %p173 = scmp.eq.s32.totalorder %s15, 3
    %p174 = por %p172, %p173
    %p175 = scmp.ne.s32.totalorder %s167, %s170
    %p176 = scmp.eq.s32.totalorder %s15, 0
    %p177 = por %p175, %p176
    %p178 = scmp.ne.s32.totalorder %s167, %s170
    %p179 = scmp.eq.s32.totalorder %s20, 3
    %p180 = por %p178, %p179
    %p181 = scmp.ne.s32.totalorder %s170, %s171
    %p182 = scmp.eq.s32.totalorder %s20, 0
    %p183 = por %p181, %p182
    %p184 = scmp.ne.s32.totalorder %s170, %s171
    %p185 = scmp.eq.s32.totalorder %s21, 3
    %p186 = por %p184, %p185
    %p188 = scmp.ne.s32.totalorder %s171, %s187
    %p189 = scmp.eq.s32.totalorder %s21, 0
    %p190 = por %p188, %p189
    %s191 = ssub.s32 %s22, %s41
    %s192 = ssub.s32 %s23, %s37
    %s193 = sor.u32 %s191, %s192
    %p194 = scmp.eq.s32.totalorder %s193, 0
    %s196 = sadd.s32 %s195, 1
    %s197 = scalar_select %p194, %s195, %s196
    %p200 = pneg %p194
    %p201 = scmp.eq.s32.totalorder %s15, 3
    %p202 = por %p200, %p201
    %p203 = scmp.ne.s32.totalorder %s195, %s198
    %p204 = scmp.eq.s32.totalorder %s15, 0
    %p205 = por %p203, %p204
    %p206 = scmp.ne.s32.totalorder %s195, %s198
    %p207 = scmp.eq.s32.totalorder %s20, 3
    %p208 = por %p206, %p207
    %p209 = scmp.ne.s32.totalorder %s198, %s199
    %p210 = scmp.eq.s32.totalorder %s20, 0
    %p211 = por %p209, %p210
    %p212 = scmp.ne.s32.totalorder %s198, %s199
    %p213 = scmp.eq.s32.totalorder %s21, 3
    %p214 = por %p212, %p213
    %p216 = scmp.ne.s32.totalorder %s199, %s215
    %p217 = scmp.eq.s32.totalorder %s21, 0
    %p218 = por %p216, %p217
    %s219 = ssub.s32 %s22, %s41
    %s220 = ssub.s32 %s23, %s37
    %s221 = sor.u32 %s219, %s220
    %p222 = scmp.eq.s32.totalorder %s221, 0
    %s224 = sadd.s32 %s223, 1
    %s225 = scalar_select %p222, %s223, %s224
    %p228 = pneg %p222
    %p229 = scmp.eq.s32.totalorder %s15, 3
    %p230 = por %p228, %p229
    %p231 = scmp.ne.s32.totalorder %s223, %s226
    %p232 = scmp.eq.s32.totalorder %s15, 0
    %p233 = por %p231, %p232
    %p234 = scmp.ne.s32.totalorder %s223, %s226
    %p235 = scmp.eq.s32.totalorder %s20, 3
    %p236 = por %p234, %p235
    %p237 = scmp.ne.s32.totalorder %s226, %s227
    %p238 = scmp.eq.s32.totalorder %s20, 0
    %p239 = por %p237, %p238
    %p240 = scmp.ne.s32.totalorder %s226, %s227
    %p241 = scmp.eq.s32.totalorder %s21, 3
    %p242 = por %p240, %p241
    %p244 = scmp.ne.s32.totalorder %s227, %s243
    %p245 = scmp.eq.s32.totalorder %s21, 0
    %p246 = por %p244, %p245
    %s247 = sadd.s32 %s23, %s24
    %s248 = sadd.s32 %s37, %s33
    %s249 = ssub.s32 %s22, %s41
    %s250 = ssub.s32 %s247, %s248
    %s251 = sor.u32 %s249, %s250
    %p252 = scmp.eq.s32.totalorder %s251, 0
    %s254 = sadd.s32 %s253, 1
    %s255 = scalar_select %p252, %s253, %s254
    %p258 = pneg %p252
    %p259 = scmp.eq.s32.totalorder %s15, 3
    %p260 = por %p258, %p259
    %p261 = scmp.ne.s32.totalorder %s253, %s256
    %p262 = scmp.eq.s32.totalorder %s15, 0
    %p263 = por %p261, %p262
    %p264 = scmp.ne.s32.totalorder %s253, %s256
    %p265 = scmp.eq.s32.totalorder %s20, 3
    %p266 = por %p264, %p265
    %p267 = scmp.ne.s32.totalorder %s256, %s257
    %p268 = scmp.eq.s32.totalorder %s20, 0
    %p269 = por %p267, %p268
    %p270 = scmp.ne.s32.totalorder %s256, %s257
    %p271 = scmp.eq.s32.totalorder %s21, 3
    %p272 = por %p270, %p271
    %p274 = scmp.ne.s32.totalorder %s257, %s273
    %p275 = scmp.eq.s32.totalorder %s21, 0
    %p276 = por %p274, %p275
    %p277 = scmp.le.s32.totalorder 1, %s15
    %p278 = scmp.lt.s32.totalorder %s15, 5
    %p279 = pnand %p277, %p278
    %p280 = pneg %p279
    // Predicated region
    $region9: #{c3_psa_p_forward.2} parent=5 // pred_check
      _
    $region10: #{c3_psa_p_forward.2} parent=5 // pred_check_branch
      %282 = sbr.rel (%p279) target = $region12
    $region11: #{c3_psa_p_forward.2} parent=5 // pred_region
      %s283 = ssub.s32 %s15, 1
      // Predicated region
      $region13: #{c3_psa_p_forward.2} parent=11 // pred_check
        %p284 = pneg %p85
      $region14: #{c3_psa_p_forward.2} parent=11 // pred_check_branch
        %286 = sbr.rel (%p284) target = $region16
      $region15: #{c3_psa_p_forward.2} parent=11 // pred_region
        _
      $region16: #{c3_psa_p_forward.2} parent=11 // pred_fallthru
        _
      // Predicated region
      $region17: #{c3_psa_p_forward.2} parent=11 // pred_check
        %p287 = pneg %p106
      $region18: #{c3_psa_p_forward.2} parent=11 // pred_check_branch
        %289 = sbr.rel (%p287) target = $region20
      $region19: #{c3_psa_p_forward.2} parent=11 // pred_region
        _
      $region20: #{c3_psa_p_forward.2} parent=11 // pred_fallthru
        _
      // Predicated region
      $region21: #{c3_psa_p_forward.2} parent=11 // pred_check
        %p290 = pneg %p127
      $region22: #{c3_psa_p_forward.2} parent=11 // pred_check_branch
        %292 = sbr.rel (%p290) target = $region24
      $region23: #{c3_psa_p_forward.2} parent=11 // pred_region
        _
      $region24: #{c3_psa_p_forward.2} parent=11 // pred_fallthru
        _
    $region12: #{c3_psa_p_forward.2} parent=5 // pred_fallthru
      _
    %p293 = scmp.lt.s32.totalorder %s15, 4
    // Predicated region
    $region25: #{c3_psa_p_forward.2} parent=5 // pred_check
      %p294 = pneg %p293
    $region26: #{c3_psa_p_forward.2} parent=5 // pred_check_branch
      %296 = sbr.rel (%p294) target = $region28
    $region27: #{c3_psa_p_forward.2} parent=5 // pred_region
      // Predicated region
      $region29: #{c3_psa_p_forward.2} parent=27 // pred_check
        %p297 = pneg %p58
      $region30: #{c3_psa_p_forward.2} parent=27 // pred_check_branch
        %299 = sbr.rel (%p297) target = $region32
      $region31: #{c3_psa_p_forward.2} parent=27 // pred_region
        %s300 = sadd.s32 %s23, %s24
        %s301 = smul.u32 16, %s300
        %p302 = scmp.lt.s32.totalorder %s22, 1
        %s303 = scalar_select %p302, %s22, 1
        %p304 = scmp.lt.s32.totalorder %s301, 31
        %s305 = scalar_select %p304, %s301, 31
        %s306 = smul.addr %s303, 32
        %s307 = sadd.s32 %s305, %s306
        %s308 = smul.addr %s307, 4
        %s309 = scalar_lea.vmem %s0, %s308
        %s310 = sadd.s32 %s23, %s24
        %s311 = smul.u32 16, %s310
      $region32: #{c3_psa_p_forward.2} parent=27 // pred_fallthru
        _
    $region28: #{c3_psa_p_forward.2} parent=5 // pred_fallthru
      _
    %p312 = scmp.le.s32.totalorder 1, %s15
    %p313 = scmp.lt.s32.totalorder %s15, 5
    %p314 = pnand %p312, %p313
    %p315 = pneg %p314
    // Predicated region
    $region33: #{c3_psa_p_forward.2} parent=5 // pred_check
      _
    $region34: #{c3_psa_p_forward.2} parent=5 // pred_check_branch
      %317 = sbr.rel (%p314) target = $region36
    $region35: #{c3_psa_p_forward.2} parent=5 // pred_region
      %s318 = ssub.s32 %s15, 1
      %s319 = sadd.s32 %s26, %s27
      %s320 = smul.u32 16, %s319
      %p321 = scmp.lt.s32.totalorder %s25, 1
      %s322 = scalar_select %p321, %s25, 1
      %p323 = scmp.lt.s32.totalorder %s320, 31
      %s324 = scalar_select %p323, %s320, 31
      %s325 = smul.addr %s322, 32
      %s326 = sadd.s32 %s324, %s325
      %s327 = smul.addr %s326, 4
      %s328 = scalar_lea.vmem %s0, %s327
      %p329 = pneg %p64
      %p330 = pneg %p61
      %p331 = pneg %p85
      %p332 = pneg %p82
      %p333 = pneg %p106
      %p334 = pneg %p103
      %p335 = pneg %p127
      %p336 = pneg %p124
      %p337 = pneg %p155
      %p338 = pneg %p152
      %p339 = scmp.lt.s32.totalorder %s25, 1
      %s340 = scalar_select %p339, %s25, 1
      %p341 = scmp.lt.s32.totalorder %s26, 1
      %s342 = scalar_select %p341, %s26, 1
      %s343 = smul.addr %s340, 2
      %s344 = sadd.s32 %s342, %s343
      %s345 = scalar_lea.vmem %s4, %s344
      %p346 = pneg %p183
      %p347 = pneg %p180
      %p348 = scmp.lt.s32.totalorder %s25, 1
      %s349 = scalar_select %p348, %s25, 1
      %p350 = scmp.lt.s32.totalorder %s26, 1
      %s351 = scalar_select %p350, %s26, 1
      %s352 = smul.addr %s349, 2
      %s353 = sadd.s32 %s351, %s352
      %s354 = scalar_lea.vmem %s5, %s353
      %p355 = pneg %p211
      %p356 = pneg %p208
      %p357 = scmp.lt.s32.totalorder %s25, 1
      %s358 = scalar_select %p357, %s25, 1
      %p359 = scmp.lt.s32.totalorder %s26, 1
      %s360 = scalar_select %p359, %s26, 1
      %s361 = smul.addr %s358, 2
      %s362 = sadd.s32 %s360, %s361
      %s363 = scalar_lea.vmem %s6, %s362
      %p364 = pneg %p239
      %p365 = pneg %p236
      %p366 = scmp.lt.s32.totalorder %s25, 1
      %s367 = scalar_select %p366, %s25, 1
      %p368 = scmp.lt.s32.totalorder %s26, 1
      %s369 = scalar_select %p368, %s26, 1
      %s370 = smul.addr %s367, 2
      %s371 = sadd.s32 %s369, %s370
      %s372 = scalar_lea.vmem %s7, %s371
      %p373 = pneg %p269
      %p374 = pneg %p266
      %s375 = sadd.s32 %s26, %s27
      %s376 = smul.u32 16, %s375
      %p377 = scmp.lt.s32.totalorder %s25, 1
      %s378 = scalar_select %p377, %s25, 1
      %p379 = scmp.lt.s32.totalorder %s376, 31
      %s380 = scalar_select %p379, %s376, 31
      %s381 = smul.addr %s378, 32
      %s382 = sadd.s32 %s380, %s381
      %s383 = smul.addr %s382, 4
      %s384 = scalar_lea.vmem %s8, %s383
      %s385 = sadd.s32 %s26, %s27
      %s386 = smul.u32 16, %s385
      %p387 = scmp.lt.s32.totalorder %s25, 1
      %s388 = scalar_select %p387, %s25, 1
      %p389 = scmp.lt.s32.totalorder %s386, 31
      %s390 = scalar_select %p389, %s386, 31
      %s391 = smul.addr %s388, 32
      %s392 = sadd.s32 %s390, %s391
      %s393 = smul.addr %s392, 4
      %s394 = scalar_lea.vmem %s0, %s393
      %s395 = sadd.s32 %s26, %s27
      %s396 = smul.u32 16, %s395
      %p397 = scmp.lt.s32.totalorder %s25, 1
      %s398 = scalar_select %p397, %s25, 1
      %p399 = scmp.lt.s32.totalorder %s26, 1
      %s400 = scalar_select %p399, %s26, 1
      %s401 = smul.addr %s398, 2
      %s402 = sadd.s32 %s400, %s401
      %s403 = scalar_lea.vmem %s4, %s402
      %p404 = scmp.lt.s32.totalorder %s25, 1
      %s405 = scalar_select %p404, %s25, 1
      %p406 = scmp.lt.s32.totalorder %s26, 1
      %s407 = scalar_select %p406, %s26, 1
      %s408 = smul.addr %s405, 2
      %s409 = sadd.s32 %s407, %s408
      %s410 = scalar_lea.vmem %s5, %s409
      %p411 = scmp.lt.s32.totalorder %s25, 1
      %s412 = scalar_select %p411, %s25, 1
      %p413 = scmp.lt.s32.totalorder %s26, 1
      %s414 = scalar_select %p413, %s26, 1
      %s415 = smul.addr %s412, 2
      %s416 = sadd.s32 %s414, %s415
      %s417 = scalar_lea.vmem %s6, %s416
      %p418 = scmp.lt.s32.totalorder %s25, 1
      %s419 = scalar_select %p418, %s25, 1
      %p420 = scmp.lt.s32.totalorder %s26, 1
      %s421 = scalar_select %p420, %s26, 1
      %s422 = smul.addr %s419, 2
      %s423 = sadd.s32 %s421, %s422
      %s424 = scalar_lea.vmem %s7, %s423
      %s425 = sadd.s32 %s26, %s27
      %s426 = smul.u32 16, %s425
      %p427 = scmp.lt.s32.totalorder %s25, 1
      %s428 = scalar_select %p427, %s25, 1
      %p429 = scmp.lt.s32.totalorder %s426, 31
      %s430 = scalar_select %p429, %s426, 31
      %s431 = smul.addr %s428, 32
      %s432 = sadd.s32 %s430, %s431
      %s433 = smul.addr %s432, 4
      %s434 = scalar_lea.vmem %s8, %s433
      %s435 = sadd.s32 %s26, %s27
      %s436 = smul.u32 16, %s435
      %p438 = scmp.eq.s32.totalorder %s27, 0
      // Predicated region
      $region37: #{c3_psa_p_forward.2} parent=35 // pred_check
        %p439 = pneg %p438
      $region38: #{c3_psa_p_forward.2} parent=35 // pred_check_branch
        %441 = sbr.rel (%p439) target = $region40
      $region39: #{c3_psa_p_forward.2} parent=35 // pred_region
        %vm442 = vcmask 0
        %443 = vst.msk [vmem:[#allocation2] sm:$0x1] %vm442, -inf
        %444 = vst.msk [vmem:[#allocation3] sm:$0x1] %vm442, 0.0
        %vm445 = vcmask 8192
        %446 = vst.msk [vmem:[#allocation4] sm:$0x1] %vm445, 0.0
        %447 = vst.msk [vmem:[#allocation5] sm:$0x1] %vm445, 0.0
      $region40: #{c3_psa_p_forward.2} parent=35 // pred_fallthru
        _
      %v448 = vld [vmem:[%s394] sm:$0xf]
      %v449 = vld [vmem:[%s394 + $0x4] sm:$0xf]
      %v450 = vld [vmem:[%s394 + $0x8] sm:$0xf]
      %v451 = vld [vmem:[%s394 + $0xc] sm:$0xf]
      %v452 = vld [vmem:[%s394 + $0x10] sm:$0xf]
      %v453 = vld [vmem:[%s394 + $0x14] sm:$0xf]
      %v454 = vld [vmem:[%s394 + $0x18] sm:$0xf]
      %v455 = vld [vmem:[%s394 + $0x1c] sm:$0xf]
      %v456 = vld [vmem:[%s394 + $0x20] sm:$0xf]
      %v457 = vld [vmem:[%s394 + $0x24] sm:$0xf]
      %v458 = vld [vmem:[%s394 + $0x28] sm:$0xf]
      %v459 = vld [vmem:[%s394 + $0x2c] sm:$0xf]
      %v460 = vld [vmem:[%s394 + $0x30] sm:$0xf]
      %v461 = vld [vmem:[%s394 + $0x34] sm:$0xf]
      %v462 = vld [vmem:[%s394 + $0x38] sm:$0xf]
      %v463 = vld [vmem:[%s394 + $0x3c] sm:$0xf]
      %v464 = vld [vmem:[%s1] sm:$0xf]
      %v481 = vunpack.c.l.b16 %v448
      %v482 = vunpack.c.l.b16 %v449
      %v483 = vunpack.c.l.b16 %v450
      %v484 = vunpack.c.l.b16 %v451
      %v485 = vunpack.c.l.b16 %v452
      %v486 = vunpack.c.l.b16 %v453
      %v487 = vunpack.c.l.b16 %v454
      %v488 = vunpack.c.l.b16 %v455
      %v489 = vunpack.c.l.b16 %v456
      %v490 = vunpack.c.l.b16 %v457
      %v491 = vunpack.c.l.b16 %v458
      %v492 = vunpack.c.l.b16 %v459
      %v493 = vunpack.c.l.b16 %v460
      %v494 = vunpack.c.l.b16 %v461
      %v495 = vunpack.c.l.b16 %v462
      %v496 = vunpack.c.l.b16 %v463
      %v497 = vpack.c.b16 %v482, %v481
      %v498 = vpack.c.b16 %v484, %v483
      %v499 = vpack.c.b16 %v486, %v485
      %v500 = vpack.c.b16 %v488, %v487
      %v501 = vpack.c.b16 %v490, %v489
      %v502 = vpack.c.b16 %v492, %v491
      %v503 = vpack.c.b16 %v494, %v493
      %v504 = vpack.c.b16 %v496, %v495
      %vm505 = vcmask 64512
      %v507 = vsel %vm505, %v497, 0
      %v510 = vsel %vm505, %v498, 0
      %v513 = vsel %vm505, %v499, 0
      %v516 = vsel %vm505, %v500, 0
      %v519 = vsel %vm505, %v501, 0
      %v522 = vsel %vm505, %v502, 0
      %v525 = vsel %vm505, %v503, 0
      %v528 = vsel %vm505, %v504, 0
      %vm530 = vcmask 1043456
      %v532 = vsel %vm530, %v464, 0
      %534 = vmatprep.subr.bf16.mxu0 0
      %535 = vmatpush1.bf16.msra.mxu0 %v532
      %536 = vmatprep.subr.bf16.mxu0 0
      %537 = vmatpush1.bf16.msra.mxu0 0
      %538 = vmatprep.subr.bf16.mxu0 0
      %539 = vmatpush1.bf16.msra.mxu0 0
      %540 = vmatprep.subr.bf16.mxu0 0
      %541 = vmatpush1.bf16.msra.mxu0 0
      %542 = vmatprep.subr.bf16.mxu0 0
      %543 = vmatpush1.bf16.msra.mxu0 0
      %544 = vmatprep.subr.bf16.mxu0 0
      %545 = vmatpush1.bf16.msra.mxu0 0
      %546 = vmatprep.subr.bf16.mxu0 0
      %547 = vmatpush1.bf16.msra.mxu0 0
      %548 = vmatprep.subr.bf16.mxu0 0
      %549 = vmatpush1.bf16.msra.mxu0 0
      %550 = vmatprep.subr.bf16.mxu0 0
      %551 = vmatpush1.bf16.msra.mxu0 0
      %552 = vmatprep.subr.bf16.mxu0 0
      %553 = vmatpush1.bf16.msra.mxu0 0
      %554 = vmatprep.subr.bf16.mxu0 0
      %555 = vmatpush1.bf16.msra.mxu0 0
      %556 = vmatprep.subr.bf16.mxu0 0
      %557 = vmatpush1.bf16.msra.mxu0 0
      %558 = vmatprep.subr.bf16.mxu0 0
      %559 = vmatpush1.bf16.msra.mxu0 0
      %560 = vmatprep.subr.bf16.mxu0 0
      %561 = vmatpush1.bf16.msra.mxu0 0
      %562 = vmatprep.subr.bf16.mxu0 0
      %563 = vmatpush1.bf16.msra.mxu0 0
      %564 = vmatprep.subr.bf16.mxu0 0
      %565 = vmatpush1.bf16.msra.mxu0 0
      %566 = vmatprep.mubr.bf16.mxu0 0
      %567 = vmatmul.mubr.bf16.gmra.mrb[0].mxu0 %v507
      %v568 = vpop.f32.mrb[0].mxu0
      %v569 = vadd.f32 0.0, %v568
      %v570 = vpop.f32.mrb[0].mxu0
      %v571 = vpop.f32.mrb[0].mxu0
      %v572 = vadd.f32 0.0, %v571
      %v573 = vpop.f32.mrb[0].mxu0
      %574 = vmatprep.mubr.bf16.mxu0 0
      %575 = vmatmul.mubr.bf16.gmra.mrb[0].mxu0 %v510
      %v576 = vpop.f32.mrb[0].mxu0
      %v577 = vadd.f32 0.0, %v576
      %v578 = vpop.f32.mrb[0].mxu0
      %v579 = vpop.f32.mrb[0].mxu0
      %v580 = vadd.f32 0.0, %v579
      %v581 = vpop.f32.mrb[0].mxu0
      %582 = vmatprep.mubr.bf16.mxu0 0
      %583 = vmatmul.mubr.bf16.gmra.mrb[0].mxu0 %v513
      %v584 = vpop.f32.mrb[0].mxu0
      %v585 = vadd.f32 0.0, %v584
      %v586 = vpop.f32.mrb[0].mxu0
      %v587 = vpop.f32.mrb[0].mxu0
      %v588 = vadd.f32 0.0, %v587
      %v589 = vpop.f32.mrb[0].mxu0
      %590 = vmatprep.mubr.bf16.mxu0 0
      %591 = vmatmul.mubr.bf16.gmra.mrb[0].mxu0 %v516
      %v592 = vpop.f32.mrb[0].mxu0
      %v593 = vadd.f32 0.0, %v592
      %v594 = vpop.f32.mrb[0].mxu0
      %v595 = vpop.f32.mrb[0].mxu0
      %v596 = vadd.f32 0.0, %v595
      %v597 = vpop.f32.mrb[0].mxu0
      %598 = vmatprep.mubr.bf16.mxu0 0
      %599 = vmatmul.mubr.bf16.gmra.mrb[0].mxu0 %v519
      %v600 = vpop.f32.mrb[0].mxu0
      %v601 = vadd.f32 0.0, %v600
      %v602 = vpop.f32.mrb[0].mxu0
      %v603 = vpop.f32.mrb[0].mxu0
      %v604 = vadd.f32 0.0, %v603
      %v605 = vpop.f32.mrb[0].mxu0
      %606 = vmatprep.mubr.bf16.mxu0 0
      %607 = vmatmul.mubr.bf16.gmra.mrb[0].mxu0 %v522
      %v608 = vpop.f32.mrb[0].mxu0
      %v609 = vadd.f32 0.0, %v608
      %v610 = vpop.f32.mrb[0].mxu0
      %v611 = vpop.f32.mrb[0].mxu0
      %v612 = vadd.f32 0.0, %v611
      %v613 = vpop.f32.mrb[0].mxu0
      %614 = vmatprep.mubr.bf16.mxu0 0
      %615 = vmatmul.mubr.bf16.gmra.mrb[0].mxu0 %v525
      %v616 = vpop.f32.mrb[0].mxu0
      %v617 = vadd.f32 0.0, %v616
      %v618 = vpop.f32.mrb[0].mxu0
      %v619 = vpop.f32.mrb[0].mxu0
      %v620 = vadd.f32 0.0, %v619
      %v621 = vpop.f32.mrb[0].mxu0
      %622 = vmatprep.mubr.bf16.mxu0 0
      %623 = vmatmul.mubr.bf16.gmra.mrb[0].mxu0 %v528
      %v624 = vpop.f32.mrb[0].mxu0
      %v625 = vadd.f32 0.0, %v624
      %v626 = vpop.f32.mrb[0].mxu0
      %v627 = vpop.f32.mrb[0].mxu0
      %v628 = vadd.f32 0.0, %v627
      %v629 = vpop.f32.mrb[0].mxu0
      %630 = vdwg.mxu0
      %v631 = vmul.f32 %v569, 0.5
      %v632 = vmul.f32 %v572, 0.5
      %v633 = vmul.f32 %v577, 0.5
      %v634 = vmul.f32 %v580, 0.5
      %v635 = vmul.f32 %v585, 0.5
      %v636 = vmul.f32 %v588, 0.5
      %v637 = vmul.f32 %v593, 0.5
      %v638 = vmul.f32 %v596, 0.5
      %v639 = vmul.f32 %v601, 0.5
      %v640 = vmul.f32 %v604, 0.5
      %v641 = vmul.f32 %v609, 0.5
      %v642 = vmul.f32 %v612, 0.5
      %v643 = vmul.f32 %v617, 0.5
      %v644 = vmul.f32 %v620, 0.5
      %v645 = vmul.f32 %v625, 0.5
      %v646 = vmul.f32 %v628, 0.5
      %v647 = vtanh.pop %v631
      %v648 = vtanh.pop %v632
      %v649 = vtanh.pop %v633
      %v650 = vtanh.pop %v634
      %v651 = vtanh.pop %v635
      %v652 = vtanh.pop %v636
      %v653 = vtanh.pop %v637
      %v654 = vtanh.pop %v638
      %v655 = vtanh.pop %v639
      %v656 = vtanh.pop %v640
      %v657 = vtanh.pop %v641
      %v658 = vtanh.pop %v642
      %v659 = vtanh.pop %v643
      %v660 = vtanh.pop %v644
      %v661 = vtanh.pop %v645
      %v662 = vtanh.pop %v646
      %v663 = vmul.f32 %v647, 0.5
      %v664 = vmul.f32 %v648, 0.5
      %v665 = vmul.f32 %v649, 0.5
      %v666 = vmul.f32 %v650, 0.5
      %v667 = vmul.f32 %v651, 0.5
      %v668 = vmul.f32 %v652, 0.5
      %v669 = vmul.f32 %v653, 0.5
      %v670 = vmul.f32 %v654, 0.5
      %v671 = vmul.f32 %v655, 0.5
      %v672 = vmul.f32 %v656, 0.5
      %v673 = vmul.f32 %v657, 0.5
      %v674 = vmul.f32 %v658, 0.5
      %v675 = vmul.f32 %v659, 0.5
      %v676 = vmul.f32 %v660, 0.5
      %v677 = vmul.f32 %v661, 0.5
      %v678 = vmul.f32 %v662, 0.5
      %v679 = vadd.f32 %v663, 0.5
      %v680 = vadd.f32 %v664, 0.5
      %v681 = vadd.f32 %v665, 0.5
      %v682 = vadd.f32 %v666, 0.5
      %v683 = vadd.f32 %v667, 0.5
      %v684 = vadd.f32 %v668, 0.5
      %v685 = vadd.f32 %v669, 0.5
      %v686 = vadd.f32 %v670, 0.5
      %v687 = vadd.f32 %v671, 0.5
      %v688 = vadd.f32 %v672, 0.5
      %v689 = vadd.f32 %v673, 0.5
      %v690 = vadd.f32 %v674, 0.5
      %v691 = vadd.f32 %v675, 0.5
      %v692 = vadd.f32 %v676, 0.5
      %v693 = vadd.f32 %v677, 0.5
      %v694 = vadd.f32 %v678, 0.5
      %v695 = vmul.f32 %v569, %v679
      %v696 = vmul.f32 %v572, %v680
      %v697 = vmul.f32 %v577, %v681
      %v698 = vmul.f32 %v580, %v682
      %v699 = vmul.f32 %v585, %v683
      %v700 = vmul.f32 %v588, %v684
      %v701 = vmul.f32 %v593, %v685
      %v702 = vmul.f32 %v596, %v686
      %v703 = vmul.f32 %v601, %v687
      %v704 = vmul.f32 %v604, %v688
      %v705 = vmul.f32 %v609, %v689
      %v706 = vmul.f32 %v612, %v690
      %v707 = vmul.f32 %v617, %v691
      %v708 = vmul.f32 %v620, %v692
      %v709 = vmul.f32 %v625, %v693
      %v710 = vmul.f32 %v628, %v694
      %v711 = vld [vmem:[%s3] sm:$0xf]
      %vm712 = vcmask 31744
      %v714 = vsel %vm712, %v695, 0
      %v717 = vsel %vm712, %v696, 0
      %v720 = vsel %vm712, %v697, 0
      %v723 = vsel %vm712, %v698, 0
      %v726 = vsel %vm712, %v699, 0
      %v729 = vsel %vm712, %v700, 0
      %v732 = vsel %vm712, %v701, 0
      %v735 = vsel %vm712, %v702, 0
      %v738 = vsel %vm712, %v703, 0
      %v741 = vsel %vm712, %v704, 0
      %v744 = vsel %vm712, %v705, 0
      %v747 = vsel %vm712, %v706, 0
      %v750 = vsel %vm712, %v707, 0
      %v753 = vsel %vm712, %v708, 0
      %v756 = vsel %vm712, %v709, 0
      %v759 = vsel %vm712, %v710, 0
      %v762 = vsel %vm530, %v711, 0
      %764 = vmatprep.subr.mxu0 0.0
      %765 = vmatpush1.msra.mxu0 %v762
      %766 = vmatprep.subr.mxu0 0.0
      %767 = vmatpush1.msra.mxu0 0.0
      %768 = vmatprep.subr.mxu0 0.0
      %769 = vmatpush1.msra.mxu0 0.0
      %770 = vmatprep.subr.mxu0 0.0
      %771 = vmatpush1.msra.mxu0 0.0
      %772 = vmatprep.subr.mxu0 0.0
      %773 = vmatpush1.msra.mxu0 0.0
      %774 = vmatprep.subr.mxu0 0.0
      %775 = vmatpush1.msra.mxu0 0.0
      %776 = vmatprep.subr.mxu0 0.0
      %777 = vmatpush1.msra.mxu0 0.0
      %778 = vmatprep.subr.mxu0 0.0
      %779 = vmatpush1.msra.mxu0 0.0
      %780 = vmatprep.subr.mxu0 0.0
      %781 = vmatpush1.msra.mxu0 0.0
      %782 = vmatprep.subr.mxu0 0.0
      %783 = vmatpush1.msra.mxu0 0.0
      %784 = vmatprep.subr.mxu0 0.0
      %785 = vmatpush1.msra.mxu0 0.0
      %786 = vmatprep.subr.mxu0 0.0
      %787 = vmatpush1.msra.mxu0 0.0
      %788 = vmatprep.subr.mxu0 0.0
      %789 = vmatpush1.msra.mxu0 0.0
      %790 = vmatprep.subr.mxu0 0.0
      %791 = vmatpush1.msra.mxu0 0.0
      %792 = vmatprep.subr.mxu0 0.0
      %793 = vmatpush1.msra.mxu0 0.0
      %794 = vmatprep.subr.mxu0 0.0
      %795 = vmatpush1.msra.mxu0 0.0
      %796 = vmatprep.subr.mxu0 0.0
      %797 = vmatpush1.msra.mxu0 0.0
      %798 = vmatprep.subr.mxu0 0.0
      %799 = vmatpush1.msra.mxu0 0.0
      %800 = vmatprep.subr.mxu0 0.0
      %801 = vmatpush1.msra.mxu0 0.0
      %802 = vmatprep.subr.mxu0 0.0
      %803 = vmatpush1.msra.mxu0 0.0
      %804 = vmatprep.subr.mxu0 0.0
      %805 = vmatpush1.msra.mxu0 0.0
      %806 = vmatprep.subr.mxu0 0.0
      %807 = vmatpush1.msra.mxu0 0.0
      %808 = vmatprep.subr.mxu0 0.0
      %809 = vmatpush1.msra.mxu0 0.0
      %810 = vmatprep.subr.mxu0 0.0
      %811 = vmatpush1.msra.mxu0 0.0
      %812 = vmatprep.subr.mxu0 0.0
      %813 = vmatpush1.msra.mxu0 0.0
      %814 = vmatprep.subr.mxu0 0.0
      %815 = vmatpush1.msra.mxu0 0.0
      %816 = vmatprep.subr.mxu0 0.0
      %817 = vmatpush1.msra.mxu0 0.0
      %818 = vmatprep.subr.mxu0 0.0
      %819 = vmatpush1.msra.mxu0 0.0
      %820 = vmatprep.subr.mxu0 0.0
      %821 = vmatpush1.msra.mxu0 0.0
      %822 = vmatprep.subr.mxu0 0.0
      %823 = vmatpush1.msra.mxu0 0.0
      %824 = vmatprep.subr.mxu0 0.0
      %825 = vmatpush1.msra.mxu0 0.0
      %826 = vmatprep.subr.mxu0 0.0
      %827 = vmatpush1.msra.mxu0 0.0
      %828 = vmatprep.mubr.f32.mxu0 0.0
      %829 = vmatmul.mubr.f32.gmra.mrb[0].mxu0 %v714
      %v830 = vpop.f32.mrb[0].mxu0
      %v831 = vadd.f32 0.0, %v830
      %v832 = vpop.f32.mrb[0].mxu0
      %833 = vmatprep.mubr.f32.mxu0 0.0
      %834 = vmatmul.mubr.f32.gmra.mrb[0].mxu0 %v717
      %v835 = vpop.f32.mrb[0].mxu0
      %v836 = vadd.f32 0.0, %v835
      %v837 = vpop.f32.mrb[0].mxu0
      %838 = vmatprep.mubr.f32.mxu0 0.0
      %839 = vmatmul.mubr.f32.gmra.mrb[0].mxu0 %v720
      %v840 = vpop.f32.mrb[0].mxu0
      %v841 = vadd.f32 0.0, %v840
      %v842 = vpop.f32.mrb[0].mxu0
      %843 = vmatprep.mubr.f32.mxu0 0.0
      %844 = vmatmul.mubr.f32.gmra.mrb[0].mxu0 %v723
      %v845 = vpop.f32.mrb[0].mxu0
      %v846 = vadd.f32 0.0, %v845
      %v847 = vpop.f32.mrb[0].mxu0
      %848 = vmatprep.mubr.f32.mxu0 0.0
      %849 = vmatmul.mubr.f32.gmra.mrb[0].mxu0 %v726
      %v850 = vpop.f32.mrb[0].mxu0
      %v851 = vadd.f32 0.0, %v850
      %v852 = vpop.f32.mrb[0].mxu0
      %853 = vmatprep.mubr.f32.mxu0 0.0
      %854 = vmatmul.mubr.f32.gmra.mrb[0].mxu0 %v729
      %v855 = vpop.f32.mrb[0].mxu0
      %v856 = vadd.f32 0.0, %v855
      %v857 = vpop.f32.mrb[0].mxu0
      %858 = vmatprep.mubr.f32.mxu0 0.0
      %859 = vmatmul.mubr.f32.gmra.mrb[0].mxu0 %v732
      %v860 = vpop.f32.mrb[0].mxu0
      %v861 = vadd.f32 0.0, %v860
      %v862 = vpop.f32.mrb[0].mxu0
      %863 = vmatprep.mubr.f32.mxu0 0.0
      %864 = vmatmul.mubr.f32.gmra.mrb[0].mxu0 %v735
      %v865 = vpop.f32.mrb[0].mxu0
      %v866 = vadd.f32 0.0, %v865
      %v867 = vpop.f32.mrb[0].mxu0
      %868 = vmatprep.mubr.f32.mxu0 0.0
      %869 = vmatmul.mubr.f32.gmra.mrb[0].mxu0 %v738
      %v870 = vpop.f32.mrb[0].mxu0
      %v871 = vadd.f32 0.0, %v870
      %v872 = vpop.f32.mrb[0].mxu0
      %873 = vmatprep.mubr.f32.mxu0 0.0
      %874 = vmatmul.mubr.f32.gmra.mrb[0].mxu0 %v741
      %v875 = vpop.f32.mrb[0].mxu0
      %v876 = vadd.f32 0.0, %v875
      %v877 = vpop.f32.mrb[0].mxu0
      %878 = vmatprep.mubr.f32.mxu0 0.0
      %879 = vmatmul.mubr.f32.gmra.mrb[0].mxu0 %v744
      %v880 = vpop.f32.mrb[0].mxu0
      %v881 = vadd.f32 0.0, %v880
      %v882 = vpop.f32.mrb[0].mxu0
      %883 = vmatprep.mubr.f32.mxu0 0.0
      %884 = vmatmul.mubr.f32.gmra.mrb[0].mxu0 %v747
      %v885 = vpop.f32.mrb[0].mxu0
      %v886 = vadd.f32 0.0, %v885
      %v887 = vpop.f32.mrb[0].mxu0
      %888 = vmatprep.mubr.f32.mxu0 0.0
      %889 = vmatmul.mubr.f32.gmra.mrb[0].mxu0 %v750
      %v890 = vpop.f32.mrb[0].mxu0
      %v891 = vadd.f32 0.0, %v890
      %v892 = vpop.f32.mrb[0].mxu0
      %893 = vmatprep.mubr.f32.mxu0 0.0
      %894 = vmatmul.mubr.f32.gmra.mrb[0].mxu0 %v753
      %v895 = vpop.f32.mrb[0].mxu0
      %v896 = vadd.f32 0.0, %v895
      %v897 = vpop.f32.mrb[0].mxu0
      %898 = vmatprep.mubr.f32.mxu0 0.0
      %899 = vmatmul.mubr.f32.gmra.mrb[0].mxu0 %v756
      %v900 = vpop.f32.mrb[0].mxu0
      %v901 = vadd.f32 0.0, %v900
      %v902 = vpop.f32.mrb[0].mxu0
      %903 = vmatprep.mubr.f32.mxu0 0.0
      %904 = vmatmul.mubr.f32.gmra.mrb[0].mxu0 %v759
      %v905 = vpop.f32.mrb[0].mxu0
      %v906 = vadd.f32 0.0, %v905
      %v907 = vpop.f32.mrb[0].mxu0
      %908 = vdwg.mxu0
      %v909 = vpack.c.bf16 %v696, %v695
      %v910 = vpack.c.bf16 %v698, %v697
      %v911 = vpack.c.bf16 %v700, %v699
      %v912 = vpack.c.bf16 %v702, %v701
      %v913 = vpack.c.bf16 %v704, %v703
      %v914 = vpack.c.bf16 %v706, %v705
      %v915 = vpack.c.bf16 %v708, %v707
      %v916 = vpack.c.bf16 %v710, %v709
      %v917 = vld [vmem:[%s2] sm:$0x3]
      %v919 = vsel %vm712, %v909, 0
      %v922 = vsel %vm712, %v910, 0
      %v925 = vsel %vm712, %v911, 0
      %v928 = vsel %vm712, %v912, 0
      %v931 = vsel %vm712, %v913, 0
      %v934 = vsel %vm712, %v914, 0
      %v937 = vsel %vm712, %v915, 0
      %v940 = vsel %vm712, %v916, 0
      %vm942 = vcmask 1041408
      %v944 = vsel %vm942, %v917, 0
      %946 = vmatprep.subr.bf16.mxu0 0
      %947 = vmatpush1.bf16.msra.mxu0 %v944
      %948 = vmatprep.subr.bf16.mxu0 0
      %949 = vmatpush1.bf16.msra.mxu0 0
      %950 = vmatprep.subr.bf16.mxu0 0
      %951 = vmatpush1.bf16.msra.mxu0 0
      %952 = vmatprep.subr.bf16.mxu0 0
      %953 = vmatpush1.bf16.msra.mxu0 0
      %954 = vmatprep.subr.bf16.mxu0 0
      %955 = vmatpush1.bf16.msra.mxu0 0
      %956 = vmatprep.subr.bf16.mxu0 0
      %957 = vmatpush1.bf16.msra.mxu0 0
      %958 = vmatprep.subr.bf16.mxu0 0
      %959 = vmatpush1.bf16.msra.mxu0 0
      %960 = vmatprep.subr.bf16.mxu0 0
      %961 = vmatpush1.bf16.msra.mxu0 0
      %962 = vmatprep.subr.bf16.mxu0 0
      %963 = vmatpush1.bf16.msra.mxu0 0
      %964 = vmatprep.subr.bf16.mxu0 0
      %965 = vmatpush1.bf16.msra.mxu0 0
      %966 = vmatprep.subr.bf16.mxu0 0
      %967 = vmatpush1.bf16.msra.mxu0 0
      %968 = vmatprep.subr.bf16.mxu0 0
      %969 = vmatpush1.bf16.msra.mxu0 0
      %970 = vmatprep.subr.bf16.mxu0 0
      %971 = vmatpush1.bf16.msra.mxu0 0
      %972 = vmatprep.subr.bf16.mxu0 0
      %973 = vmatpush1.bf16.msra.mxu0 0
      %974 = vmatprep.subr.bf16.mxu0 0
      %975 = vmatpush1.bf16.msra.mxu0 0
      %976 = vmatprep.subr.bf16.mxu0 0
      %977 = vmatpush1.bf16.msra.mxu0 0
      %978 = vmatprep.mubr.bf16.mxu0 0
      %979 = vmatmul.mubr.bf16.gmra.mrb[0].mxu0 %v919
      %v980 = vpop.f32.mrb[0].mxu0
      %v981 = vadd.f32 0.0, %v980
      %v982 = vpop.f32.mrb[0].mxu0
      %v983 = vpop.f32.mrb[0].mxu0
      %v984 = vadd.f32 0.0, %v983
      %v985 = vpop.f32.mrb[0].mxu0
      %986 = vmatprep.mubr.bf16.mxu0 0
      %987 = vmatmul.mubr.bf16.gmra.mrb[0].mxu0 %v922
      %v988 = vpop.f32.mrb[0].mxu0
      %v989 = vadd.f32 0.0, %v988
      %v990 = vpop.f32.mrb[0].mxu0
      %v991 = vpop.f32.mrb[0].mxu0
      %v992 = vadd.f32 0.0, %v991
      %v993 = vpop.f32.mrb[0].mxu0
      %994 = vmatprep.mubr.bf16.mxu0 0
      %995 = vmatmul.mubr.bf16.gmra.mrb[0].mxu0 %v925
      %v996 = vpop.f32.mrb[0].mxu0
      %v997 = vadd.f32 0.0, %v996
      %v998 = vpop.f32.mrb[0].mxu0
      %v999 = vpop.f32.mrb[0].mxu0
      %v1000 = vadd.f32 0.0, %v999
      %v1001 = vpop.f32.mrb[0].mxu0
      %1002 = vmatprep.mubr.bf16.mxu0 0
      %1003 = vmatmul.mubr.bf16.gmra.mrb[0].mxu0 %v928
      %v1004 = vpop.f32.mrb[0].mxu0
      %v1005 = vadd.f32 0.0, %v1004
      %v1006 = vpop.f32.mrb[0].mxu0
      %v1007 = vpop.f32.mrb[0].mxu0
      %v1008 = vadd.f32 0.0, %v1007
      %v1009 = vpop.f32.mrb[0].mxu0
      %1010 = vmatprep.mubr.bf16.mxu0 0
      %1011 = vmatmul.mubr.bf16.gmra.mrb[0].mxu0 %v931
      %v1012 = vpop.f32.mrb[0].mxu0
      %v1013 = vadd.f32 0.0, %v1012
      %v1014 = vpop.f32.mrb[0].mxu0
      %v1015 = vpop.f32.mrb[0].mxu0
      %v1016 = vadd.f32 0.0, %v1015
      %v1017 = vpop.f32.mrb[0].mxu0
      %1018 = vmatprep.mubr.bf16.mxu0 0
      %1019 = vmatmul.mubr.bf16.gmra.mrb[0].mxu0 %v934
      %v1020 = vpop.f32.mrb[0].mxu0
      %v1021 = vadd.f32 0.0, %v1020
      %v1022 = vpop.f32.mrb[0].mxu0
      %v1023 = vpop.f32.mrb[0].mxu0
      %v1024 = vadd.f32 0.0, %v1023
      %v1025 = vpop.f32.mrb[0].mxu0
      %1026 = vmatprep.mubr.bf16.mxu0 0
      %1027 = vmatmul.mubr.bf16.gmra.mrb[0].mxu0 %v937
      %v1028 = vpop.f32.mrb[0].mxu0
      %v1029 = vadd.f32 0.0, %v1028
      %v1030 = vpop.f32.mrb[0].mxu0
      %v1031 = vpop.f32.mrb[0].mxu0
      %v1032 = vadd.f32 0.0, %v1031
      %v1033 = vpop.f32.mrb[0].mxu0
      %1034 = vmatprep.mubr.bf16.mxu0 0
      %1035 = vmatmul.mubr.bf16.gmra.mrb[0].mxu0 %v940
      %v1036 = vpop.f32.mrb[0].mxu0
      %v1037 = vadd.f32 0.0, %v1036
      %v1038 = vpop.f32.mrb[0].mxu0
      %v1039 = vpop.f32.mrb[0].mxu0
      %v1040 = vadd.f32 0.0, %v1039
      %v1041 = vpop.f32.mrb[0].mxu0
      %1042 = vdwg.mxu0
      %v1043 = vpack.c.bf16 %v984, %v981
      %v1044 = vpack.c.bf16 %v992, %v989
      %v1045 = vpack.c.bf16 %v1000, %v997
      %v1046 = vpack.c.bf16 %v1008, %v1005
      %v1047 = vpack.c.bf16 %v1016, %v1013
      %v1048 = vpack.c.bf16 %v1024, %v1021
      %v1049 = vpack.c.bf16 %v1032, %v1029
      %v1050 = vpack.c.bf16 %v1040, %v1037
      %v1059 = vunpack.c.l.b16 %v1043
      %v1060 = vunpack.c.h.b16 %v1043
      %v1061 = vunpack.c.l.b16 %v1044
      %v1062 = vunpack.c.h.b16 %v1044
      %v1063 = vunpack.c.l.b16 %v1045
      %v1064 = vunpack.c.h.b16 %v1045
      %v1065 = vunpack.c.l.b16 %v1046
      %v1066 = vunpack.c.h.b16 %v1046
      %v1067 = vunpack.c.l.b16 %v1047
      %v1068 = vunpack.c.h.b16 %v1047
      %v1069 = vunpack.c.l.b16 %v1048
      %v1070 = vunpack.c.h.b16 %v1048
      %v1071 = vunpack.c.l.b16 %v1049
      %v1072 = vunpack.c.h.b16 %v1049
      %v1073 = vunpack.c.l.b16 %v1050
      %v1074 = vunpack.c.h.b16 %v1050
      %v1075 = vpack.c.b16 %v1059, %v1059
      %v1076 = vpack.c.b16 %v1060, %v1060
      %v1077 = vpack.c.b16 %v1061, %v1061
      %v1078 = vpack.c.b16 %v1062, %v1062
      %v1079 = vpack.c.b16 %v1063, %v1063
      %v1080 = vpack.c.b16 %v1064, %v1064
      %v1081 = vpack.c.b16 %v1065, %v1065
      %v1082 = vpack.c.b16 %v1066, %v1066
      %v1083 = vpack.c.b16 %v1067, %v1067
      %v1084 = vpack.c.b16 %v1068, %v1068
      %v1085 = vpack.c.b16 %v1069, %v1069
      %v1086 = vpack.c.b16 %v1070, %v1070
      %v1087 = vpack.c.b16 %v1071, %v1071
      %v1088 = vpack.c.b16 %v1072, %v1072
      %v1089 = vpack.c.b16 %v1073, %v1073
      %v1090 = vpack.c.b16 %v1074, %v1074
      %vm1107 = vcmask 11264
      %1108 = vst.msk [vmem:[%s434] sm:$0xf] %vm1107, %v1075
      %1109 = vst.msk [vmem:[%s434 + $0x4] sm:$0xf] %vm1107, %v1076
      %1110 = vst.msk [vmem:[%s434 + $0x8] sm:$0xf] %vm1107, %v1077
      %1111 = vst.msk [vmem:[%s434 + $0xc] sm:$0xf] %vm1107, %v1078
      %1112 = vst.msk [vmem:[%s434 + $0x10] sm:$0xf] %vm1107, %v1079
      %1113 = vst.msk [vmem:[%s434 + $0x14] sm:$0xf] %vm1107, %v1080
      %1114 = vst.msk [vmem:[%s434 + $0x18] sm:$0xf] %vm1107, %v1081
      %1115 = vst.msk [vmem:[%s434 + $0x1c] sm:$0xf] %vm1107, %v1082
      %1116 = vst.msk [vmem:[%s434 + $0x20] sm:$0xf] %vm1107, %v1083
      %1117 = vst.msk [vmem:[%s434 + $0x24] sm:$0xf] %vm1107, %v1084
      %1118 = vst.msk [vmem:[%s434 + $0x28] sm:$0xf] %vm1107, %v1085
      %1119 = vst.msk [vmem:[%s434 + $0x2c] sm:$0xf] %vm1107, %v1086
      %1120 = vst.msk [vmem:[%s434 + $0x30] sm:$0xf] %vm1107, %v1087
      %1121 = vst.msk [vmem:[%s434 + $0x34] sm:$0xf] %vm1107, %v1088
      %1122 = vst.msk [vmem:[%s434 + $0x38] sm:$0xf] %vm1107, %v1089
      %1123 = vst.msk [vmem:[%s434 + $0x3c] sm:$0xf] %vm1107, %v1090
      %v1124 = vld [vmem:[#allocation2] sm:$0x1]
      %vm1125 = vcmask 7168
      %v1126 = vsel %vm1125, %v831, -inf
      %v1127 = vsel %vm1125, %v836, -inf
      %v1128 = vsel %vm1125, %v841, -inf
      %v1129 = vsel %vm1125, %v846, -inf
      %v1130 = vsel %vm1125, %v851, -inf
      %v1131 = vmax.f32 %v1126, %v1130
      %v1132 = vsel %vm1125, %v856, -inf
      %v1133 = vmax.f32 %v1127, %v1132
      %v1134 = vsel %vm1125, %v861, -inf
      %v1135 = vmax.f32 %v1128, %v1134
      %v1136 = vsel %vm1125, %v866, -inf
      %v1137 = vmax.f32 %v1129, %v1136
      %v1138 = vsel %vm1125, %v871, -inf
      %v1139 = vmax.f32 %v1131, %v1138
      %v1140 = vsel %vm1125, %v876, -inf
      %v1141 = vmax.f32 %v1133, %v1140
      %v1142 = vsel %vm1125, %v881, -inf
      %v1143 = vmax.f32 %v1135, %v1142
      %v1144 = vsel %vm1125, %v886, -inf
      %v1145 = vmax.f32 %v1137, %v1144
      %v1146 = vsel %vm1125, %v891, -inf
      %v1147 = vmax.f32 %v1139, %v1146
      %v1148 = vsel %vm1125, %v896, -inf
      %v1149 = vmax.f32 %v1141, %v1148
      %v1150 = vsel %vm1125, %v901, -inf
      %v1151 = vmax.f32 %v1143, %v1150
      %v1152 = vsel %vm1125, %v906, -inf
      %v1153 = vmax.f32 %v1145, %v1152
      %v1154 = vmax.f32 %v1147, %v1149
      %v1155 = vmax.f32 %v1151, %v1153
      %v1156 = vmax.f32 %v1154, %v1155
      %v1157 = vrot.slane %v1156, 4
      %v1158 = vmax.f32 %v1156, %v1157
      %v1159 = vrot.slane %v1158, 2
      %v1160 = vmax.f32 %v1158, %v1159
      %v1161 = vrot.slane %v1160, 1
      %v1162 = vmax.f32 %v1160, %v1161
      %v1163 = vmax.f32 %v1124, %v1162
      %v1164 = vsub.f32 %v1124, %v1163
      %v1165 = vmul.f32 %v1164, 1.442695
      %v1166 = vpow.pop %v1165
      %v1168 = vlaneseq
      %v1169 = vshrl.u32 %v1168, 7
      %v1170 = vsub.s32 0, %v1169
      %v1171 = vrot.slane %v1163, %v1170
      %v1173 = vsub.f32 %v831, %v1171
      %v1174 = vsub.f32 %v836, %v1171
      %v1175 = vsub.f32 %v841, %v1171
      %v1176 = vsub.f32 %v846, %v1171
      %v1177 = vsub.f32 %v851, %v1171
      %v1178 = vsub.f32 %v856, %v1171
      %v1179 = vsub.f32 %v861, %v1171
      %v1180 = vsub.f32 %v866, %v1171
      %v1181 = vsub.f32 %v871, %v1171
      %v1182 = vsub.f32 %v876, %v1171
      %v1183 = vsub.f32 %v881, %v1171
      %v1184 = vsub.f32 %v886, %v1171
      %v1185 = vsub.f32 %v891, %v1171
      %v1186 = vsub.f32 %v896, %v1171
      %v1187 = vsub.f32 %v901, %v1171
      %v1188 = vsub.f32 %v906, %v1171
      %v1189 = vmul.f32 %v1173, 1.442695
      %v1190 = vpow.pop %v1189
      %v1191 = vmul.f32 %v1174, 1.442695
      %v1192 = vpow.pop %v1191
      %v1193 = vmul.f32 %v1175, 1.442695
      %v1194 = vpow.pop %v1193
      %v1195 = vmul.f32 %v1176, 1.442695
      %v1196 = vpow.pop %v1195
      %v1197 = vmul.f32 %v1177, 1.442695
      %v1198 = vpow.pop %v1197
      %v1199 = vmul.f32 %v1178, 1.442695
      %v1200 = vpow.pop %v1199
      %v1201 = vmul.f32 %v1179, 1.442695
      %v1202 = vpow.pop %v1201
      %v1203 = vmul.f32 %v1180, 1.442695
      %v1204 = vpow.pop %v1203
      %v1205 = vmul.f32 %v1181, 1.442695
      %v1206 = vpow.pop %v1205
      %v1207 = vmul.f32 %v1182, 1.442695
      %v1208 = vpow.pop %v1207
      %v1209 = vmul.f32 %v1183, 1.442695
      %v1210 = vpow.pop %v1209
      %v1211 = vmul.f32 %v1184, 1.442695
      %v1212 = vpow.pop %v1211
      %v1213 = vmul.f32 %v1185, 1.442695
      %v1214 = vpow.pop %v1213
      %v1215 = vmul.f32 %v1186, 1.442695
      %v1216 = vpow.pop %v1215
      %v1217 = vmul.f32 %v1187, 1.442695
      %v1218 = vpow.pop %v1217
      %v1219 = vmul.f32 %v1188, 1.442695
      %v1220 = vpow.pop %v1219
      %v1221 = vlaneseq
      %v1222 = vand.u32 %v1221, 127
      %vm1223 = vcmp.eq.s32.totalorder %v1222, 0
      %1225 = vset.pattern.permute.xlu0 0
      %1226 = vperm.xlu0 %1225, %v1190
      %v1227 = vpop.permute.xlu0 %1226
      %1230 = vset.pattern.permute.xlu0 0
      %1231 = vperm.xlu0 %1230, %v1192
      %v1232 = vpop.permute.xlu0 %1231
      %1235 = vset.pattern.permute.xlu0 0
      %1236 = vperm.xlu0 %1235, %v1194
      %v1237 = vpop.permute.xlu0 %1236
      %1240 = vset.pattern.permute.xlu0 0
      %1241 = vperm.xlu0 %1240, %v1196
      %v1242 = vpop.permute.xlu0 %1241
      %1245 = vset.pattern.permute.xlu0 0
      %1246 = vperm.xlu0 %1245, %v1198
      %v1247 = vpop.permute.xlu0 %1246
      %1250 = vset.pattern.permute.xlu0 0
      %1251 = vperm.xlu0 %1250, %v1200
      %v1252 = vpop.permute.xlu0 %1251
      %1255 = vset.pattern.permute.xlu0 0
      %1256 = vperm.xlu0 %1255, %v1202
      %v1257 = vpop.permute.xlu0 %1256
      %1260 = vset.pattern.permute.xlu0 0
      %1261 = vperm.xlu0 %1260, %v1204
      %v1262 = vpop.permute.xlu0 %1261
      %1265 = vset.pattern.permute.xlu0 0
      %1266 = vperm.xlu0 %1265, %v1206
      %v1267 = vpop.permute.xlu0 %1266
      %1270 = vset.pattern.permute.xlu0 0
      %1271 = vperm.xlu0 %1270, %v1208
      %v1272 = vpop.permute.xlu0 %1271
      %1275 = vset.pattern.permute.xlu0 0
      %1276 = vperm.xlu0 %1275, %v1210
      %v1277 = vpop.permute.xlu0 %1276
      %1280 = vset.pattern.permute.xlu0 0
      %1281 = vperm.xlu0 %1280, %v1212
      %v1282 = vpop.permute.xlu0 %1281
      %1285 = vset.pattern.permute.xlu0 0
      %1286 = vperm.xlu0 %1285, %v1214
      %v1287 = vpop.permute.xlu0 %1286
      %1290 = vset.pattern.permute.xlu0 0
      %1291 = vperm.xlu0 %1290, %v1216
      %v1292 = vpop.permute.xlu0 %1291
      %1295 = vset.pattern.permute.xlu0 0
      %1296 = vperm.xlu0 %1295, %v1218
      %v1297 = vpop.permute.xlu0 %1296
      %1300 = vset.pattern.permute.xlu0 0
      %1301 = vperm.xlu0 %1300, %v1220
      %v1302 = vpop.permute.xlu0 %1301
      %v1304 = vsel %vm1223, %v1227, 1.0
      %v1305 = vsel %vm1223, %v1232, 1.0
      %v1306 = vsel %vm1223, %v1237, 1.0
      %v1307 = vsel %vm1223, %v1242, 1.0
      %v1308 = vsel %vm1223, %v1247, 1.0
      %v1309 = vsel %vm1223, %v1252, 1.0
      %v1310 = vsel %vm1223, %v1257, 1.0
      %v1311 = vsel %vm1223, %v1262, 1.0
      %v1312 = vsel %vm1223, %v1267, 1.0
      %v1313 = vsel %vm1223, %v1272, 1.0
      %v1314 = vsel %vm1223, %v1277, 1.0
      %v1315 = vsel %vm1223, %v1282, 1.0
      %v1316 = vsel %vm1223, %v1287, 1.0
      %v1317 = vsel %vm1223, %v1292, 1.0
      %v1318 = vsel %vm1223, %v1297, 1.0
      %v1319 = vsel %vm1223, %v1302, 1.0
      %1320 = vxpose.xlu0.b32.start [1/16] %v1304, 128
      %1321 = vxpose.xlu0.b32.cont [2/16] %v1305, 128
      %1322 = vxpose.xlu0.b32.cont [3/16] %v1306, 128
      %1323 = vxpose.xlu0.b32.cont [4/16] %v1307, 128
      %1324 = vxpose.xlu0.b32.cont [5/16] %v1308, 128
      %1325 = vxpose.xlu0.b32.cont [6/16] %v1309, 128
      %1326 = vxpose.xlu0.b32.cont [7/16] %v1310, 128
      %1327 = vxpose.xlu0.b32.cont [8/16] %v1311, 128
      %1328 = vxpose.xlu0.b32.cont [9/16] %v1312, 128
      %1329 = vxpose.xlu0.b32.cont [10/16] %v1313, 128
      %1330 = vxpose.xlu0.b32.cont [11/16] %v1314, 128
      %1331 = vxpose.xlu0.b32.cont [12/16] %v1315, 128
      %1332 = vxpose.xlu0.b32.cont [13/16] %v1316, 128
      %1333 = vxpose.xlu0.b32.cont [14/16] %v1317, 128
      %1334 = vxpose.xlu0.b32.cont [15/16] %v1318, 128
      %1335 = vxpose.xlu0.b32.end [16/16] %v1319, 128
      %v1336 = vpop.trf.xlu0
      %v1337 = vpop.trf.xlu0
      %v1338 = vpop.trf.xlu0
      %v1339 = vpop.trf.xlu0
      %v1340 = vpop.trf.xlu0
      %v1341 = vpop.trf.xlu0
      %v1342 = vpop.trf.xlu0
      %v1343 = vpop.trf.xlu0
      %v1344 = vpop.trf.xlu0
      %v1345 = vpop.trf.xlu0
      %v1346 = vpop.trf.xlu0
      %v1347 = vpop.trf.xlu0
      %v1348 = vpop.trf.xlu0
      %v1349 = vpop.trf.xlu0
      %v1350 = vpop.trf.xlu0
      %v1351 = vpop.trf.xlu0
      %1352 = vmatprep.subr.mxu0 0.0
      %1353 = vmatpush1.msra.mxu0 %v981
      %1354 = vmatprep.subr.mxu0 0.0
      %1355 = vmatpush1.msra.mxu0 %v984
      %1356 = vmatprep.subr.mxu0 0.0
      %1357 = vmatpush1.msra.mxu0 %v989
      %1358 = vmatprep.subr.mxu0 0.0
      %1359 = vmatpush1.msra.mxu0 %v992
      %1360 = vmatprep.subr.mxu0 0.0
      %1361 = vmatpush1.msra.mxu0 %v997
      %1362 = vmatprep.subr.mxu0 0.0
      %1363 = vmatpush1.msra.mxu0 %v1000
      %1364 = vmatprep.subr.mxu0 0.0
      %1365 = vmatpush1.msra.mxu0 %v1005
      %1366 = vmatprep.subr.mxu0 0.0
      %1367 = vmatpush1.msra.mxu0 %v1008
      %1368 = vmatprep.subr.mxu0 0.0
      %1369 = vmatpush1.msra.mxu0 %v1013
      %1370 = vmatprep.subr.mxu0 0.0
      %1371 = vmatpush1.msra.mxu0 %v1016
      %1372 = vmatprep.subr.mxu0 0.0
      %1373 = vmatpush1.msra.mxu0 %v1021
      %1374 = vmatprep.subr.mxu0 0.0
      %1375 = vmatpush1.msra.mxu0 %v1024
      %1376 = vmatprep.subr.mxu0 0.0
      %1377 = vmatpush1.msra.mxu0 %v1029
      %1378 = vmatprep.subr.mxu0 0.0
      %1379 = vmatpush1.msra.mxu0 %v1032
      %1380 = vmatprep.subr.mxu0 0.0
      %1381 = vmatpush1.msra.mxu0 %v1037
      %1382 = vmatprep.subr.mxu0 0.0
      %1383 = vmatpush1.msra.mxu0 %v1040
      %1384 = vmatprep.subr.mxu0 0.0
      %1385 = vmatpush1.msra.mxu0 0.0
      %1386 = vmatprep.subr.mxu0 0.0
      %1387 = vmatpush1.msra.mxu0 0.0
      %1388 = vmatprep.subr.mxu0 0.0
      %1389 = vmatpush1.msra.mxu0 0.0
      %1390 = vmatprep.subr.mxu0 0.0
      %1391 = vmatpush1.msra.mxu0 0.0
      %1392 = vmatprep.subr.mxu0 0.0
      %1393 = vmatpush1.msra.mxu0 0.0
      %1394 = vmatprep.subr.mxu0 0.0
      %1395 = vmatpush1.msra.mxu0 0.0
      %1396 = vmatprep.subr.mxu0 0.0
      %1397 = vmatpush1.msra.mxu0 0.0
      %1398 = vmatprep.subr.mxu0 0.0
      %1399 = vmatpush1.msra.mxu0 0.0
      %1400 = vmatprep.subr.mxu0 0.0
      %1401 = vmatpush1.msra.mxu0 0.0
      %1402 = vmatprep.subr.mxu0 0.0
      %1403 = vmatpush1.msra.mxu0 0.0
      %1404 = vmatprep.subr.mxu0 0.0
      %1405 = vmatpush1.msra.mxu0 0.0
      %1406 = vmatprep.subr.mxu0 0.0
      %1407 = vmatpush1.msra.mxu0 0.0
      %1408 = vmatprep.subr.mxu0 0.0
      %1409 = vmatpush1.msra.mxu0 0.0
      %1410 = vmatprep.subr.mxu0 0.0
      %1411 = vmatpush1.msra.mxu0 0.0
      %1412 = vmatprep.subr.mxu0 0.0
      %1413 = vmatpush1.msra.mxu0 0.0
      %1414 = vmatprep.subr.mxu0 0.0
      %1415 = vmatpush1.msra.mxu0 0.0
      %1416 = vmatprep.mubr.f32.mxu0 0.0
      %1417 = vmatmul.mubr.f32.gmra.mrb[0].mxu0 %v1336
      %v1418 = vpop.f32.mrb[0].mxu0
      %v1419 = vadd.f32 0.0, %v1418
      %v1420 = vpop.f32.mrb[0].mxu0
      %1421 = vdwg.mxu0
      %v1422 = vld [vmem:[#allocation3] sm:$0x1]
      %v1423 = vmul.f32 %v1166, %v1422
      %v1424 = vsel %vm1125, %v1190, 0.0
      %v1425 = vsel %vm1125, %v1192, 0.0
      %v1426 = vadd.f32 %v1424, %v1425
      %v1427 = vsel %vm1125, %v1194, 0.0
      %v1428 = vadd.f32 %v1426, %v1427
      %v1429 = vsel %vm1125, %v1196, 0.0
      %v1430 = vadd.f32 %v1428, %v1429
      %v1431 = vsel %vm1125, %v1198, 0.0
      %v1432 = vadd.f32 %v1430, %v1431
      %v1433 = vsel %vm1125, %v1200, 0.0
      %v1434 = vadd.f32 %v1432, %v1433
      %v1435 = vsel %vm1125, %v1202, 0.0
      %v1436 = vadd.f32 %v1434, %v1435
      %v1437 = vsel %vm1125, %v1204, 0.0
      %v1438 = vadd.f32 %v1436, %v1437
      %v1439 = vsel %vm1125, %v1206, 0.0
      %v1440 = vadd.f32 %v1438, %v1439
      %v1441 = vsel %vm1125, %v1208, 0.0
      %v1442 = vadd.f32 %v1440, %v1441
      %v1443 = vsel %vm1125, %v1210, 0.0
      %v1444 = vadd.f32 %v1442, %v1443
      %v1445 = vsel %vm1125, %v1212, 0.0
      %v1446 = vadd.f32 %v1444, %v1445
      %v1447 = vsel %vm1125, %v1214, 0.0
      %v1448 = vadd.f32 %v1446, %v1447
      %v1449 = vsel %vm1125, %v1216, 0.0
      %v1450 = vadd.f32 %v1448, %v1449
      %v1451 = vsel %vm1125, %v1218, 0.0
      %v1452 = vadd.f32 %v1450, %v1451
      %v1453 = vsel %vm1125, %v1220, 0.0
      %v1454 = vadd.f32 %v1452, %v1453
      %v1455 = vrot.slane %v1454, 4
      %v1456 = vadd.f32 %v1454, %v1455
      %v1457 = vrot.slane %v1456, 2
      %v1458 = vadd.f32 %v1456, %v1457
      %v1459 = vrot.slane %v1458, 1
      %v1460 = vadd.f32 %v1458, %v1459
      %v1461 = vadd.f32 %v1423, %v1460
      %vm1462 = vcmask 0
      %1463 = vst.msk [vmem:[#allocation3] sm:$0x1] %vm1462, %v1461
      %v1464 = vld [vmem:[#allocation4] sm:$0x1]
      %1466 = vset.pattern.permute.xlu0 0
      %1467 = vperm.xlu0 %1466, %v1166
      %v1468 = vpop.permute.xlu0 %1467
      %v1470 = vlaneseq
      %v1471 = vshrl.u32 %v1470, 7
      %v1472 = vsub.s32 0, %v1471
      %v1473 = vrot.slane %v1468, %v1472
      %v1474 = vmul.f32 %v1473, %v1464
      %v1477 = vunpack.c.l.s4 1966171168
      %v1478 = vunpack.c.0.s8 %v1477
      %v1479 = vlaneseq
      %v1480 = vshrl.u32 %v1479, 7
      %v1481 = vsub.s32 %v1478, %v1480
      %v1482 = vrot.slane %v1419, %v1481
      %v1484 = vunpack.c.l.s4 1966171168
      %v1485 = vunpack.c.0.s8 %v1484
      %v1486 = vlaneseq
      %v1487 = vshrl.u32 %v1486, 7
      %v1488 = vsub.s32 %v1485, %v1487
      %v1489 = vrot.slane %v1482, %v1488
      %1490 = vrot.lane.b32.xlu0 %v1489, 126
      %v1491 = vpop.permute.xlu0 %1490
      %v1493 = vadd.f32 %v1474, %v1491
      %vm1494 = vcmask 8192
      %1495 = vst.msk [vmem:[#allocation4] sm:$0x1] %vm1494, %v1493
      %v1496 = vld [vmem:[#allocation5] sm:$0x1]
      %v1497 = vcombine.high %v1482, %v1482
      %v1499 = vunpack.c.l.s4 1966171168
      %v1500 = vunpack.c.0.s8 %v1499
      %v1501 = vlaneseq
      %v1502 = vshrl.u32 %v1501, 7
      %v1503 = vsub.s32 %v1500, %v1502
      %v1504 = vrot.slane %v1497, %v1503
      %1505 = vrot.lane.b32.xlu0 %v1504, 124
      %v1506 = vpop.permute.xlu0 %1505
      %v1508 = vadd.f32 %v1496, %v1506
      %1509 = vst.msk [vmem:[#allocation5] sm:$0x1] %vm1494, %v1508
      %1510 = vst.msk [vmem:[#allocation2] sm:$0x1] %vm1462, %v1163
      // Predicated region
      $region41: #{c3_psa_p_forward.2} parent=35 // pred_check
        %p1511 = pneg %p438
      $region42: #{c3_psa_p_forward.2} parent=35 // pred_check_branch
        %1513 = sbr.rel (%p1511) target = $region44
      $region43: #{c3_psa_p_forward.2} parent=35 // pred_region
        %v1514 = vld [vmem:[#allocation2] sm:$0x1]
        %1515 = vst.msk [vmem:[%s403] sm:$0x1] %vm1462, %v1514
        %v1516 = vld [vmem:[#allocation3] sm:$0x1]
        %1517 = vst.msk [vmem:[%s410] sm:$0x1] %vm1462, %v1516
        %v1518 = vld [vmem:[#allocation4] sm:$0x1]
        %1519 = vst.msk [vmem:[%s417] sm:$0x1] %vm1494, %v1518
        %v1520 = vld [vmem:[#allocation5] sm:$0x1]
        %1521 = vst.msk [vmem:[%s424] sm:$0x1] %vm1494, %v1520
      $region44: #{c3_psa_p_forward.2} parent=35 // pred_fallthru
        _
      %p1522 = scmp.lt.s32.totalorder %s25, 1
      %s1523 = scalar_select %p1522, %s25, 1
      %p1524 = scmp.lt.s32.totalorder %s26, 1
      %s1525 = scalar_select %p1524, %s26, 1
      %s1526 = smul.addr %s1523, 2
      %s1527 = sadd.s32 %s1525, %s1526
      %s1528 = scalar_lea.vmem %s4, %s1527
      %p1529 = scmp.lt.s32.totalorder %s25, 1
      %s1530 = scalar_select %p1529, %s25, 1
      %p1531 = scmp.lt.s32.totalorder %s26, 1
      %s1532 = scalar_select %p1531, %s26, 1
      %s1533 = smul.addr %s1530, 2
      %s1534 = sadd.s32 %s1532, %s1533
      %s1535 = scalar_lea.vmem %s5, %s1534
      %p1536 = scmp.lt.s32.totalorder %s25, 1
      %s1537 = scalar_select %p1536, %s25, 1
      %p1538 = scmp.lt.s32.totalorder %s26, 1
      %s1539 = scalar_select %p1538, %s26, 1
      %s1540 = smul.addr %s1537, 2
      %s1541 = sadd.s32 %s1539, %s1540
      %s1542 = scalar_lea.vmem %s6, %s1541
      %p1543 = scmp.lt.s32.totalorder %s25, 1
      %s1544 = scalar_select %p1543, %s25, 1
      %p1545 = scmp.lt.s32.totalorder %s26, 1
      %s1546 = scalar_select %p1545, %s26, 1
      %s1547 = smul.addr %s1544, 2
      %s1548 = sadd.s32 %s1546, %s1547
      %s1549 = scalar_lea.vmem %s7, %s1548
      %s1550 = sadd.s32 %s26, %s27
      %s1551 = smul.u32 16, %s1550
      %p1552 = scmp.lt.s32.totalorder %s25, 1
      %s1553 = scalar_select %p1552, %s25, 1
      %p1554 = scmp.lt.s32.totalorder %s1551, 31
      %s1555 = scalar_select %p1554, %s1551, 31
      %s1556 = smul.addr %s1553, 32
      %s1557 = sadd.s32 %s1555, %s1556
      %s1558 = smul.addr %s1557, 4
      %s1559 = scalar_lea.vmem %s8, %s1558
      // Predicated region
      $region45: #{c3_psa_p_forward.2} parent=35 // pred_check
        %p1560 = pneg %p152
      $region46: #{c3_psa_p_forward.2} parent=35 // pred_check_branch
        %1562 = sbr.rel (%p1560) target = $region48
      $region47: #{c3_psa_p_forward.2} parent=35 // pred_region
        _
      $region48: #{c3_psa_p_forward.2} parent=35 // pred_fallthru
        _
      // Predicated region
      $region49: #{c3_psa_p_forward.2} parent=35 // pred_check
        %p1563 = pneg %p180
      $region50: #{c3_psa_p_forward.2} parent=35 // pred_check_branch
        %1565 = sbr.rel (%p1563) target = $region52
      $region51: #{c3_psa_p_forward.2} parent=35 // pred_region
        _
      $region52: #{c3_psa_p_forward.2} parent=35 // pred_fallthru
        _
      // Predicated region
      $region53: #{c3_psa_p_forward.2} parent=35 // pred_check
        %p1566 = pneg %p208
      $region54: #{c3_psa_p_forward.2} parent=35 // pred_check_branch
        %1568 = sbr.rel (%p1566) target = $region56
      $region55: #{c3_psa_p_forward.2} parent=35 // pred_region
        _
      $region56: #{c3_psa_p_forward.2} parent=35 // pred_fallthru
        _
      // Predicated region
      $region57: #{c3_psa_p_forward.2} parent=35 // pred_check
        %p1569 = pneg %p236
      $region58: #{c3_psa_p_forward.2} parent=35 // pred_check_branch
        %1571 = sbr.rel (%p1569) target = $region60
      $region59: #{c3_psa_p_forward.2} parent=35 // pred_region
        _
      $region60: #{c3_psa_p_forward.2} parent=35 // pred_fallthru
        _
      // Predicated region
      $region61: #{c3_psa_p_forward.2} parent=35 // pred_check
        %p1572 = pneg %p266
      $region62: #{c3_psa_p_forward.2} parent=35 // pred_check_branch
        %1574 = sbr.rel (%p1572) target = $region64
      $region63: #{c3_psa_p_forward.2} parent=35 // pred_region
        %s1575 = sadd.s32 %s26, %s27
        %s1576 = smul.u32 16, %s1575
      $region64: #{c3_psa_p_forward.2} parent=35 // pred_fallthru
        _
    $region36: #{c3_psa_p_forward.2} parent=5 // pred_fallthru
      _
    %p1577 = scmp.le.s32.totalorder 2, %s15
    // Predicated region
    $region65: #{c3_psa_p_forward.2} parent=5 // pred_check
      %p1578 = pneg %p1577
    $region66: #{c3_psa_p_forward.2} parent=5 // pred_check_branch
      %1580 = sbr.rel (%p1578) target = $region68
    $region67: #{c3_psa_p_forward.2} parent=5 // pred_region
      %s1581 = ssub.s32 %s15, 2
      // Predicated region
      $region69: #{c3_psa_p_forward.2} parent=67 // pred_check
        %p1582 = pneg %p158
      $region70: #{c3_psa_p_forward.2} parent=67 // pred_check_branch
        %1584 = sbr.rel (%p1582) target = $region72
      $region71: #{c3_psa_p_forward.2} parent=67 // pred_region
        %p1585 = scmp.lt.s32.totalorder %s28, 1
        %s1586 = scalar_select %p1585, %s28, 1
        %p1587 = scmp.lt.s32.totalorder %s29, 1
        %s1588 = scalar_select %p1587, %s29, 1
        %s1589 = smul.addr %s1586, 2
        %s1590 = sadd.s32 %s1588, %s1589
        %s1591 = scalar_lea.vmem %s4, %s1590
      $region72: #{c3_psa_p_forward.2} parent=67 // pred_fallthru
        _
      // Predicated region
      $region73: #{c3_psa_p_forward.2} parent=67 // pred_check
        %p1592 = pneg %p186
      $region74: #{c3_psa_p_forward.2} parent=67 // pred_check_branch
        %1594 = sbr.rel (%p1592) target = $region76
      $region75: #{c3_psa_p_forward.2} parent=67 // pred_region
        %p1595 = scmp.lt.s32.totalorder %s28, 1
        %s1596 = scalar_select %p1595, %s28, 1
        %p1597 = scmp.lt.s32.totalorder %s29, 1
        %s1598 = scalar_select %p1597, %s29, 1
        %s1599 = smul.addr %s1596, 2
        %s1600 = sadd.s32 %s1598, %s1599
        %s1601 = scalar_lea.vmem %s5, %s1600
      $region76: #{c3_psa_p_forward.2} parent=67 // pred_fallthru
        _
      // Predicated region
      $region77: #{c3_psa_p_forward.2} parent=67 // pred_check
        %p1602 = pneg %p214
      $region78: #{c3_psa_p_forward.2} parent=67 // pred_check_branch
        %1604 = sbr.rel (%p1602) target = $region80
      $region79: #{c3_psa_p_forward.2} parent=67 // pred_region
        %p1605 = scmp.lt.s32.totalorder %s28, 1
        %s1606 = scalar_select %p1605, %s28, 1
        %p1607 = scmp.lt.s32.totalorder %s29, 1
        %s1608 = scalar_select %p1607, %s29, 1
        %s1609 = smul.addr %s1606, 2
        %s1610 = sadd.s32 %s1608, %s1609
        %s1611 = scalar_lea.vmem %s6, %s1610
      $region80: #{c3_psa_p_forward.2} parent=67 // pred_fallthru
        _
      // Predicated region
      $region81: #{c3_psa_p_forward.2} parent=67 // pred_check
        %p1612 = pneg %p242
      $region82: #{c3_psa_p_forward.2} parent=67 // pred_check_branch
        %1614 = sbr.rel (%p1612) target = $region84
      $region83: #{c3_psa_p_forward.2} parent=67 // pred_region
        %p1615 = scmp.lt.s32.totalorder %s28, 1
        %s1616 = scalar_select %p1615, %s28, 1
        %p1617 = scmp.lt.s32.totalorder %s29, 1
        %s1618 = scalar_select %p1617, %s29, 1
        %s1619 = smul.addr %s1616, 2
        %s1620 = sadd.s32 %s1618, %s1619
        %s1621 = scalar_lea.vmem %s7, %s1620
      $region84: #{c3_psa_p_forward.2} parent=67 // pred_fallthru
        _
      // Predicated region
      $region85: #{c3_psa_p_forward.2} parent=67 // pred_check
        %p1622 = pneg %p272
      $region86: #{c3_psa_p_forward.2} parent=67 // pred_check_branch
        %1624 = sbr.rel (%p1622) target = $region88
      $region87: #{c3_psa_p_forward.2} parent=67 // pred_region
        %s1625 = sadd.s32 %s29, %s30
        %s1626 = smul.u32 16, %s1625
        %p1627 = scmp.lt.s32.totalorder %s28, 1
        %s1628 = scalar_select %p1627, %s28, 1
        %p1629 = scmp.lt.s32.totalorder %s1626, 31
        %s1630 = scalar_select %p1629, %s1626, 31
        %s1631 = smul.addr %s1628, 32
        %s1632 = sadd.s32 %s1630, %s1631
        %s1633 = smul.addr %s1632, 4
        %s1634 = scalar_lea.vmem %s8, %s1633
      $region88: #{c3_psa_p_forward.2} parent=67 // pred_fallthru
        _
    $region68: #{c3_psa_p_forward.2} parent=5 // pred_fallthru
      _
  $region6: #{c3_psa_p_forward.2} parent=0 // loop_footer
    %s19 = sadd.s32 1, %s15
  $region7: #{c3_psa_p_forward.2} parent=0 // loop_footer_branch
    %14 = sbr.rel target = $region3
  $region8: #{c3_psa_p_forward.2} parent=0 // loop_exit
    _

</llo_original>
